<compile_context>
chip_gen: v6e
topology: v6e:2x2x1
jax: 0.10.0
libtpu: 0.0.40
codegen_flags: <defaults>
</compile_context>

<pallas_src>
import functools

import jax
import jax.numpy as jnp
import numpy as np
from jax.experimental import pallas as pl
from jax.experimental.pallas import tpu as pltpu


def _vmem_limit_bytes():
    """Generation-aware VMEM limit (review: don't hard-code 32 MiB)."""
    try:
        cap = pltpu.get_tpu_info().vmem_capacity_bytes
    except Exception:
        cap = 64 * 1024 * 1024          # conservative (v7x-sized) fallback
    # ~110 MiB on 128 MiB parts (v5e/v6e), ~56 MiB on v7x (64 MiB).
    return int(min(cap * 7 // 8, 110 * 1024 * 1024))


# --------------------------------------------------------------------------
# Pallas kernel: whole PosteriorEncoder forward for one batch block.
# --------------------------------------------------------------------------
def _posterior_encoder_kernel(
    mask_ref, x_ref, noise_ref,                         # per-block inputs
    pre_w_ref, pre_b_ref,
    in_w_ref, in_b_ref,                                 # fused [tanh|sig] taps
    rs_r_w_ref, rs_s_w_ref, rs_r_b_ref, rs_s_b_ref,     # res / skip 1x1
    proj_m_w_ref, proj_s_w_ref, proj_m_b_ref, proj_s_b_ref,
    z_ref, m_ref, logs_ref,                             # separate outputs
    h_scr, acc_scr,                                     # VMEM scratch
    *, hidden, n_layers, kernel_size, dilation_rate, seq_len, rows,
    matmul_dtype,
):
    H = hidden
    T = seq_len
    M = rows                      # = batch_block * T (flattened rows)
    dt = matmul_dtype

    mask = mask_ref[...]                                          # (M, 1)

    # Row position within its own sequence (batch is flattened row-major).
    row = jax.lax.broadcasted_iota(jnp.int32, (M, 1), 0)
    t_mod = row % T

    def mm(a, w):
        return jnp.dot(a.astype(dt), w, preferred_element_type=jnp.float32)

    # Memoized per-shift validity masks (built once per distinct shift).
    shift_valid = {}

    def valid_mask(s):
        if s not in shift_valid:
            shift_valid[s] = (t_mod >= s) if s > 0 else (t_mod < T + s)
        return shift_valid[s]

    def shifted(a, s):
        # Output row t takes input row t - s (within its sequence); rows that
        # would read padding (or, after batch-flattening, a neighbouring
        # sequence) are zeroed.  Single XLU roll + VPU select on the LHS.
        if s == 0:
            return a
        rolled = pltpu.roll(a, s % M, 0)
        return jnp.where(valid_mask(s), rolled, 0.0)

    # ---- pre: 1x1 conv + mask ---------------------------------------------
    h_scr[...] = (mm(x_ref[...], pre_w_ref[...]) + pre_b_ref[...]) * mask
    acc_scr[...] = jnp.zeros((M, H), jnp.float32)

    # ---- WaveNet encoder ----------------------------------------------------
    for i in range(n_layers):
        d = dilation_rate ** i
        pad = (kernel_size * d - d) // 2
        h_cur = h_scr[...]                                         # (M, H)

        # Fused dilated conv: one (M,H)@(H,2H) matmul per tap; bias broadcast
        # hoisted into the accumulator init.
        x_in = jnp.broadcast_to(in_b_ref[i], (M, 2 * H))
        for k in range(kernel_size):
            s_k = pad - k * d
            if abs(s_k) >= T:
                continue                    # tap falls entirely in padding
            x_in = x_in + mm(shifted(h_cur, s_k), in_w_ref[i, k])

        # gated activation (fused_add_tanh_sigmoid_multiply with g = 0)
        acts = jnp.tanh(x_in[:, :H]) * jax.nn.sigmoid(x_in[:, H:])
        acts_mm = acts.astype(dt)           # hoisted: cast once per layer

        if i < n_layers - 1:
            h_scr[...] = (h_cur + mm(acts_mm, rs_r_w_ref[i])
                          + rs_r_b_ref[i]) * mask
            acc_scr[...] = (acc_scr[...] + mm(acts_mm, rs_s_w_ref[i])
                            + rs_s_b_ref[i])
        else:
            # last layer: skip-only output -> only the H-wide half exists
            acc_scr[...] = (acc_scr[...] + mm(acts_mm, rs_r_w_ref[i])
                            + rs_r_b_ref[i])

    # ---- proj: 1x1 conv (lane-aligned m / logs halves), reparameterize ------
    enc_mm = (acc_scr[...] * mask).astype(dt)
    m = (mm(enc_mm, proj_m_w_ref[...]) + proj_m_b_ref[...]) * mask
    logs = (mm(enc_mm, proj_s_w_ref[...]) + proj_s_b_ref[...]) * mask
    z = (m + noise_ref[...] * jnp.exp(logs)) * mask

    z_ref[...] = z
    m_ref[...] = m
    logs_ref[...] = logs


# --------------------------------------------------------------------------
# Wrapper
# --------------------------------------------------------------------------
def posterior_encoder(x, x_lengths, noise, params, *, hidden, out_ch,
                      n_layers, kernel_size, dilation_rate,
                      matmul_dtype=jnp.bfloat16, batch_block=None):
    """x: (B, T, Cin) f32; x_lengths: (B,) int32; noise: (B, T, out_ch) f32."""
    B, T, Cin = x.shape
    H = hidden
    pre_w, pre_b, in_w, in_b, rs_w, rs_b, proj_w, proj_b = params

    # Weights pre-cast once to the matmul operand dtype.  Gate-conv tap
    # weights stay fused as [tanh | sigmoid] (single matmul per tap); the
    # res/skip and m/logs weights are split host-side into lane-aligned
    # halves because their halves go to different destinations anyway.
    wt = lambda a: a.astype(matmul_dtype)
    pre_w_c = wt(pre_w)
    in_w_c = wt(in_w)                                  # (L, K, H, 2H)
    rs_r_w, rs_s_w = wt(rs_w[..., :H]), wt(rs_w[..., H:])
    rs_r_b, rs_s_b = rs_b[..., :H], rs_b[..., H:]
    proj_m_w, proj_s_w = wt(proj_w[..., :out_ch]), wt(proj_w[..., out_ch:])
    proj_m_b, proj_s_b = proj_b[..., :out_ch], proj_b[..., out_ch:]

    # x_mask is a trivial function of x_lengths; computed here (it is a module
    # output anyway) and fed to the kernel as a (B*T, 1) vector.
    x_mask = (jnp.arange(T)[None, :, None]
              < x_lengths[:, None, None]).astype(jnp.float32)

    # Fold several sequences into one grid step so the MXU M dimension is not
    # starved at small T (and per-step overhead is amortized).
    if batch_block is None:
        bb = min(B, max(1, 128 // T))
        while bb > 1 and B % bb != 0:
            bb -= 1
    else:
        bb = batch_block
    if B % bb != 0 or (bb * T) % 8 != 0:
        bb = B                      # full-array block is always layout-legal
    Mb = bb * T

    x_flat = x.reshape(B * T, Cin).astype(jnp.float32)
    noise_flat = noise.reshape(B * T, out_ch).astype(jnp.float32)
    mask_flat = x_mask.reshape(B * T, 1)

    kernel = functools.partial(
        _posterior_encoder_kernel,
        hidden=H, n_layers=n_layers, kernel_size=kernel_size,
        dilation_rate=dilation_rate, seq_len=T, rows=Mb,
        matmul_dtype=matmul_dtype,
    )

    def rows_spec(c):
        return pl.BlockSpec((Mb, c), lambda g: (g, 0))

    def full(a):
        return pl.BlockSpec(a.shape, lambda g: (0,) * a.ndim)

    out_struct = jax.ShapeDtypeStruct((B * T, out_ch), jnp.float32)

    z_f, m_f, logs_f = pl.pallas_call(
        kernel,
        grid=(B // bb,),
        in_specs=[
            rows_spec(1), rows_spec(Cin), rows_spec(out_ch),
            full(pre_w_c), full(pre_b),
            full(in_w_c), full(in_b),
            full(rs_r_w), full(rs_s_w), full(rs_r_b), full(rs_s_b),
            full(proj_m_w), full(proj_s_w), full(proj_m_b), full(proj_s_b),
        ],
        out_specs=(rows_spec(out_ch), rows_spec(out_ch), rows_spec(out_ch)),
        out_shape=(out_struct, out_struct, out_struct),
        scratch_shapes=[pltpu.VMEM((Mb, H), jnp.float32),   # residual h
                        pltpu.VMEM((Mb, H), jnp.float32)],  # skip accumulator
        compiler_params=pltpu.CompilerParams(
            dimension_semantics=("parallel",),
            vmem_limit_bytes=_vmem_limit_bytes(),
        ),
    )(mask_flat, x_flat, noise_flat, pre_w_c, pre_b,
      in_w_c, in_b, rs_r_w, rs_s_w, rs_r_b, rs_s_b,
      proj_m_w, proj_s_w, proj_m_b, proj_s_b)

    z = z_f.reshape(B, T, out_ch)
    m = m_f.reshape(B, T, out_ch)
    logs = logs_f.reshape(B, T, out_ch)
    return z, m, logs, x_mask


# --------------------------------------------------------------------------
# Pure-JAX reference (same math, NTC layout) for a correctness check.
# --------------------------------------------------------------------------
def reference_forward(x, x_lengths, noise, params, *, hidden, out_ch,
                      n_layers, kernel_size, dilation_rate):
    pre_w, pre_b, in_w, in_b, rs_w, rs_b, proj_w, proj_b = params
    B, T, _ = x.shape
    mask = (jnp.arange(T)[None, :, None]
            < x_lengths[:, None, None]).astype(jnp.float32)        # (B,T,1)

    h = (jnp.einsum("btc,ch->bth", x, pre_w) + pre_b) * mask
    out_acc = jnp.zeros((B, T, hidden), jnp.float32)
    for i in range(n_layers):
        d = dilation_rate ** i
        pad = (kernel_size * d - d) // 2
        hp = jnp.pad(h, ((0, 0), (pad, pad), (0, 0)))
        x_in = in_b[i]
        for k in range(kernel_size):
            x_in = x_in + jnp.einsum("bth,hg->btg",
                                     hp[:, k * d:k * d + T, :], in_w[i, k])
        acts = jnp.tanh(x_in[..., :hidden]) * jax.nn.sigmoid(x_in[..., hidden:])
        rs = jnp.einsum("bth,hg->btg", acts, rs_w[i]) + rs_b[i]
        if i < n_layers - 1:
            h = (h + rs[..., :hidden]) * mask
            out_acc = out_acc + rs[..., hidden:]
        else:
            out_acc = out_acc + rs[..., :hidden]
    enc = out_acc * mask
    stats = (jnp.einsum("bth,ho->bto", enc, proj_w) + proj_b) * mask
    m, logs = stats[..., :out_ch], stats[..., out_ch:]
    z = (m + noise * jnp.exp(logs)) * mask
    return z, m, logs, mask


# --------------------------------------------------------------------------
if __name__ == "__main__":
    # Hyperparameters (small, consistent with the module's __init__).
    B, T = 2, 16
    in_channels = 8
    out_channels = 4
    hidden_channels = 32
    kernel_size = 5
    dilation_rate = 2
    n_layers = 3

    key = jax.random.PRNGKey(0)
    ks = jax.random.split(key, 12)
    s = 0.1

    # Deterministic synthetic parameters, stored in (in, out) matmul layout.
    pre_w = jax.random.normal(ks[0], (in_channels, hidden_channels),
                              jnp.float32) * s
    pre_b = jax.random.normal(ks[1], (1, hidden_channels), jnp.float32) * s
    in_w = jax.random.normal(
        ks[2], (n_layers, kernel_size, hidden_channels, 2 * hidden_channels),
        jnp.float32) * s
    in_b = jax.random.normal(ks[3], (n_layers, 1, 2 * hidden_channels),
                             jnp.float32) * s
    # last layer's res/skip conv only has `hidden` outputs in PyTorch; the
    # extra (skip-half) columns of layer n_layers-1 are never read.
    rs_w = jax.random.normal(
        ks[4], (n_layers, hidden_channels, 2 * hidden_channels),
        jnp.float32) * s
    rs_b = jax.random.normal(ks[5], (n_layers, 1, 2 * hidden_channels),
                             jnp.float32) * s
    proj_w = jax.random.normal(ks[6], (hidden_channels, 2 * out_channels),
                               jnp.float32) * s
    proj_b = jax.random.normal(ks[7], (1, 2 * out_channels), jnp.float32) * s
    params = (pre_w, pre_b, in_w, in_b, rs_w, rs_b, proj_w, proj_b)

    # Inputs (kernel layout (B, T, C); PyTorch equivalent would be (B, C, T)).
    x = jax.random.normal(ks[8], (B, T, in_channels), jnp.float32)
    x_lengths = jnp.array([T, 11], dtype=jnp.int32)
    noise = jax.random.normal(ks[9], (B, T, out_channels), jnp.float32)

    cfg = dict(hidden=hidden_channels, out_ch=out_channels,
               n_layers=n_layers, kernel_size=kernel_size,
               dilation_rate=dilation_rate)

    z_r, m_r, logs_r, mask_r = reference_forward(
        x, x_lengths, noise, params, **cfg)

    # f32 matmul operands: tight verification.
    z, m, logs, x_mask = jax.block_until_ready(
        posterior_encoder(x, x_lengths, noise, params,
                          matmul_dtype=jnp.float32, **cfg))
    np.testing.assert_allclose(np.asarray(x_mask), np.asarray(mask_r),
                               rtol=1e-5, atol=1e-5)
    np.testing.assert_allclose(np.asarray(m), np.asarray(m_r),
                               rtol=1e-4, atol=1e-4)
    np.testing.assert_allclose(np.asarray(logs), np.asarray(logs_r),
                               rtol=1e-4, atol=1e-4)
    np.testing.assert_allclose(np.asarray(z), np.asarray(z_r),
                               rtol=1e-4, atol=1e-4)

    # bf16 matmul operands (default / production path): loose verification.
    z_b, m_b, logs_b, _ = jax.block_until_ready(
        posterior_encoder(x, x_lengths, noise, params, **cfg))
    np.testing.assert_allclose(np.asarray(m_b), np.asarray(m_r),
                               rtol=5e-2, atol=5e-2)
    np.testing.assert_allclose(np.asarray(logs_b), np.asarray(logs_r),
                               rtol=5e-2, atol=5e-2)
    np.testing.assert_allclose(np.asarray(z_b), np.asarray(z_r),
                               rtol=5e-2, atol=5e-2)

    print("KERNEL_OK")
</pallas_src>

<mosaic_0001>
module attributes {stable_mosaic.version = 11 : i64} {
  func.func @_posterior_encoder_kernel(%arg0: i32, %arg1: memref<32x1xf32, #tpu.memory_space<vmem>>, %arg2: memref<32x8xf32, #tpu.memory_space<vmem>>, %arg3: memref<32x4xf32, #tpu.memory_space<vmem>>, %arg4: memref<8x32xf32, #tpu.memory_space<vmem>>, %arg5: memref<1x32xf32, #tpu.memory_space<vmem>>, %arg6: memref<3x5x32x64xf32, #tpu.memory_space<vmem>>, %arg7: memref<3x1x64xf32, #tpu.memory_space<vmem>>, %arg8: memref<3x32x32xf32, #tpu.memory_space<vmem>>, %arg9: memref<3x32x32xf32, #tpu.memory_space<vmem>>, %arg10: memref<3x1x32xf32, #tpu.memory_space<vmem>>, %arg11: memref<3x1x32xf32, #tpu.memory_space<vmem>>, %arg12: memref<32x4xf32, #tpu.memory_space<vmem>>, %arg13: memref<32x4xf32, #tpu.memory_space<vmem>>, %arg14: memref<1x4xf32, #tpu.memory_space<vmem>>, %arg15: memref<1x4xf32, #tpu.memory_space<vmem>>, %arg16: memref<32x4xf32, #tpu.memory_space<vmem>>, %arg17: memref<32x4xf32, #tpu.memory_space<vmem>>, %arg18: memref<32x4xf32, #tpu.memory_space<vmem>>, %arg19: memref<32x32xf32, #tpu.memory_space<vmem>>, %arg20: memref<32x32xf32, #tpu.memory_space<vmem>>) attributes {dimension_semantics = [#tpu.dimension_semantics<parallel>], iteration_bounds = array<i64: 1>, scalar_prefetch = 0 : i64, scratch_operands = 2 : i64, tpu.core_type = #tpu.core_type<tc>, window_params = [{transform_indices = @transform_0, window_bounds = array<i64: 32, 1>}, {transform_indices = @transform_1, window_bounds = array<i64: 32, 8>}, {transform_indices = @transform_2, window_bounds = array<i64: 32, 4>}, {pipeline_mode = #tpu.pipeline_mode<synchronous>, transform_indices = @transform_3, window_bounds = array<i64: 8, 32>}, {pipeline_mode = #tpu.pipeline_mode<synchronous>, transform_indices = @transform_4, window_bounds = array<i64: 1, 32>}, {pipeline_mode = #tpu.pipeline_mode<synchronous>, transform_indices = @transform_5, window_bounds = array<i64: 3, 5, 32, 64>}, {pipeline_mode = #tpu.pipeline_mode<synchronous>, transform_indices = @transform_6, window_bounds = array<i64: 3, 1, 64>}, {pipeline_mode = #tpu.pipeline_mode<synchronous>, transform_indices = @transform_7, window_bounds = array<i64: 3, 32, 32>}, {pipeline_mode = #tpu.pipeline_mode<synchronous>, transform_indices = @transform_8, window_bounds = array<i64: 3, 32, 32>}, {pipeline_mode = #tpu.pipeline_mode<synchronous>, transform_indices = @transform_9, window_bounds = array<i64: 3, 1, 32>}, {pipeline_mode = #tpu.pipeline_mode<synchronous>, transform_indices = @transform_10, window_bounds = array<i64: 3, 1, 32>}, {pipeline_mode = #tpu.pipeline_mode<synchronous>, transform_indices = @transform_11, window_bounds = array<i64: 32, 4>}, {pipeline_mode = #tpu.pipeline_mode<synchronous>, transform_indices = @transform_12, window_bounds = array<i64: 32, 4>}, {pipeline_mode = #tpu.pipeline_mode<synchronous>, transform_indices = @transform_13, window_bounds = array<i64: 1, 4>}, {pipeline_mode = #tpu.pipeline_mode<synchronous>, transform_indices = @transform_14, window_bounds = array<i64: 1, 4>}, {transform_indices = @transform_15, window_bounds = array<i64: 32, 4>}, {transform_indices = @transform_16, window_bounds = array<i64: 32, 4>}, {transform_indices = @transform_17, window_bounds = array<i64: 32, 4>}]} {
    %c0 = arith.constant 0 : index
    %c0_0 = arith.constant 0 : index
    %0 = vector.load %arg1[%c0, %c0_0] : memref<32x1xf32, #tpu.memory_space<vmem>>, vector<32x1xf32>
    %1 = tpu.iota {dimensions = array<i32: 0>} : vector<32x1xi32>
    %c16_i32 = arith.constant 16 : i32
    %c0_i32 = arith.constant 0 : i32
    %2 = arith.cmpi eq, %c16_i32, %c0_i32 : i32
    %c1_i32 = arith.constant 1 : i32
    %3 = arith.select %2, %c1_i32, %c16_i32 : i32
    %4 = vector.broadcast %3 : i32 to vector<32x1xi32>
    %5 = arith.remsi %1, %4 : vector<32x1xi32>
    %c0_i32_1 = arith.constant 0 : i32
    %6 = vector.broadcast %c0_i32_1 : i32 to vector<32x1xi32>
    %7 = arith.cmpi ne, %5, %6 : vector<32x1xi32>
    %c0_i32_2 = arith.constant 0 : i32
    %8 = vector.broadcast %c0_i32_2 : i32 to vector<32x1xi32>
    %9 = arith.cmpi slt, %5, %8 : vector<32x1xi32>
    %c0_i32_3 = arith.constant 0 : i32
    %10 = arith.cmpi slt, %3, %c0_i32_3 : i32
    %11 = vector.broadcast %10 : i1 to vector<32x1xi1>
    %12 = vector.broadcast %11 : vector<32x1xi1> to vector<32x1xi1>
    %13 = arith.xori %9, %12 : vector<32x1xi1>
    %14 = arith.andi %13, %7 : vector<32x1xi1>
    %15 = vector.broadcast %3 : i32 to vector<32x1xi32>
    %16 = arith.addi %5, %15 : vector<32x1xi32>
    %17 = arith.select %14, %16, %5 : vector<32x1xi1>, vector<32x1xi32>
    %c0_4 = arith.constant 0 : index
    %c0_5 = arith.constant 0 : index
    %18 = vector.load %arg2[%c0_4, %c0_5] : memref<32x8xf32, #tpu.memory_space<vmem>>, vector<32x8xf32>
    %c0_6 = arith.constant 0 : index
    %c0_7 = arith.constant 0 : index
    %19 = vector.load %arg4[%c0_6, %c0_7] : memref<8x32xf32, #tpu.memory_space<vmem>>, vector<8x32xf32>
    %cst = arith.constant dense<0.000000e+00> : vector<32x32xf32>
    %20 = tpu.matmul %18, %19, %cst {dimension_numbers = #tpu.dot_dimension_numbers<[1], [0], [0], [1], [0, 0, 1, 1], [], []>} : vector<32x8xf32>, vector<8x32xf32>, vector<32x32xf32> -> vector<32x32xf32>
    %c0_8 = arith.constant 0 : index
    %c0_9 = arith.constant 0 : index
    %21 = vector.load %arg5[%c0_8, %c0_9] : memref<1x32xf32, #tpu.memory_space<vmem>>, vector<1x32xf32>
    %22 = vector.broadcast %21 : vector<1x32xf32> to vector<32x32xf32>
    %23 = arith.addf %20, %22 : vector<32x32xf32>
    %24 = vector.broadcast %0 : vector<32x1xf32> to vector<32x32xf32>
    %25 = arith.mulf %23, %24 : vector<32x32xf32>
    %c0_10 = arith.constant 0 : index
    %c0_11 = arith.constant 0 : index
    %26 = vector.load %arg19[%c0_10, %c0_11] : memref<32x32xf32, #tpu.memory_space<vmem>>, vector<32x32xf32>
    tpu.vector_store %arg19[%c0_10, %c0_11], %25 {strides = array<i32>} : memref<32x32xf32, #tpu.memory_space<vmem>>, vector<32x32xf32>,
    %cst_12 = arith.constant 0.000000e+00 : f32
    %27 = vector.broadcast %cst_12 : f32 to vector<32x32xf32>
    %c0_13 = arith.constant 0 : index
    %c0_14 = arith.constant 0 : index
    %28 = vector.load %arg20[%c0_13, %c0_14] : memref<32x32xf32, #tpu.memory_space<vmem>>, vector<32x32xf32>
    tpu.vector_store %arg20[%c0_13, %c0_14], %27 {strides = array<i32>} : memref<32x32xf32, #tpu.memory_space<vmem>>, vector<32x32xf32>,
    %c0_15 = arith.constant 0 : index
    %c0_16 = arith.constant 0 : index
    %29 = vector.load %arg19[%c0_15, %c0_16] : memref<32x32xf32, #tpu.memory_space<vmem>>, vector<32x32xf32>
    %c0_17 = arith.constant 0 : index
    %c0_18 = arith.constant 0 : index
    %c0_19 = arith.constant 0 : index
    %30 = vector.load %arg7[%c0_17, %c0_18, %c0_19] : memref<3x1x64xf32, #tpu.memory_space<vmem>>, vector<1x1x64xf32>
    %31 = vector.shape_cast %30 : vector<1x1x64xf32> to vector<1x64xf32>
    %32 = vector.shape_cast %31 : vector<1x64xf32> to vector<1x64xf32>
    %33 = vector.broadcast %32 : vector<1x64xf32> to vector<32x64xf32>
    %c2_i32 = arith.constant 2 : i32
    %34 = tpu.dynamic_rotate %29 by %c2_i32 dim 0 : vector<32x32xf32>, i32 -> vector<32x32xf32>
    %c2_i32_20 = arith.constant 2 : i32
    %35 = vector.broadcast %c2_i32_20 : i32 to vector<32x1xi32>
    %36 = arith.cmpi sge, %17, %35 : vector<32x1xi32>
    %cst_21 = arith.constant 0.000000e+00 : f32
    %37 = vector.shape_cast %36 : vector<32x1xi1> to vector<32x1xi1>
    %38 = vector.broadcast %37 : vector<32x1xi1> to vector<32x32xi1>
    %39 = vector.broadcast %cst_21 : f32 to vector<32x32xf32>
    %40 = arith.select %38, %34, %39 : vector<32x32xi1>, vector<32x32xf32>
    %c0_22 = arith.constant 0 : index
    %c0_23 = arith.constant 0 : index
    %c0_24 = arith.constant 0 : index
    %c0_25 = arith.constant 0 : index
    %41 = vector.load %arg6[%c0_22, %c0_23, %c0_24, %c0_25] : memref<3x5x32x64xf32, #tpu.memory_space<vmem>>, vector<1x1x32x64xf32>
    %42 = vector.shape_cast %41 : vector<1x1x32x64xf32> to vector<32x64xf32>
    %cst_26 = arith.constant dense<0.000000e+00> : vector<32x64xf32>
    %43 = tpu.matmul %40, %42, %cst_26 {dimension_numbers = #tpu.dot_dimension_numbers<[1], [0], [0], [1], [0, 0, 1, 1], [], []>} : vector<32x32xf32>, vector<32x64xf32>, vector<32x64xf32> -> vector<32x64xf32>
    %44 = arith.addf %33, %43 : vector<32x64xf32>
    %c1_i32_27 = arith.constant 1 : i32
    %45 = tpu.dynamic_rotate %29 by %c1_i32_27 dim 0 : vector<32x32xf32>, i32 -> vector<32x32xf32>
    %c1_i32_28 = arith.constant 1 : i32
    %46 = vector.broadcast %c1_i32_28 : i32 to vector<32x1xi32>
    %47 = arith.cmpi sge, %17, %46 : vector<32x1xi32>
    %cst_29 = arith.constant 0.000000e+00 : f32
    %48 = vector.shape_cast %47 : vector<32x1xi1> to vector<32x1xi1>
    %49 = vector.broadcast %48 : vector<32x1xi1> to vector<32x32xi1>
    %50 = vector.broadcast %cst_29 : f32 to vector<32x32xf32>
    %51 = arith.select %49, %45, %50 : vector<32x32xi1>, vector<32x32xf32>
    %c0_30 = arith.constant 0 : index
    %c1 = arith.constant 1 : index
    %c0_31 = arith.constant 0 : index
    %c0_32 = arith.constant 0 : index
    %52 = vector.load %arg6[%c0_30, %c1, %c0_31, %c0_32] : memref<3x5x32x64xf32, #tpu.memory_space<vmem>>, vector<1x1x32x64xf32>
    %53 = vector.shape_cast %52 : vector<1x1x32x64xf32> to vector<32x64xf32>
    %cst_33 = arith.constant dense<0.000000e+00> : vector<32x64xf32>
    %54 = tpu.matmul %51, %53, %cst_33 {dimension_numbers = #tpu.dot_dimension_numbers<[1], [0], [0], [1], [0, 0, 1, 1], [], []>} : vector<32x32xf32>, vector<32x64xf32>, vector<32x64xf32> -> vector<32x64xf32>
    %55 = arith.addf %44, %54 : vector<32x64xf32>
    %c0_34 = arith.constant 0 : index
    %c2 = arith.constant 2 : index
    %c0_35 = arith.constant 0 : index
    %c0_36 = arith.constant 0 : index
    %56 = vector.load %arg6[%c0_34, %c2, %c0_35, %c0_36] : memref<3x5x32x64xf32, #tpu.memory_space<vmem>>, vector<1x1x32x64xf32>
    %57 = vector.shape_cast %56 : vector<1x1x32x64xf32> to vector<32x64xf32>
    %cst_37 = arith.constant dense<0.000000e+00> : vector<32x64xf32>
    %58 = tpu.matmul %29, %57, %cst_37 {dimension_numbers = #tpu.dot_dimension_numbers<[1], [0], [0], [1], [0, 0, 1, 1], [], []>} : vector<32x32xf32>, vector<32x64xf32>, vector<32x64xf32> -> vector<32x64xf32>
    %59 = arith.addf %55, %58 : vector<32x64xf32>
    %c31_i32 = arith.constant 31 : i32
    %60 = tpu.dynamic_rotate %29 by %c31_i32 dim 0 : vector<32x32xf32>, i32 -> vector<32x32xf32>
    %c15_i32 = arith.constant 15 : i32
    %61 = vector.broadcast %c15_i32 : i32 to vector<32x1xi32>
    %62 = arith.cmpi slt, %17, %61 : vector<32x1xi32>
    %cst_38 = arith.constant 0.000000e+00 : f32
    %63 = vector.shape_cast %62 : vector<32x1xi1> to vector<32x1xi1>
    %64 = vector.broadcast %63 : vector<32x1xi1> to vector<32x32xi1>
    %65 = vector.broadcast %cst_38 : f32 to vector<32x32xf32>
    %66 = arith.select %64, %60, %65 : vector<32x32xi1>, vector<32x32xf32>
    %c0_39 = arith.constant 0 : index
    %c3 = arith.constant 3 : index
    %c0_40 = arith.constant 0 : index
    %c0_41 = arith.constant 0 : index
    %67 = vector.load %arg6[%c0_39, %c3, %c0_40, %c0_41] : memref<3x5x32x64xf32, #tpu.memory_space<vmem>>, vector<1x1x32x64xf32>
    %68 = vector.shape_cast %67 : vector<1x1x32x64xf32> to vector<32x64xf32>
    %cst_42 = arith.constant dense<0.000000e+00> : vector<32x64xf32>
    %69 = tpu.matmul %66, %68, %cst_42 {dimension_numbers = #tpu.dot_dimension_numbers<[1], [0], [0], [1], [0, 0, 1, 1], [], []>} : vector<32x32xf32>, vector<32x64xf32>, vector<32x64xf32> -> vector<32x64xf32>
    %70 = arith.addf %59, %69 : vector<32x64xf32>
    %c30_i32 = arith.constant 30 : i32
    %71 = tpu.dynamic_rotate %29 by %c30_i32 dim 0 : vector<32x32xf32>, i32 -> vector<32x32xf32>
    %c14_i32 = arith.constant 14 : i32
    %72 = vector.broadcast %c14_i32 : i32 to vector<32x1xi32>
    %73 = arith.cmpi slt, %17, %72 : vector<32x1xi32>
    %cst_43 = arith.constant 0.000000e+00 : f32
    %74 = vector.shape_cast %73 : vector<32x1xi1> to vector<32x1xi1>
    %75 = vector.broadcast %74 : vector<32x1xi1> to vector<32x32xi1>
    %76 = vector.broadcast %cst_43 : f32 to vector<32x32xf32>
    %77 = arith.select %75, %71, %76 : vector<32x32xi1>, vector<32x32xf32>
    %c0_44 = arith.constant 0 : index
    %c4 = arith.constant 4 : index
    %c0_45 = arith.constant 0 : index
    %c0_46 = arith.constant 0 : index
    %78 = vector.load %arg6[%c0_44, %c4, %c0_45, %c0_46] : memref<3x5x32x64xf32, #tpu.memory_space<vmem>>, vector<1x1x32x64xf32>
    %79 = vector.shape_cast %78 : vector<1x1x32x64xf32> to vector<32x64xf32>
    %cst_47 = arith.constant dense<0.000000e+00> : vector<32x64xf32>
    %80 = tpu.matmul %77, %79, %cst_47 {dimension_numbers = #tpu.dot_dimension_numbers<[1], [0], [0], [1], [0, 0, 1, 1], [], []>} : vector<32x32xf32>, vector<32x64xf32>, vector<32x64xf32> -> vector<32x64xf32>
    %81 = arith.addf %70, %80 : vector<32x64xf32>
    %82 = vector.extract_strided_slice %81 {offsets = [0, 0], sizes = [32, 32], strides = [1, 1]} : vector<32x64xf32> to vector<32x32xf32>
    %83 = math.tanh %82 : vector<32x32xf32>
    %84 = vector.extract_strided_slice %81 {offsets = [0, 32], sizes = [32, 32], strides = [1, 1]} : vector<32x64xf32> to vector<32x32xf32>
    %85 = arith.negf %84 : vector<32x32xf32>
    %86 = math.exp %85 : vector<32x32xf32>
    %cst_48 = arith.constant 1.000000e+00 : f32
    %87 = vector.broadcast %cst_48 : f32 to vector<32x32xf32>
    %88 = arith.addf %87, %86 : vector<32x32xf32>
    %89 = arith.divf %87, %88 : vector<32x32xf32>
    %90 = arith.mulf %83, %89 : vector<32x32xf32>
    %c0_49 = arith.constant 0 : index
    %c0_50 = arith.constant 0 : index
    %c0_51 = arith.constant 0 : index
    %91 = vector.load %arg8[%c0_49, %c0_50, %c0_51] : memref<3x32x32xf32, #tpu.memory_space<vmem>>, vector<1x32x32xf32>
    %92 = vector.shape_cast %91 : vector<1x32x32xf32> to vector<32x32xf32>
    %cst_52 = arith.constant dense<0.000000e+00> : vector<32x32xf32>
    %93 = tpu.matmul %90, %92, %cst_52 {dimension_numbers = #tpu.dot_dimension_numbers<[1], [0], [0], [1], [0, 0, 1, 1], [], []>} : vector<32x32xf32>, vector<32x32xf32>, vector<32x32xf32> -> vector<32x32xf32>
    %94 = arith.addf %29, %93 : vector<32x32xf32>
    %c0_53 = arith.constant 0 : index
    %c0_54 = arith.constant 0 : index
    %c0_55 = arith.constant 0 : index
    %95 = vector.load %arg10[%c0_53, %c0_54, %c0_55] : memref<3x1x32xf32, #tpu.memory_space<vmem>>, vector<1x1x32xf32>
    %96 = vector.shape_cast %95 : vector<1x1x32xf32> to vector<1x32xf32>
    %97 = vector.broadcast %96 : vector<1x32xf32> to vector<32x32xf32>
    %98 = arith.addf %94, %97 : vector<32x32xf32>
    %99 = vector.broadcast %0 : vector<32x1xf32> to vector<32x32xf32>
    %100 = arith.mulf %98, %99 : vector<32x32xf32>
    %c0_56 = arith.constant 0 : index
    %c0_57 = arith.constant 0 : index
    %101 = vector.load %arg19[%c0_56, %c0_57] : memref<32x32xf32, #tpu.memory_space<vmem>>, vector<32x32xf32>
    tpu.vector_store %arg19[%c0_56, %c0_57], %100 {strides = array<i32>} : memref<32x32xf32, #tpu.memory_space<vmem>>, vector<32x32xf32>,
    %c0_58 = arith.constant 0 : index
    %c0_59 = arith.constant 0 : index
    %102 = vector.load %arg20[%c0_58, %c0_59] : memref<32x32xf32, #tpu.memory_space<vmem>>, vector<32x32xf32>
    %c0_60 = arith.constant 0 : index
    %c0_61 = arith.constant 0 : index
    %c0_62 = arith.constant 0 : index
    %103 = vector.load %arg9[%c0_60, %c0_61, %c0_62] : memref<3x32x32xf32, #tpu.memory_space<vmem>>, vector<1x32x32xf32>
    %104 = vector.shape_cast %103 : vector<1x32x32xf32> to vector<32x32xf32>
    %cst_63 = arith.constant dense<0.000000e+00> : vector<32x32xf32>
    %105 = tpu.matmul %90, %104, %cst_63 {dimension_numbers = #tpu.dot_dimension_numbers<[1], [0], [0], [1], [0, 0, 1, 1], [], []>} : vector<32x32xf32>, vector<32x32xf32>, vector<32x32xf32> -> vector<32x32xf32>
    %106 = arith.addf %102, %105 : vector<32x32xf32>
    %c0_64 = arith.constant 0 : index
    %c0_65 = arith.constant 0 : index
    %c0_66 = arith.constant 0 : index
    %107 = vector.load %arg11[%c0_64, %c0_65, %c0_66] : memref<3x1x32xf32, #tpu.memory_space<vmem>>, vector<1x1x32xf32>
    %108 = vector.shape_cast %107 : vector<1x1x32xf32> to vector<1x32xf32>
    %109 = vector.broadcast %108 : vector<1x32xf32> to vector<32x32xf32>
    %110 = arith.addf %106, %109 : vector<32x32xf32>
    %c0_67 = arith.constant 0 : index
    %c0_68 = arith.constant 0 : index
    %111 = vector.load %arg20[%c0_67, %c0_68] : memref<32x32xf32, #tpu.memory_space<vmem>>, vector<32x32xf32>
    tpu.vector_store %arg20[%c0_67, %c0_68], %110 {strides = array<i32>} : memref<32x32xf32, #tpu.memory_space<vmem>>, vector<32x32xf32>,
    %c0_69 = arith.constant 0 : index
    %c0_70 = arith.constant 0 : index
    %112 = vector.load %arg19[%c0_69, %c0_70] : memref<32x32xf32, #tpu.memory_space<vmem>>, vector<32x32xf32>
    %c1_71 = arith.constant 1 : index
    %c0_72 = arith.constant 0 : index
    %c0_73 = arith.constant 0 : index
    %113 = vector.load %arg7[%c1_71, %c0_72, %c0_73] : memref<3x1x64xf32, #tpu.memory_space<vmem>>, vector<1x1x64xf32>
    %114 = vector.shape_cast %113 : vector<1x1x64xf32> to vector<1x64xf32>
    %115 = vector.shape_cast %114 : vector<1x64xf32> to vector<1x64xf32>
    %116 = vector.broadcast %115 : vector<1x64xf32> to vector<32x64xf32>
    %c4_i32 = arith.constant 4 : i32
    %117 = tpu.dynamic_rotate %112 by %c4_i32 dim 0 : vector<32x32xf32>, i32 -> vector<32x32xf32>
    %c4_i32_74 = arith.constant 4 : i32
    %118 = vector.broadcast %c4_i32_74 : i32 to vector<32x1xi32>
    %119 = arith.cmpi sge, %17, %118 : vector<32x1xi32>
    %cst_75 = arith.constant 0.000000e+00 : f32
    %120 = vector.shape_cast %119 : vector<32x1xi1> to vector<32x1xi1>
    %121 = vector.broadcast %120 : vector<32x1xi1> to vector<32x32xi1>
    %122 = vector.broadcast %cst_75 : f32 to vector<32x32xf32>
    %123 = arith.select %121, %117, %122 : vector<32x32xi1>, vector<32x32xf32>
    %c1_76 = arith.constant 1 : index
    %c0_77 = arith.constant 0 : index
    %c0_78 = arith.constant 0 : index
    %c0_79 = arith.constant 0 : index
    %124 = vector.load %arg6[%c1_76, %c0_77, %c0_78, %c0_79] : memref<3x5x32x64xf32, #tpu.memory_space<vmem>>, vector<1x1x32x64xf32>
    %125 = vector.shape_cast %124 : vector<1x1x32x64xf32> to vector<32x64xf32>
    %cst_80 = arith.constant dense<0.000000e+00> : vector<32x64xf32>
    %126 = tpu.matmul %123, %125, %cst_80 {dimension_numbers = #tpu.dot_dimension_numbers<[1], [0], [0], [1], [0, 0, 1, 1], [], []>} : vector<32x32xf32>, vector<32x64xf32>, vector<32x64xf32> -> vector<32x64xf32>
    %127 = arith.addf %116, %126 : vector<32x64xf32>
    %c2_i32_81 = arith.constant 2 : i32
    %128 = tpu.dynamic_rotate %112 by %c2_i32_81 dim 0 : vector<32x32xf32>, i32 -> vector<32x32xf32>
    %cst_82 = arith.constant 0.000000e+00 : f32
    %129 = vector.shape_cast %36 : vector<32x1xi1> to vector<32x1xi1>
    %130 = vector.broadcast %129 : vector<32x1xi1> to vector<32x32xi1>
    %131 = vector.broadcast %cst_82 : f32 to vector<32x32xf32>
    %132 = arith.select %130, %128, %131 : vector<32x32xi1>, vector<32x32xf32>
    %c1_83 = arith.constant 1 : index
    %c1_84 = arith.constant 1 : index
    %c0_85 = arith.constant 0 : index
    %c0_86 = arith.constant 0 : index
    %133 = vector.load %arg6[%c1_83, %c1_84, %c0_85, %c0_86] : memref<3x5x32x64xf32, #tpu.memory_space<vmem>>, vector<1x1x32x64xf32>
    %134 = vector.shape_cast %133 : vector<1x1x32x64xf32> to vector<32x64xf32>
    %cst_87 = arith.constant dense<0.000000e+00> : vector<32x64xf32>
    %135 = tpu.matmul %132, %134, %cst_87 {dimension_numbers = #tpu.dot_dimension_numbers<[1], [0], [0], [1], [0, 0, 1, 1], [], []>} : vector<32x32xf32>, vector<32x64xf32>, vector<32x64xf32> -> vector<32x64xf32>
    %136 = arith.addf %127, %135 : vector<32x64xf32>
    %c1_88 = arith.constant 1 : index
    %c2_89 = arith.constant 2 : index
    %c0_90 = arith.constant 0 : index
    %c0_91 = arith.constant 0 : index
    %137 = vector.load %arg6[%c1_88, %c2_89, %c0_90, %c0_91] : memref<3x5x32x64xf32, #tpu.memory_space<vmem>>, vector<1x1x32x64xf32>
    %138 = vector.shape_cast %137 : vector<1x1x32x64xf32> to vector<32x64xf32>
    %cst_92 = arith.constant dense<0.000000e+00> : vector<32x64xf32>
    %139 = tpu.matmul %112, %138, %cst_92 {dimension_numbers = #tpu.dot_dimension_numbers<[1], [0], [0], [1], [0, 0, 1, 1], [], []>} : vector<32x32xf32>, vector<32x64xf32>, vector<32x64xf32> -> vector<32x64xf32>
    %140 = arith.addf %136, %139 : vector<32x64xf32>
    %c30_i32_93 = arith.constant 30 : i32
    %141 = tpu.dynamic_rotate %112 by %c30_i32_93 dim 0 : vector<32x32xf32>, i32 -> vector<32x32xf32>
    %cst_94 = arith.constant 0.000000e+00 : f32
    %142 = vector.shape_cast %73 : vector<32x1xi1> to vector<32x1xi1>
    %143 = vector.broadcast %142 : vector<32x1xi1> to vector<32x32xi1>
    %144 = vector.broadcast %cst_94 : f32 to vector<32x32xf32>
    %145 = arith.select %143, %141, %144 : vector<32x32xi1>, vector<32x32xf32>
    %c1_95 = arith.constant 1 : index
    %c3_96 = arith.constant 3 : index
    %c0_97 = arith.constant 0 : index
    %c0_98 = arith.constant 0 : index
    %146 = vector.load %arg6[%c1_95, %c3_96, %c0_97, %c0_98] : memref<3x5x32x64xf32, #tpu.memory_space<vmem>>, vector<1x1x32x64xf32>
    %147 = vector.shape_cast %146 : vector<1x1x32x64xf32> to vector<32x64xf32>
    %cst_99 = arith.constant dense<0.000000e+00> : vector<32x64xf32>
    %148 = tpu.matmul %145, %147, %cst_99 {dimension_numbers = #tpu.dot_dimension_numbers<[1], [0], [0], [1], [0, 0, 1, 1], [], []>} : vector<32x32xf32>, vector<32x64xf32>, vector<32x64xf32> -> vector<32x64xf32>
    %149 = arith.addf %140, %148 : vector<32x64xf32>
    %c28_i32 = arith.constant 28 : i32
    %150 = tpu.dynamic_rotate %112 by %c28_i32 dim 0 : vector<32x32xf32>, i32 -> vector<32x32xf32>
    %c12_i32 = arith.constant 12 : i32
    %151 = vector.broadcast %c12_i32 : i32 to vector<32x1xi32>
    %152 = arith.cmpi slt, %17, %151 : vector<32x1xi32>
    %cst_100 = arith.constant 0.000000e+00 : f32
    %153 = vector.shape_cast %152 : vector<32x1xi1> to vector<32x1xi1>
    %154 = vector.broadcast %153 : vector<32x1xi1> to vector<32x32xi1>
    %155 = vector.broadcast %cst_100 : f32 to vector<32x32xf32>
    %156 = arith.select %154, %150, %155 : vector<32x32xi1>, vector<32x32xf32>
    %c1_101 = arith.constant 1 : index
    %c4_102 = arith.constant 4 : index
    %c0_103 = arith.constant 0 : index
    %c0_104 = arith.constant 0 : index
    %157 = vector.load %arg6[%c1_101, %c4_102, %c0_103, %c0_104] : memref<3x5x32x64xf32, #tpu.memory_space<vmem>>, vector<1x1x32x64xf32>
    %158 = vector.shape_cast %157 : vector<1x1x32x64xf32> to vector<32x64xf32>
    %cst_105 = arith.constant dense<0.000000e+00> : vector<32x64xf32>
    %159 = tpu.matmul %156, %158, %cst_105 {dimension_numbers = #tpu.dot_dimension_numbers<[1], [0], [0], [1], [0, 0, 1, 1], [], []>} : vector<32x32xf32>, vector<32x64xf32>, vector<32x64xf32> -> vector<32x64xf32>
    %160 = arith.addf %149, %159 : vector<32x64xf32>
    %161 = vector.extract_strided_slice %160 {offsets = [0, 0], sizes = [32, 32], strides = [1, 1]} : vector<32x64xf32> to vector<32x32xf32>
    %162 = math.tanh %161 : vector<32x32xf32>
    %163 = vector.extract_strided_slice %160 {offsets = [0, 32], sizes = [32, 32], strides = [1, 1]} : vector<32x64xf32> to vector<32x32xf32>
    %164 = arith.negf %163 : vector<32x32xf32>
    %165 = math.exp %164 : vector<32x32xf32>
    %cst_106 = arith.constant 1.000000e+00 : f32
    %166 = vector.broadcast %cst_106 : f32 to vector<32x32xf32>
    %167 = arith.addf %166, %165 : vector<32x32xf32>
    %168 = arith.divf %166, %167 : vector<32x32xf32>
    %169 = arith.mulf %162, %168 : vector<32x32xf32>
    %c1_107 = arith.constant 1 : index
    %c0_108 = arith.constant 0 : index
    %c0_109 = arith.constant 0 : index
    %170 = vector.load %arg8[%c1_107, %c0_108, %c0_109] : memref<3x32x32xf32, #tpu.memory_space<vmem>>, vector<1x32x32xf32>
    %171 = vector.shape_cast %170 : vector<1x32x32xf32> to vector<32x32xf32>
    %cst_110 = arith.constant dense<0.000000e+00> : vector<32x32xf32>
    %172 = tpu.matmul %169, %171, %cst_110 {dimension_numbers = #tpu.dot_dimension_numbers<[1], [0], [0], [1], [0, 0, 1, 1], [], []>} : vector<32x32xf32>, vector<32x32xf32>, vector<32x32xf32> -> vector<32x32xf32>
    %173 = arith.addf %112, %172 : vector<32x32xf32>
    %c1_111 = arith.constant 1 : index
    %c0_112 = arith.constant 0 : index
    %c0_113 = arith.constant 0 : index
    %174 = vector.load %arg10[%c1_111, %c0_112, %c0_113] : memref<3x1x32xf32, #tpu.memory_space<vmem>>, vector<1x1x32xf32>
    %175 = vector.shape_cast %174 : vector<1x1x32xf32> to vector<1x32xf32>
    %176 = vector.broadcast %175 : vector<1x32xf32> to vector<32x32xf32>
    %177 = arith.addf %173, %176 : vector<32x32xf32>
    %178 = vector.broadcast %0 : vector<32x1xf32> to vector<32x32xf32>
    %179 = arith.mulf %177, %178 : vector<32x32xf32>
    %c0_114 = arith.constant 0 : index
    %c0_115 = arith.constant 0 : index
    %180 = vector.load %arg19[%c0_114, %c0_115] : memref<32x32xf32, #tpu.memory_space<vmem>>, vector<32x32xf32>
    tpu.vector_store %arg19[%c0_114, %c0_115], %179 {strides = array<i32>} : memref<32x32xf32, #tpu.memory_space<vmem>>, vector<32x32xf32>,
    %c0_116 = arith.constant 0 : index
    %c0_117 = arith.constant 0 : index
    %181 = vector.load %arg20[%c0_116, %c0_117] : memref<32x32xf32, #tpu.memory_space<vmem>>, vector<32x32xf32>
    %c1_118 = arith.constant 1 : index
    %c0_119 = arith.constant 0 : index
    %c0_120 = arith.constant 0 : index
    %182 = vector.load %arg9[%c1_118, %c0_119, %c0_120] : memref<3x32x32xf32, #tpu.memory_space<vmem>>, vector<1x32x32xf32>
    %183 = vector.shape_cast %182 : vector<1x32x32xf32> to vector<32x32xf32>
    %cst_121 = arith.constant dense<0.000000e+00> : vector<32x32xf32>
    %184 = tpu.matmul %169, %183, %cst_121 {dimension_numbers = #tpu.dot_dimension_numbers<[1], [0], [0], [1], [0, 0, 1, 1], [], []>} : vector<32x32xf32>, vector<32x32xf32>, vector<32x32xf32> -> vector<32x32xf32>
    %185 = arith.addf %181, %184 : vector<32x32xf32>
    %c1_122 = arith.constant 1 : index
    %c0_123 = arith.constant 0 : index
    %c0_124 = arith.constant 0 : index
    %186 = vector.load %arg11[%c1_122, %c0_123, %c0_124] : memref<3x1x32xf32, #tpu.memory_space<vmem>>, vector<1x1x32xf32>
    %187 = vector.shape_cast %186 : vector<1x1x32xf32> to vector<1x32xf32>
    %188 = vector.broadcast %187 : vector<1x32xf32> to vector<32x32xf32>
    %189 = arith.addf %185, %188 : vector<32x32xf32>
    %c0_125 = arith.constant 0 : index
    %c0_126 = arith.constant 0 : index
    %190 = vector.load %arg20[%c0_125, %c0_126] : memref<32x32xf32, #tpu.memory_space<vmem>>, vector<32x32xf32>
    tpu.vector_store %arg20[%c0_125, %c0_126], %189 {strides = array<i32>} : memref<32x32xf32, #tpu.memory_space<vmem>>, vector<32x32xf32>,
    %c0_127 = arith.constant 0 : index
    %c0_128 = arith.constant 0 : index
    %191 = vector.load %arg19[%c0_127, %c0_128] : memref<32x32xf32, #tpu.memory_space<vmem>>, vector<32x32xf32>
    %c2_129 = arith.constant 2 : index
    %c0_130 = arith.constant 0 : index
    %c0_131 = arith.constant 0 : index
    %192 = vector.load %arg7[%c2_129, %c0_130, %c0_131] : memref<3x1x64xf32, #tpu.memory_space<vmem>>, vector<1x1x64xf32>
    %193 = vector.shape_cast %192 : vector<1x1x64xf32> to vector<1x64xf32>
    %194 = vector.shape_cast %193 : vector<1x64xf32> to vector<1x64xf32>
    %195 = vector.broadcast %194 : vector<1x64xf32> to vector<32x64xf32>
    %c8_i32 = arith.constant 8 : i32
    %196 = tpu.dynamic_rotate %191 by %c8_i32 dim 0 : vector<32x32xf32>, i32 -> vector<32x32xf32>
    %c8_i32_132 = arith.constant 8 : i32
    %197 = vector.broadcast %c8_i32_132 : i32 to vector<32x1xi32>
    %198 = arith.cmpi sge, %17, %197 : vector<32x1xi32>
    %cst_133 = arith.constant 0.000000e+00 : f32
    %199 = vector.shape_cast %198 : vector<32x1xi1> to vector<32x1xi1>
    %200 = vector.broadcast %199 : vector<32x1xi1> to vector<32x32xi1>
    %201 = vector.broadcast %cst_133 : f32 to vector<32x32xf32>
    %202 = arith.select %200, %196, %201 : vector<32x32xi1>, vector<32x32xf32>
    %c2_134 = arith.constant 2 : index
    %c0_135 = arith.constant 0 : index
    %c0_136 = arith.constant 0 : index
    %c0_137 = arith.constant 0 : index
    %203 = vector.load %arg6[%c2_134, %c0_135, %c0_136, %c0_137] : memref<3x5x32x64xf32, #tpu.memory_space<vmem>>, vector<1x1x32x64xf32>
    %204 = vector.shape_cast %203 : vector<1x1x32x64xf32> to vector<32x64xf32>
    %cst_138 = arith.constant dense<0.000000e+00> : vector<32x64xf32>
    %205 = tpu.matmul %202, %204, %cst_138 {dimension_numbers = #tpu.dot_dimension_numbers<[1], [0], [0], [1], [0, 0, 1, 1], [], []>} : vector<32x32xf32>, vector<32x64xf32>, vector<32x64xf32> -> vector<32x64xf32>
    %206 = arith.addf %195, %205 : vector<32x64xf32>
    %c4_i32_139 = arith.constant 4 : i32
    %207 = tpu.dynamic_rotate %191 by %c4_i32_139 dim 0 : vector<32x32xf32>, i32 -> vector<32x32xf32>
    %cst_140 = arith.constant 0.000000e+00 : f32
    %208 = vector.shape_cast %119 : vector<32x1xi1> to vector<32x1xi1>
    %209 = vector.broadcast %208 : vector<32x1xi1> to vector<32x32xi1>
    %210 = vector.broadcast %cst_140 : f32 to vector<32x32xf32>
    %211 = arith.select %209, %207, %210 : vector<32x32xi1>, vector<32x32xf32>
    %c2_141 = arith.constant 2 : index
    %c1_142 = arith.constant 1 : index
    %c0_143 = arith.constant 0 : index
    %c0_144 = arith.constant 0 : index
    %212 = vector.load %arg6[%c2_141, %c1_142, %c0_143, %c0_144] : memref<3x5x32x64xf32, #tpu.memory_space<vmem>>, vector<1x1x32x64xf32>
    %213 = vector.shape_cast %212 : vector<1x1x32x64xf32> to vector<32x64xf32>
    %cst_145 = arith.constant dense<0.000000e+00> : vector<32x64xf32>
    %214 = tpu.matmul %211, %213, %cst_145 {dimension_numbers = #tpu.dot_dimension_numbers<[1], [0], [0], [1], [0, 0, 1, 1], [], []>} : vector<32x32xf32>, vector<32x64xf32>, vector<32x64xf32> -> vector<32x64xf32>
    %215 = arith.addf %206, %214 : vector<32x64xf32>
    %c2_146 = arith.constant 2 : index
    %c2_147 = arith.constant 2 : index
    %c0_148 = arith.constant 0 : index
    %c0_149 = arith.constant 0 : index
    %216 = vector.load %arg6[%c2_146, %c2_147, %c0_148, %c0_149] : memref<3x5x32x64xf32, #tpu.memory_space<vmem>>, vector<1x1x32x64xf32>
    %217 = vector.shape_cast %216 : vector<1x1x32x64xf32> to vector<32x64xf32>
    %cst_150 = arith.constant dense<0.000000e+00> : vector<32x64xf32>
    %218 = tpu.matmul %191, %217, %cst_150 {dimension_numbers = #tpu.dot_dimension_numbers<[1], [0], [0], [1], [0, 0, 1, 1], [], []>} : vector<32x32xf32>, vector<32x64xf32>, vector<32x64xf32> -> vector<32x64xf32>
    %219 = arith.addf %215, %218 : vector<32x64xf32>
    %c28_i32_151 = arith.constant 28 : i32
    %220 = tpu.dynamic_rotate %191 by %c28_i32_151 dim 0 : vector<32x32xf32>, i32 -> vector<32x32xf32>
    %cst_152 = arith.constant 0.000000e+00 : f32
    %221 = vector.shape_cast %152 : vector<32x1xi1> to vector<32x1xi1>
    %222 = vector.broadcast %221 : vector<32x1xi1> to vector<32x32xi1>
    %223 = vector.broadcast %cst_152 : f32 to vector<32x32xf32>
    %224 = arith.select %222, %220, %223 : vector<32x32xi1>, vector<32x32xf32>
    %c2_153 = arith.constant 2 : index
    %c3_154 = arith.constant 3 : index
    %c0_155 = arith.constant 0 : index
    %c0_156 = arith.constant 0 : index
    %225 = vector.load %arg6[%c2_153, %c3_154, %c0_155, %c0_156] : memref<3x5x32x64xf32, #tpu.memory_space<vmem>>, vector<1x1x32x64xf32>
    %226 = vector.shape_cast %225 : vector<1x1x32x64xf32> to vector<32x64xf32>
    %cst_157 = arith.constant dense<0.000000e+00> : vector<32x64xf32>
    %227 = tpu.matmul %224, %226, %cst_157 {dimension_numbers = #tpu.dot_dimension_numbers<[1], [0], [0], [1], [0, 0, 1, 1], [], []>} : vector<32x32xf32>, vector<32x64xf32>, vector<32x64xf32> -> vector<32x64xf32>
    %228 = arith.addf %219, %227 : vector<32x64xf32>
    %c24_i32 = arith.constant 24 : i32
    %229 = tpu.dynamic_rotate %191 by %c24_i32 dim 0 : vector<32x32xf32>, i32 -> vector<32x32xf32>
    %c8_i32_158 = arith.constant 8 : i32
    %230 = vector.broadcast %c8_i32_158 : i32 to vector<32x1xi32>
    %231 = arith.cmpi slt, %17, %230 : vector<32x1xi32>
    %cst_159 = arith.constant 0.000000e+00 : f32
    %232 = vector.shape_cast %231 : vector<32x1xi1> to vector<32x1xi1>
    %233 = vector.broadcast %232 : vector<32x1xi1> to vector<32x32xi1>
    %234 = vector.broadcast %cst_159 : f32 to vector<32x32xf32>
    %235 = arith.select %233, %229, %234 : vector<32x32xi1>, vector<32x32xf32>
    %c2_160 = arith.constant 2 : index
    %c4_161 = arith.constant 4 : index
    %c0_162 = arith.constant 0 : index
    %c0_163 = arith.constant 0 : index
    %236 = vector.load %arg6[%c2_160, %c4_161, %c0_162, %c0_163] : memref<3x5x32x64xf32, #tpu.memory_space<vmem>>, vector<1x1x32x64xf32>
    %237 = vector.shape_cast %236 : vector<1x1x32x64xf32> to vector<32x64xf32>
    %cst_164 = arith.constant dense<0.000000e+00> : vector<32x64xf32>
    %238 = tpu.matmul %235, %237, %cst_164 {dimension_numbers = #tpu.dot_dimension_numbers<[1], [0], [0], [1], [0, 0, 1, 1], [], []>} : vector<32x32xf32>, vector<32x64xf32>, vector<32x64xf32> -> vector<32x64xf32>
    %239 = arith.addf %228, %238 : vector<32x64xf32>
    %240 = vector.extract_strided_slice %239 {offsets = [0, 0], sizes = [32, 32], strides = [1, 1]} : vector<32x64xf32> to vector<32x32xf32>
    %241 = math.tanh %240 : vector<32x32xf32>
    %242 = vector.extract_strided_slice %239 {offsets = [0, 32], sizes = [32, 32], strides = [1, 1]} : vector<32x64xf32> to vector<32x32xf32>
    %243 = arith.negf %242 : vector<32x32xf32>
    %244 = math.exp %243 : vector<32x32xf32>
    %cst_165 = arith.constant 1.000000e+00 : f32
    %245 = vector.broadcast %cst_165 : f32 to vector<32x32xf32>
    %246 = arith.addf %245, %244 : vector<32x32xf32>
    %247 = arith.divf %245, %246 : vector<32x32xf32>
    %248 = arith.mulf %241, %247 : vector<32x32xf32>
    %c0_166 = arith.constant 0 : index
    %c0_167 = arith.constant 0 : index
    %249 = vector.load %arg20[%c0_166, %c0_167] : memref<32x32xf32, #tpu.memory_space<vmem>>, vector<32x32xf32>
    %c2_168 = arith.constant 2 : index
    %c0_169 = arith.constant 0 : index
    %c0_170 = arith.constant 0 : index
    %250 = vector.load %arg8[%c2_168, %c0_169, %c0_170] : memref<3x32x32xf32, #tpu.memory_space<vmem>>, vector<1x32x32xf32>
    %251 = vector.shape_cast %250 : vector<1x32x32xf32> to vector<32x32xf32>
    %cst_171 = arith.constant dense<0.000000e+00> : vector<32x32xf32>
    %252 = tpu.matmul %248, %251, %cst_171 {dimension_numbers = #tpu.dot_dimension_numbers<[1], [0], [0], [1], [0, 0, 1, 1], [], []>} : vector<32x32xf32>, vector<32x32xf32>, vector<32x32xf32> -> vector<32x32xf32>
    %253 = arith.addf %249, %252 : vector<32x32xf32>
    %c2_172 = arith.constant 2 : index
    %c0_173 = arith.constant 0 : index
    %c0_174 = arith.constant 0 : index
    %254 = vector.load %arg10[%c2_172, %c0_173, %c0_174] : memref<3x1x32xf32, #tpu.memory_space<vmem>>, vector<1x1x32xf32>
    %255 = vector.shape_cast %254 : vector<1x1x32xf32> to vector<1x32xf32>
    %256 = vector.broadcast %255 : vector<1x32xf32> to vector<32x32xf32>
    %257 = arith.addf %253, %256 : vector<32x32xf32>
    %c0_175 = arith.constant 0 : index
    %c0_176 = arith.constant 0 : index
    %258 = vector.load %arg20[%c0_175, %c0_176] : memref<32x32xf32, #tpu.memory_space<vmem>>, vector<32x32xf32>
    tpu.vector_store %arg20[%c0_175, %c0_176], %257 {strides = array<i32>} : memref<32x32xf32, #tpu.memory_space<vmem>>, vector<32x32xf32>,
    %c0_177 = arith.constant 0 : index
    %c0_178 = arith.constant 0 : index
    %259 = vector.load %arg20[%c0_177, %c0_178] : memref<32x32xf32, #tpu.memory_space<vmem>>, vector<32x32xf32>
    %260 = vector.broadcast %0 : vector<32x1xf32> to vector<32x32xf32>
    %261 = arith.mulf %259, %260 : vector<32x32xf32>
    %c0_179 = arith.constant 0 : index
    %c0_180 = arith.constant 0 : index
    %262 = vector.load %arg12[%c0_179, %c0_180] : memref<32x4xf32, #tpu.memory_space<vmem>>, vector<32x4xf32>
    %cst_181 = arith.constant dense<0.000000e+00> : vector<32x4xf32>
    %263 = tpu.matmul %261, %262, %cst_181 {dimension_numbers = #tpu.dot_dimension_numbers<[1], [0], [0], [1], [0, 0, 1, 1], [], []>} : vector<32x32xf32>, vector<32x4xf32>, vector<32x4xf32> -> vector<32x4xf32>
    %c0_182 = arith.constant 0 : index
    %c0_183 = arith.constant 0 : index
    %264 = vector.load %arg14[%c0_182, %c0_183] : memref<1x4xf32, #tpu.memory_space<vmem>>, vector<1x4xf32>
    %265 = vector.broadcast %264 : vector<1x4xf32> to vector<32x4xf32>
    %266 = arith.addf %263, %265 : vector<32x4xf32>
    %267 = vector.broadcast %0 : vector<32x1xf32> to vector<32x4xf32>
    %268 = arith.mulf %266, %267 : vector<32x4xf32>
    %c0_184 = arith.constant 0 : index
    %c0_185 = arith.constant 0 : index
    %269 = vector.load %arg13[%c0_184, %c0_185] : memref<32x4xf32, #tpu.memory_space<vmem>>, vector<32x4xf32>
    %cst_186 = arith.constant dense<0.000000e+00> : vector<32x4xf32>
    %270 = tpu.matmul %261, %269, %cst_186 {dimension_numbers = #tpu.dot_dimension_numbers<[1], [0], [0], [1], [0, 0, 1, 1], [], []>} : vector<32x32xf32>, vector<32x4xf32>, vector<32x4xf32> -> vector<32x4xf32>
    %c0_187 = arith.constant 0 : index
    %c0_188 = arith.constant 0 : index
    %271 = vector.load %arg15[%c0_187, %c0_188] : memref<1x4xf32, #tpu.memory_space<vmem>>, vector<1x4xf32>
    %272 = vector.broadcast %271 : vector<1x4xf32> to vector<32x4xf32>
    %273 = arith.addf %270, %272 : vector<32x4xf32>
    %274 = vector.broadcast %0 : vector<32x1xf32> to vector<32x4xf32>
    %275 = arith.mulf %273, %274 : vector<32x4xf32>
    %c0_189 = arith.constant 0 : index
    %c0_190 = arith.constant 0 : index
    %276 = vector.load %arg3[%c0_189, %c0_190] : memref<32x4xf32, #tpu.memory_space<vmem>>, vector<32x4xf32>
    %277 = math.exp %275 : vector<32x4xf32>
    %278 = arith.mulf %276, %277 : vector<32x4xf32>
    %279 = arith.addf %268, %278 : vector<32x4xf32>
    %280 = vector.broadcast %0 : vector<32x1xf32> to vector<32x4xf32>
    %281 = arith.mulf %279, %280 : vector<32x4xf32>
    %c0_191 = arith.constant 0 : index
    %c0_192 = arith.constant 0 : index
    %282 = vector.load %arg16[%c0_191, %c0_192] : memref<32x4xf32, #tpu.memory_space<vmem>>, vector<32x4xf32>
    tpu.vector_store %arg16[%c0_191, %c0_192], %281 {strides = array<i32>} : memref<32x4xf32, #tpu.memory_space<vmem>>, vector<32x4xf32>,
    %c0_193 = arith.constant 0 : index
    %c0_194 = arith.constant 0 : index
    %283 = vector.load %arg17[%c0_193, %c0_194] : memref<32x4xf32, #tpu.memory_space<vmem>>, vector<32x4xf32>
    tpu.vector_store %arg17[%c0_193, %c0_194], %268 {strides = array<i32>} : memref<32x4xf32, #tpu.memory_space<vmem>>, vector<32x4xf32>,
    %c0_195 = arith.constant 0 : index
    %c0_196 = arith.constant 0 : index
    %284 = vector.load %arg18[%c0_195, %c0_196] : memref<32x4xf32, #tpu.memory_space<vmem>>, vector<32x4xf32>
    tpu.vector_store %arg18[%c0_195, %c0_196], %275 {strides = array<i32>} : memref<32x4xf32, #tpu.memory_space<vmem>>, vector<32x4xf32>,
    return
  }
  func.func @transform_0(%arg0: i32) -> (i32, i32) {
    %c0_i32 = arith.constant 0 : i32
    %c0_i32_0 = arith.constant 0 : i32
    return %arg0, %c0_i32 : i32, i32
  }
  func.func @transform_1(%arg0: i32) -> (i32, i32) {
    %c0_i32 = arith.constant 0 : i32
    %c0_i32_0 = arith.constant 0 : i32
    return %arg0, %c0_i32 : i32, i32
  }
  func.func @transform_2(%arg0: i32) -> (i32, i32) {
    %c0_i32 = arith.constant 0 : i32
    %c0_i32_0 = arith.constant 0 : i32
    return %arg0, %c0_i32 : i32, i32
  }
  func.func @transform_3(%arg0: i32) -> (i32, i32) {
    %c0_i32 = arith.constant 0 : i32
    %c0_i32_0 = arith.constant 0 : i32
    %c0_i32_1 = arith.constant 0 : i32
    return %c0_i32, %c0_i32_0 : i32, i32
  }
  func.func @transform_4(%arg0: i32) -> (i32, i32) {
    %c0_i32 = arith.constant 0 : i32
    %c0_i32_0 = arith.constant 0 : i32
    %c0_i32_1 = arith.constant 0 : i32
    return %c0_i32, %c0_i32_0 : i32, i32
  }
  func.func @transform_5(%arg0: i32) -> (i32, i32, i32, i32) {
    %c0_i32 = arith.constant 0 : i32
    %c0_i32_0 = arith.constant 0 : i32
    %c0_i32_1 = arith.constant 0 : i32
    %c0_i32_2 = arith.constant 0 : i32
    %c0_i32_3 = arith.constant 0 : i32
    return %c0_i32, %c0_i32_0, %c0_i32_1, %c0_i32_2 : i32, i32, i32, i32
  }
  func.func @transform_6(%arg0: i32) -> (i32, i32, i32) {
    %c0_i32 = arith.constant 0 : i32
    %c0_i32_0 = arith.constant 0 : i32
    %c0_i32_1 = arith.constant 0 : i32
    %c0_i32_2 = arith.constant 0 : i32
    return %c0_i32, %c0_i32_0, %c0_i32_1 : i32, i32, i32
  }
  func.func @transform_7(%arg0: i32) -> (i32, i32, i32) {
    %c0_i32 = arith.constant 0 : i32
    %c0_i32_0 = arith.constant 0 : i32
    %c0_i32_1 = arith.constant 0 : i32
    %c0_i32_2 = arith.constant 0 : i32
    return %c0_i32, %c0_i32_0, %c0_i32_1 : i32, i32, i32
  }
  func.func @transform_8(%arg0: i32) -> (i32, i32, i32) {
    %c0_i32 = arith.constant 0 : i32
    %c0_i32_0 = arith.constant 0 : i32
    %c0_i32_1 = arith.constant 0 : i32
    %c0_i32_2 = arith.constant 0 : i32
    return %c0_i32, %c0_i32_0, %c0_i32_1 : i32, i32, i32
  }
  func.func @transform_9(%arg0: i32) -> (i32, i32, i32) {
    %c0_i32 = arith.constant 0 : i32
    %c0_i32_0 = arith.constant 0 : i32
    %c0_i32_1 = arith.constant 0 : i32
    %c0_i32_2 = arith.constant 0 : i32
    return %c0_i32, %c0_i32_0, %c0_i32_1 : i32, i32, i32
  }
  func.func @transform_10(%arg0: i32) -> (i32, i32, i32) {
    %c0_i32 = arith.constant 0 : i32
    %c0_i32_0 = arith.constant 0 : i32
    %c0_i32_1 = arith.constant 0 : i32
    %c0_i32_2 = arith.constant 0 : i32
    return %c0_i32, %c0_i32_0, %c0_i32_1 : i32, i32, i32
  }
  func.func @transform_11(%arg0: i32) -> (i32, i32) {
    %c0_i32 = arith.constant 0 : i32
    %c0_i32_0 = arith.constant 0 : i32
    %c0_i32_1 = arith.constant 0 : i32
    return %c0_i32, %c0_i32_0 : i32, i32
  }
  func.func @transform_12(%arg0: i32) -> (i32, i32) {
    %c0_i32 = arith.constant 0 : i32
    %c0_i32_0 = arith.constant 0 : i32
    %c0_i32_1 = arith.constant 0 : i32
    return %c0_i32, %c0_i32_0 : i32, i32
  }
  func.func @transform_13(%arg0: i32) -> (i32, i32) {
    %c0_i32 = arith.constant 0 : i32
    %c0_i32_0 = arith.constant 0 : i32
    %c0_i32_1 = arith.constant 0 : i32
    return %c0_i32, %c0_i32_0 : i32, i32
  }
  func.func @transform_14(%arg0: i32) -> (i32, i32) {
    %c0_i32 = arith.constant 0 : i32
    %c0_i32_0 = arith.constant 0 : i32
    %c0_i32_1 = arith.constant 0 : i32
    return %c0_i32, %c0_i32_0 : i32, i32
  }
  func.func @transform_15(%arg0: i32) -> (i32, i32) {
    %c0_i32 = arith.constant 0 : i32
    %c0_i32_0 = arith.constant 0 : i32
    return %arg0, %c0_i32 : i32, i32
  }
  func.func @transform_16(%arg0: i32) -> (i32, i32) {
    %c0_i32 = arith.constant 0 : i32
    %c0_i32_0 = arith.constant 0 : i32
    return %arg0, %c0_i32 : i32, i32
  }
  func.func @transform_17(%arg0: i32) -> (i32, i32) {
    %c0_i32 = arith.constant 0 : i32
    %c0_i32_0 = arith.constant 0 : i32
    return %arg0, %c0_i32 : i32, i32
  }
}

</mosaic_0001>

<llo_original>
// kernel: tpu_custom_call.1
$region0: #{tpu_custom_call.1}
  #allocation0 [shape = 'u32[]', space=smem, size = 0x4, offset = 0x4, fixed_abs, tag = 'smem constant byte address 0x4 - core index']
  #allocation1 [shape = 'u32[144,128]{1,0:T(1,128)}', space=vmem, size = 0x12000, scoped, tag = 'internal scratch']
  #allocation2 [shape = 'f32[32,32]{1,0:T(8,128)}', space=vmem, size = 0x4000, scoped, tag = 'scratch operand']
  #allocation3 [shape = 'f32[32,32]{1,0:T(8,128)}', space=vmem, size = 0x4000, scoped, tag = 'scratch operand']
  %s0 = inlined_call_operand.vmem [shape: f32[32,1], index: 0, kind: input, shape index: {}]
  %s1 = inlined_call_operand.vmem [shape: f32[32,8], index: 1, kind: input, shape index: {}]
  %s2 = inlined_call_operand.vmem [shape: f32[32,4], index: 2, kind: input, shape index: {}]
  %s3 = inlined_call_operand.hbm [shape: f32[8,32], index: 3, kind: input, shape index: {}]
  %s4 = inlined_call_operand.vmem [shape: f32[1,32], index: 4, kind: input, shape index: {}]
  %s5 = inlined_call_operand.hbm [shape: f32[3,5,32,64], index: 5, kind: input, shape index: {}]
  %s6 = inlined_call_operand.hbm [shape: f32[3,1,64], index: 6, kind: input, shape index: {}]
  %s7 = inlined_call_operand.vmem [shape: f32[3,32,32], index: 7, kind: input, shape index: {}]
  %s8 = inlined_call_operand.vmem [shape: f32[3,32,32], index: 8, kind: input, shape index: {}]
  %s9 = inlined_call_operand.hbm [shape: f32[3,1,32], index: 9, kind: input, shape index: {}]
  %s10 = inlined_call_operand.hbm [shape: f32[3,1,32], index: 10, kind: input, shape index: {}]
  %s11 = inlined_call_operand.vmem [shape: f32[32,4], index: 11, kind: input, shape index: {}]
  %s12 = inlined_call_operand.vmem [shape: f32[32,4], index: 12, kind: input, shape index: {}]
  %s13 = inlined_call_operand.vmem [shape: f32[1,4], index: 13, kind: input, shape index: {}]
  %s14 = inlined_call_operand.vmem [shape: f32[1,4], index: 14, kind: input, shape index: {}]
  %s15 = inlined_call_operand.vmem [shape: f32[32,4], index: 15, kind: output, shape index: {0}]
  %s16 = inlined_call_operand.vmem [shape: f32[32,4], index: 16, kind: output, shape index: {1}]
  %s17 = inlined_call_operand.vmem [shape: f32[32,4], index: 17, kind: output, shape index: {2}]
  %18 = xla_tuple %s15, %s16, %s17
  %s19 = sld [smem:[#allocation0]]
  $region106: #{tpu_custom_call.1} parent=0
    _
  %s21 = ssub.s32 1, %s19
  %s22 = scalar_select 0, %s21, %s19
  $region1: #{tpu_custom_call.1} parent=0
    #allocation4 [shape = 'u8[4096]{0}', space=vmem, size = 0x1000, scoped, tag = 'input window, operand 3, single buffered']
    #allocation5 [shape = 's32[1]{0}', space=sflag, size = 0x4, scoped, tag = 'scoped memory for tpu_custom_call.1']
    #allocation6 [shape = 'u8[245760]{0}', space=vmem, size = 0x3c000, scoped, tag = 'input window, operand 5, single buffered']
    #allocation7 [shape = 's32[1]{0}', space=sflag, size = 0x4, scoped, tag = 'scoped memory for tpu_custom_call.1']
    #allocation8 [shape = 'u8[1536]{0}', space=vmem, size = 0x800, scoped, tag = 'input window, operand 6, single buffered']
    #allocation9 [shape = 'u8[1536]{0}', space=vmem, size = 0x800, scoped, tag = 'input window, operand 9, single buffered']
    #allocation10 [shape = 's32[1]{0}', space=sflag, size = 0x4, scoped, tag = 'scoped memory for tpu_custom_call.1']
    #allocation11 [shape = 'u8[1536]{0}', space=vmem, size = 0x800, scoped, tag = 'input window, operand 10, single buffered']
    %23 = vsyncpa [#allocation5], 0
    %24 = vsyncpa [#allocation7], 0
    %25 = vsyncpa [#allocation10], 0
    // Predicated region
    $region2: #{tpu_custom_call.1} parent=1 // pred_check
      _
    $region3: #{tpu_custom_call.1} parent=1 // pred_check_branch
      %27 = sbr.rel (0) target = $region5
    $region4: #{tpu_custom_call.1} parent=1 // pred_region
      _
    $region5: #{tpu_custom_call.1} parent=1 // pred_fallthru
      _
    // Predicated region
    $region6: #{tpu_custom_call.1} parent=1 // pred_check
      _
    $region7: #{tpu_custom_call.1} parent=1 // pred_check_branch
      %29 = sbr.rel (0) target = $region9
    $region8: #{tpu_custom_call.1} parent=1 // pred_region
      _
    $region9: #{tpu_custom_call.1} parent=1 // pred_fallthru
      _
    // Predicated region
    $region10: #{tpu_custom_call.1} parent=1 // pred_check
      _
    $region11: #{tpu_custom_call.1} parent=1 // pred_check_branch
      %31 = sbr.rel (0) target = $region13
    $region12: #{tpu_custom_call.1} parent=1 // pred_region
      _
    $region13: #{tpu_custom_call.1} parent=1 // pred_fallthru
      _
    // Predicated region
    $region14: #{tpu_custom_call.1} parent=1 // pred_check
      _
    $region15: #{tpu_custom_call.1} parent=1 // pred_check_branch
      %33 = sbr.rel (0) target = $region17
    $region16: #{tpu_custom_call.1} parent=1 // pred_region
      %s35 = ssub.s32 128, 128
      %36 = vsyncadd [#allocation5], %s35
      %s38 = sshll.u32 [#allocation4], 4
      %s39 = int_to_ptr.vmem [resolvable:$true] %s38
      %41 = dma.hbm_to_vmem [thread:$0]  %s3, 128, %s39, [#allocation5]
    $region17: #{tpu_custom_call.1} parent=1 // pred_fallthru
      _
    // Predicated region
    $region18: #{tpu_custom_call.1} parent=1 // pred_check
      _
    $region19: #{tpu_custom_call.1} parent=1 // pred_check_branch
      %43 = sbr.rel (0) target = $region21
    $region20: #{tpu_custom_call.1} parent=1 // pred_region
      _
    $region21: #{tpu_custom_call.1} parent=1 // pred_fallthru
      _
    // Predicated region
    $region22: #{tpu_custom_call.1} parent=1 // pred_check
      _
    $region23: #{tpu_custom_call.1} parent=1 // pred_check_branch
      %45 = sbr.rel (0) target = $region25
    $region24: #{tpu_custom_call.1} parent=1 // pred_region
      %s47 = ssub.s32 7680, 7680
      %48 = vsyncadd [#allocation7], %s47
      %s49 = sshll.u32 [#allocation6], 4
      %s50 = int_to_ptr.vmem [resolvable:$true] %s49
      %55 = dma.hbm_to_vmem [thread:$0]  %s5, 7680, %s50, [#allocation7], 128, 128, 8
    $region25: #{tpu_custom_call.1} parent=1 // pred_fallthru
      _
    // Predicated region
    $region26: #{tpu_custom_call.1} parent=1 // pred_check
      _
    $region27: #{tpu_custom_call.1} parent=1 // pred_check_branch
      %57 = sbr.rel (0) target = $region29
    $region28: #{tpu_custom_call.1} parent=1 // pred_region
      %s59 = ssub.s32 48, 48
      %60 = vsyncadd [#allocation7], %s59
      %s61 = sshll.u32 [#allocation8], 4
      %s62 = int_to_ptr.vmem [resolvable:$true] %s61
      %67 = dma.hbm_to_vmem [thread:$0]  %s6, 48, %s62, [#allocation7], 16, 16, 1
    $region29: #{tpu_custom_call.1} parent=1 // pred_fallthru
      _
    // Predicated region
    $region30: #{tpu_custom_call.1} parent=1 // pred_check
      _
    $region31: #{tpu_custom_call.1} parent=1 // pred_check_branch
      %69 = sbr.rel (0) target = $region33
    $region32: #{tpu_custom_call.1} parent=1 // pred_region
      _
    $region33: #{tpu_custom_call.1} parent=1 // pred_fallthru
      _
    // Predicated region
    $region34: #{tpu_custom_call.1} parent=1 // pred_check
      _
    $region35: #{tpu_custom_call.1} parent=1 // pred_check_branch
      %71 = sbr.rel (0) target = $region37
    $region36: #{tpu_custom_call.1} parent=1 // pred_region
      _
    $region37: #{tpu_custom_call.1} parent=1 // pred_fallthru
      _
    // Predicated region
    $region38: #{tpu_custom_call.1} parent=1 // pred_check
      _
    $region39: #{tpu_custom_call.1} parent=1 // pred_check_branch
      %73 = sbr.rel (0) target = $region41
    $region40: #{tpu_custom_call.1} parent=1 // pred_region
      %s75 = ssub.s32 48, 48
      %76 = vsyncadd [#allocation10], %s75
      %s77 = sshll.u32 [#allocation9], 4
      %s78 = int_to_ptr.vmem [resolvable:$true] %s77
      %83 = dma.hbm_to_vmem [thread:$0]  %s9, 48, %s78, [#allocation10], 16, 16, 1
    $region41: #{tpu_custom_call.1} parent=1 // pred_fallthru
      _
    // Predicated region
    $region42: #{tpu_custom_call.1} parent=1 // pred_check
      _
    $region43: #{tpu_custom_call.1} parent=1 // pred_check_branch
      %85 = sbr.rel (0) target = $region45
    $region44: #{tpu_custom_call.1} parent=1 // pred_region
      %s87 = ssub.s32 48, 48
      %88 = vsyncadd [#allocation10], %s87
      %s89 = sshll.u32 [#allocation11], 4
      %s90 = int_to_ptr.vmem [resolvable:$true] %s89
      %95 = dma.hbm_to_vmem [thread:$0]  %s10, 48, %s90, [#allocation10], 16, 16, 1
    $region45: #{tpu_custom_call.1} parent=1 // pred_fallthru
      _
    // Predicated region
    $region46: #{tpu_custom_call.1} parent=1 // pred_check
      _
    $region47: #{tpu_custom_call.1} parent=1 // pred_check_branch
      %97 = sbr.rel (0) target = $region49
    $region48: #{tpu_custom_call.1} parent=1 // pred_region
      _
    $region49: #{tpu_custom_call.1} parent=1 // pred_fallthru
      _
    // Predicated region
    $region50: #{tpu_custom_call.1} parent=1 // pred_check
      _
    $region51: #{tpu_custom_call.1} parent=1 // pred_check_branch
      %99 = sbr.rel (0) target = $region53
    $region52: #{tpu_custom_call.1} parent=1 // pred_region
      _
    $region53: #{tpu_custom_call.1} parent=1 // pred_fallthru
      _
    // Predicated region
    $region54: #{tpu_custom_call.1} parent=1 // pred_check
      _
    $region55: #{tpu_custom_call.1} parent=1 // pred_check_branch
      %101 = sbr.rel (0) target = $region57
    $region56: #{tpu_custom_call.1} parent=1 // pred_region
      _
    $region57: #{tpu_custom_call.1} parent=1 // pred_fallthru
      _
    // Predicated region
    $region58: #{tpu_custom_call.1} parent=1 // pred_check
      _
    $region59: #{tpu_custom_call.1} parent=1 // pred_check_branch
      %103 = sbr.rel (0) target = $region61
    $region60: #{tpu_custom_call.1} parent=1 // pred_region
      _
    $region61: #{tpu_custom_call.1} parent=1 // pred_fallthru
      _
    // Predicated region
    $region62: #{tpu_custom_call.1} parent=1 // pred_check
      _
    $region63: #{tpu_custom_call.1} parent=1 // pred_check_branch
      %105 = sbr.rel (0) target = $region65
    $region64: #{tpu_custom_call.1} parent=1 // pred_region
      %106 = dma.done [#allocation5], 128
    $region65: #{tpu_custom_call.1} parent=1 // pred_fallthru
      _
    // Predicated region
    $region66: #{tpu_custom_call.1} parent=1 // pred_check
      _
    $region67: #{tpu_custom_call.1} parent=1 // pred_check_branch
      %108 = sbr.rel (0) target = $region69
    $region68: #{tpu_custom_call.1} parent=1 // pred_region
      %109 = dma.done [#allocation7], 7680
    $region69: #{tpu_custom_call.1} parent=1 // pred_fallthru
      _
    // Predicated region
    $region70: #{tpu_custom_call.1} parent=1 // pred_check
      _
    $region71: #{tpu_custom_call.1} parent=1 // pred_check_branch
      %111 = sbr.rel (0) target = $region73
    $region72: #{tpu_custom_call.1} parent=1 // pred_region
      %112 = dma.done [#allocation7], 48
    $region73: #{tpu_custom_call.1} parent=1 // pred_fallthru
      _
    // Predicated region
    $region74: #{tpu_custom_call.1} parent=1 // pred_check
      _
    $region75: #{tpu_custom_call.1} parent=1 // pred_check_branch
      %114 = sbr.rel (0) target = $region77
    $region76: #{tpu_custom_call.1} parent=1 // pred_region
      %115 = dma.done [#allocation10], 48
    $region77: #{tpu_custom_call.1} parent=1 // pred_fallthru
      _
    // Predicated region
    $region78: #{tpu_custom_call.1} parent=1 // pred_check
      _
    $region79: #{tpu_custom_call.1} parent=1 // pred_check_branch
      %117 = sbr.rel (0) target = $region81
    $region80: #{tpu_custom_call.1} parent=1 // pred_region
      %118 = dma.done [#allocation10], 48
    $region81: #{tpu_custom_call.1} parent=1 // pred_fallthru
      _
    %v119 = vld [vmem:[%s0] sm:$0xff]
    %v120 = vld [vmem:[%s0 + $0x8] sm:$0xff]
    %v121 = vld [vmem:[%s0 + $0x10] sm:$0xff]
    %v122 = vld [vmem:[%s0 + $0x18] sm:$0xff]
    %v123 = vlaneseq
    %v124 = vshrl.u32 %v123, 7
    %v125 = vadd.s32 %v124, 8
    %v126 = vadd.s32 %v124, 16
    %v127 = vadd.s32 %v124, 24
    %vm128 = vcmp.lt.s32.totalorder %v124, 0
    %v129 = vsub.s32 0, %v124
    %v130 = vsel %vm128, %v129, %v124
    %v131 = vshrl.u32 %v130, 4
    %v132 = vand.u32 %v130, 15
    %v133 = vsub.s32 0, %v132
    %v134 = vsel %vm128, %v133, %v132
    %vm135 = vcmp.lt.s32.totalorder %v125, 0
    %v136 = vsub.s32 0, %v125
    %v137 = vsel %vm135, %v136, %v125
    %v138 = vshrl.u32 %v137, 4
    %v139 = vand.u32 %v137, 15
    %v140 = vsub.s32 0, %v139
    %v141 = vsel %vm135, %v140, %v139
    %vm142 = vcmp.lt.s32.totalorder %v126, 0
    %v143 = vsub.s32 0, %v126
    %v144 = vsel %vm142, %v143, %v126
    %v145 = vshrl.u32 %v144, 4
    %v146 = vand.u32 %v144, 15
    %v147 = vsub.s32 0, %v146
    %v148 = vsel %vm142, %v147, %v146
    %vm149 = vcmp.lt.s32.totalorder %v127, 0
    %v150 = vsub.s32 0, %v127
    %v151 = vsel %vm149, %v150, %v127
    %v152 = vshrl.u32 %v151, 4
    %v153 = vand.u32 %v151, 15
    %v154 = vsub.s32 0, %v153
    %v155 = vsel %vm149, %v154, %v153
    %vm156 = vcmp.ne.s32.totalorder %v134, 0
    %vm157 = vcmp.ne.s32.totalorder %v141, 0
    %vm158 = vcmp.ne.s32.totalorder %v148, 0
    %vm159 = vcmp.ne.s32.totalorder %v155, 0
    %vm160 = vcmp.lt.s32.totalorder %v134, 0
    %vm161 = vcmp.lt.s32.totalorder %v141, 0
    %vm162 = vcmp.lt.s32.totalorder %v148, 0
    %vm163 = vcmp.lt.s32.totalorder %v155, 0
    %vm164 = vmand %vm160, %vm156
    %vm165 = vmand %vm161, %vm157
    %vm166 = vmand %vm162, %vm158
    %vm167 = vmand %vm163, %vm159
    %v168 = vadd.s32 %v134, 16
    %v169 = vadd.s32 %v141, 16
    %v170 = vadd.s32 %v148, 16
    %v171 = vadd.s32 %v155, 16
    %v172 = vsel %vm164, %v168, %v134
    %v173 = vsel %vm165, %v169, %v141
    %v174 = vsel %vm166, %v170, %v148
    %v175 = vsel %vm167, %v171, %v155
    %v176 = vld [vmem:[%s1] sm:$0xff]
    %v177 = vld [vmem:[%s1 + $0x8] sm:$0xff]
    %v178 = vld [vmem:[%s1 + $0x10] sm:$0xff]
    %v179 = vld [vmem:[%s1 + $0x18] sm:$0xff]
    %v180 = vld [vmem:[#allocation4] sm:$0xff]
    %v181 = vld [vmem:[%s4] sm:$0x1]
    %v183 = vlaneseq
    %v184 = vshrl.u32 %v183, 7
    %v185 = vsub.s32 0, %v184
    %v186 = vrot.slane %v181, %v185
    %vm188 = vcmask 64512
    %v190 = vsel %vm188, %v176, 0
    %v193 = vsel %vm188, %v177, 0
    %v196 = vsel %vm188, %v178, 0
    %v199 = vsel %vm188, %v179, 0
    %201 = vmatprep.subr.mxu0 0.0
    %202 = vmatpush1.msra.mxu0 0.0
    %203 = vmatprep.subr.mxu0 0.0
    %204 = vmatpush1.msra.mxu0 0.0
    %205 = vmatprep.subr.mxu0 0.0
    %206 = vmatpush1.msra.mxu0 0.0
    %207 = vmatprep.subr.mxu0 0.0
    %208 = vmatpush1.msra.mxu0 0.0
    %209 = vmatprep.subr.mxu0 0.0
    %210 = vmatpush1.msra.mxu0 0.0
    %211 = vmatprep.subr.mxu0 0.0
    %212 = vmatpush1.msra.mxu0 0.0
    %213 = vmatprep.subr.mxu0 0.0
    %214 = vmatpush1.msra.mxu0 0.0
    %215 = vmatprep.subr.mxu0 0.0
    %216 = vmatpush1.msra.mxu0 0.0
    %217 = vmatprep.subr.mxu0 0.0
    %218 = vmatpush1.msra.mxu0 0.0
    %219 = vmatprep.subr.mxu0 0.0
    %220 = vmatpush1.msra.mxu0 0.0
    %221 = vmatprep.subr.mxu0 0.0
    %222 = vmatpush1.msra.mxu0 0.0
    %223 = vmatprep.subr.mxu0 0.0
    %224 = vmatpush1.msra.mxu0 0.0
    %225 = vmatprep.subr.mxu0 0.0
    %226 = vmatpush1.msra.mxu0 0.0
    %227 = vmatprep.subr.mxu0 0.0
    %228 = vmatpush1.msra.mxu0 0.0
    %229 = vmatprep.subr.mxu0 0.0
    %230 = vmatpush1.msra.mxu0 0.0
    %231 = vmatprep.subr.mxu0 0.0
    %232 = vmatpush1.msra.mxu0 %v180
    %233 = vmatprep.subr.mxu0 0.0
    %234 = vmatpush2.msra.mxu0 0.0
    %235 = vmatprep.subr.mxu0 0.0
    %236 = vmatpush2.msra.mxu0 0.0
    %237 = vmatprep.subr.mxu0 0.0
    %238 = vmatpush2.msra.mxu0 0.0
    %239 = vmatprep.subr.mxu0 0.0
    %240 = vmatpush2.msra.mxu0 0.0
    %241 = vmatprep.subr.mxu0 0.0
    %242 = vmatpush2.msra.mxu0 0.0
    %243 = vmatprep.subr.mxu0 0.0
    %244 = vmatpush2.msra.mxu0 0.0
    %245 = vmatprep.subr.mxu0 0.0
    %246 = vmatpush2.msra.mxu0 0.0
    %247 = vmatprep.subr.mxu0 0.0
    %248 = vmatpush2.msra.mxu0 0.0
    %249 = vmatprep.subr.mxu0 0.0
    %250 = vmatpush2.msra.mxu0 0.0
    %251 = vmatprep.subr.mxu0 0.0
    %252 = vmatpush2.msra.mxu0 0.0
    %253 = vmatprep.subr.mxu0 0.0
    %254 = vmatpush2.msra.mxu0 0.0
    %255 = vmatprep.subr.mxu0 0.0
    %256 = vmatpush2.msra.mxu0 0.0
    %257 = vmatprep.subr.mxu0 0.0
    %258 = vmatpush2.msra.mxu0 0.0
    %259 = vmatprep.subr.mxu0 0.0
    %260 = vmatpush2.msra.mxu0 0.0
    %261 = vmatprep.subr.mxu0 0.0
    %262 = vmatpush2.msra.mxu0 0.0
    %263 = vmatprep.subr.mxu0 0.0
    %264 = vmatpush2.msra.mxu0 0.0
    %265 = vmatprep.mubr.f32.mxu0 0.0
    %266 = vmatmul.mubr.f32.gmra.mxu0 %v190
    %v267 = vpop.f32.mrf.mxu0
    %v268 = vadd.f32 %v186, %v267
    %v269 = vpop.f32.mrf.mxu0
    %270 = vmatprep.mubr.f32.mxu0 0.0
    %271 = vmatmul.mubr.f32.gmra.mxu0 %v193
    %v272 = vpop.f32.mrf.mxu0
    %v273 = vadd.f32 %v186, %v272
    %v274 = vpop.f32.mrf.mxu0
    %275 = vmatprep.mubr.f32.mxu0 0.0
    %276 = vmatmul.mubr.f32.gmra.mxu0 %v196
    %v277 = vpop.f32.mrf.mxu0
    %v278 = vadd.f32 %v186, %v277
    %v279 = vpop.f32.mrf.mxu0
    %280 = vmatprep.mubr.f32.mxu0 0.0
    %281 = vmatmul.mubr.f32.gmra.mxu0 %v199
    %v282 = vpop.f32.mrf.mxu0
    %v283 = vadd.f32 %v186, %v282
    %v284 = vpop.f32.mrf.mxu0
    %285 = vdwg.mxu0
    %287 = vset.pattern.permute.xlu0 0
    %288 = vperm.xlu0 %287, %v119
    %v289 = vpop.permute.xlu0 %288
    %292 = vset.pattern.permute.xlu0 0
    %293 = vperm.xlu0 %292, %v120
    %v294 = vpop.permute.xlu0 %293
    %297 = vset.pattern.permute.xlu0 0
    %298 = vperm.xlu0 %297, %v121
    %v299 = vpop.permute.xlu0 %298
    %302 = vset.pattern.permute.xlu0 0
    %303 = vperm.xlu0 %302, %v122
    %v304 = vpop.permute.xlu0 %303
    %v306 = vmul.f32 %v268, %v289
    %v307 = vmul.f32 %v273, %v294
    %v308 = vmul.f32 %v278, %v299
    %v309 = vmul.f32 %v283, %v304
    %vm310 = vcmask 261120
    %311 = vst.msk [vmem:[#allocation2] sm:$0xff] %vm310, %v306
    %312 = vst.msk [vmem:[#allocation2 + $0x8] sm:$0xff] %vm310, %v307
    %313 = vst.msk [vmem:[#allocation2 + $0x10] sm:$0xff] %vm310, %v308
    %314 = vst.msk [vmem:[#allocation2 + $0x18] sm:$0xff] %vm310, %v309
    %315 = vst.msk [vmem:[#allocation3] sm:$0xff] %vm310, 0.0
    %316 = vst.msk [vmem:[#allocation3 + $0x8] sm:$0xff] %vm310, 0.0
    %317 = vst.msk [vmem:[#allocation3 + $0x10] sm:$0xff] %vm310, 0.0
    %318 = vst.msk [vmem:[#allocation3 + $0x18] sm:$0xff] %vm310, 0.0
    %v319 = vld [vmem:[#allocation2] sm:$0xff]
    %v320 = vld [vmem:[#allocation2 + $0x8] sm:$0xff]
    %v321 = vld [vmem:[#allocation2 + $0x10] sm:$0xff]
    %v322 = vld [vmem:[#allocation2 + $0x18] sm:$0xff]
    %v323 = vld [vmem:[#allocation8] sm:$0x1]
    %v325 = vlaneseq
    %v326 = vshrl.u32 %v325, 7
    %v327 = vsub.s32 0, %v326
    %v328 = vrot.slane %v323, %v327
    %v330 = vrot.slane %v319, 6
    %v331 = vrot.slane %v320, 6
    %v332 = vrot.slane %v321, 6
    %v333 = vrot.slane %v322, 6
    %vm334 = vcmp.lt.s32.totalorder %v124, 2
    %v335 = vsel %vm334, %v332, %v333
    %v336 = vsel %vm334, %v331, %v332
    %v337 = vsel %vm334, %v330, %v331
    %v338 = vsel %vm334, %v333, %v330
    %vm339 = vcmp.ge.s32.totalorder %v172, 2
    %vm340 = vcmp.ge.s32.totalorder %v173, 2
    %vm341 = vcmp.ge.s32.totalorder %v174, 2
    %vm342 = vcmp.ge.s32.totalorder %v175, 2
    %v343 = vsel %vm339, 1, 0
    %v344 = vsel %vm340, 1, 0
    %v345 = vsel %vm341, 1, 0
    %v346 = vsel %vm342, 1, 0
    %vm347 = vcmp.eq.s32.totalorder %v343, 1
    %vm348 = vcmp.eq.s32.totalorder %v344, 1
    %vm349 = vcmp.eq.s32.totalorder %v345, 1
    %vm350 = vcmp.eq.s32.totalorder %v346, 1
    %v351 = vsel %vm347, %v338, 0.0
    %v352 = vsel %vm348, %v337, 0.0
    %v353 = vsel %vm349, %v336, 0.0
    %v354 = vsel %vm350, %v335, 0.0
    %v355 = vld [vmem:[#allocation6] sm:$0xff]
    %v356 = vld [vmem:[#allocation6 + $0x8] sm:$0xff]
    %v357 = vld [vmem:[#allocation6 + $0x10] sm:$0xff]
    %v358 = vld [vmem:[#allocation6 + $0x18] sm:$0xff]
    %v360 = vsel %vm310, %v351, 0
    %v363 = vsel %vm310, %v352, 0
    %v366 = vsel %vm310, %v353, 0
    %v369 = vsel %vm310, %v354, 0
    %371 = vmatprep.subr.mxu0 0.0
    %372 = vmatpush1.msra.mxu0 0.0
    %373 = vmatprep.subr.mxu0 0.0
    %374 = vmatpush1.msra.mxu0 0.0
    %375 = vmatprep.subr.mxu0 0.0
    %376 = vmatpush1.msra.mxu0 0.0
    %377 = vmatprep.subr.mxu0 0.0
    %378 = vmatpush1.msra.mxu0 0.0
    %379 = vmatprep.subr.mxu0 0.0
    %380 = vmatpush1.msra.mxu0 0.0
    %381 = vmatprep.subr.mxu0 0.0
    %382 = vmatpush1.msra.mxu0 0.0
    %383 = vmatprep.subr.mxu0 0.0
    %384 = vmatpush1.msra.mxu0 0.0
    %385 = vmatprep.subr.mxu0 0.0
    %386 = vmatpush1.msra.mxu0 0.0
    %387 = vmatprep.subr.mxu0 0.0
    %388 = vmatpush1.msra.mxu0 0.0
    %389 = vmatprep.subr.mxu0 0.0
    %390 = vmatpush1.msra.mxu0 0.0
    %391 = vmatprep.subr.mxu0 0.0
    %392 = vmatpush1.msra.mxu0 0.0
    %393 = vmatprep.subr.mxu0 0.0
    %394 = vmatpush1.msra.mxu0 0.0
    %395 = vmatprep.subr.mxu0 0.0
    %396 = vmatpush1.msra.mxu0 %v358
    %397 = vmatprep.subr.mxu0 0.0
    %398 = vmatpush1.msra.mxu0 %v357
    %399 = vmatprep.subr.mxu0 0.0
    %400 = vmatpush1.msra.mxu0 %v356
    %401 = vmatprep.subr.mxu0 0.0
    %402 = vmatpush1.msra.mxu0 %v355
    %403 = vmatprep.subr.mxu0 0.0
    %404 = vmatpush2.msra.mxu0 0.0
    %405 = vmatprep.subr.mxu0 0.0
    %406 = vmatpush2.msra.mxu0 0.0
    %407 = vmatprep.subr.mxu0 0.0
    %408 = vmatpush2.msra.mxu0 0.0
    %409 = vmatprep.subr.mxu0 0.0
    %410 = vmatpush2.msra.mxu0 0.0
    %411 = vmatprep.subr.mxu0 0.0
    %412 = vmatpush2.msra.mxu0 0.0
    %413 = vmatprep.subr.mxu0 0.0
    %414 = vmatpush2.msra.mxu0 0.0
    %415 = vmatprep.subr.mxu0 0.0
    %416 = vmatpush2.msra.mxu0 0.0
    %417 = vmatprep.subr.mxu0 0.0
    %418 = vmatpush2.msra.mxu0 0.0
    %419 = vmatprep.subr.mxu0 0.0
    %420 = vmatpush2.msra.mxu0 0.0
    %421 = vmatprep.subr.mxu0 0.0
    %422 = vmatpush2.msra.mxu0 0.0
    %423 = vmatprep.subr.mxu0 0.0
    %424 = vmatpush2.msra.mxu0 0.0
    %425 = vmatprep.subr.mxu0 0.0
    %426 = vmatpush2.msra.mxu0 0.0
    %427 = vmatprep.subr.mxu0 0.0
    %428 = vmatpush2.msra.mxu0 0.0
    %429 = vmatprep.subr.mxu0 0.0
    %430 = vmatpush2.msra.mxu0 0.0
    %431 = vmatprep.subr.mxu0 0.0
    %432 = vmatpush2.msra.mxu0 0.0
    %433 = vmatprep.subr.mxu0 0.0
    %434 = vmatpush2.msra.mxu0 0.0
    %435 = vmatprep.mubr.f32.mxu0 0.0
    %436 = vmatmul.mubr.f32.gmra.mxu0 %v360
    %v437 = vpop.f32.mrf.mxu0
    %v438 = vadd.f32 0.0, %v437
    %v439 = vpop.f32.mrf.mxu0
    %440 = vmatprep.mubr.f32.mxu0 0.0
    %441 = vmatmul.mubr.f32.gmra.mxu0 %v363
    %v442 = vpop.f32.mrf.mxu0
    %v443 = vadd.f32 0.0, %v442
    %v444 = vpop.f32.mrf.mxu0
    %445 = vmatprep.mubr.f32.mxu0 0.0
    %446 = vmatmul.mubr.f32.gmra.mxu0 %v366
    %v447 = vpop.f32.mrf.mxu0
    %v448 = vadd.f32 0.0, %v447
    %v449 = vpop.f32.mrf.mxu0
    %450 = vmatprep.mubr.f32.mxu0 0.0
    %451 = vmatmul.mubr.f32.gmra.mxu0 %v369
    %v452 = vpop.f32.mrf.mxu0
    %v453 = vadd.f32 0.0, %v452
    %v454 = vpop.f32.mrf.mxu0
    %455 = vdwg.mxu0
    %v456 = vadd.f32 %v328, %v438
    %v457 = vadd.f32 %v328, %v443
    %v458 = vadd.f32 %v328, %v448
    %v459 = vadd.f32 %v328, %v453
    %v460 = vrot.slane %v319, 7
    %v461 = vrot.slane %v320, 7
    %v462 = vrot.slane %v321, 7
    %v463 = vrot.slane %v322, 7
    %vm464 = vcmp.lt.s32.totalorder %v124, 1
    %v465 = vsel %vm464, %v462, %v463
    %v466 = vsel %vm464, %v461, %v462
    %v467 = vsel %vm464, %v460, %v461
    %v468 = vsel %vm464, %v463, %v460
    %vm469 = vcmp.ge.s32.totalorder %v172, 1
    %vm470 = vcmp.ge.s32.totalorder %v173, 1
    %vm471 = vcmp.ge.s32.totalorder %v174, 1
    %vm472 = vcmp.ge.s32.totalorder %v175, 1
    %v473 = vsel %vm469, 1, 0
    %v474 = vsel %vm470, 1, 0
    %v475 = vsel %vm471, 1, 0
    %v476 = vsel %vm472, 1, 0
    %vm477 = vcmp.eq.s32.totalorder %v473, 1
    %vm478 = vcmp.eq.s32.totalorder %v474, 1
    %vm479 = vcmp.eq.s32.totalorder %v475, 1
    %vm480 = vcmp.eq.s32.totalorder %v476, 1
    %v481 = vsel %vm477, %v468, 0.0
    %v482 = vsel %vm478, %v467, 0.0
    %v483 = vsel %vm479, %v466, 0.0
    %v484 = vsel %vm480, %v465, 0.0
    %s485 = scalar_lea.vmem [#allocation6], 32
    %v486 = vld [vmem:[%s485] sm:$0xff]
    %v487 = vld [vmem:[%s485 + $0x8] sm:$0xff]
    %v488 = vld [vmem:[%s485 + $0x10] sm:$0xff]
    %v489 = vld [vmem:[%s485 + $0x18] sm:$0xff]
    %v491 = vsel %vm310, %v481, 0
    %v494 = vsel %vm310, %v482, 0
    %v497 = vsel %vm310, %v483, 0
    %v500 = vsel %vm310, %v484, 0
    %502 = vmatprep.subr.mxu0 0.0
    %503 = vmatpush1.msra.mxu0 0.0
    %504 = vmatprep.subr.mxu0 0.0
    %505 = vmatpush1.msra.mxu0 0.0
    %506 = vmatprep.subr.mxu0 0.0
    %507 = vmatpush1.msra.mxu0 0.0
    %508 = vmatprep.subr.mxu0 0.0
    %509 = vmatpush1.msra.mxu0 0.0
    %510 = vmatprep.subr.mxu0 0.0
    %511 = vmatpush1.msra.mxu0 0.0
    %512 = vmatprep.subr.mxu0 0.0
    %513 = vmatpush1.msra.mxu0 0.0
    %514 = vmatprep.subr.mxu0 0.0
    %515 = vmatpush1.msra.mxu0 0.0
    %516 = vmatprep.subr.mxu0 0.0
    %517 = vmatpush1.msra.mxu0 0.0
    %518 = vmatprep.subr.mxu0 0.0
    %519 = vmatpush1.msra.mxu0 0.0
    %520 = vmatprep.subr.mxu0 0.0
    %521 = vmatpush1.msra.mxu0 0.0
    %522 = vmatprep.subr.mxu0 0.0
    %523 = vmatpush1.msra.mxu0 0.0
    %524 = vmatprep.subr.mxu0 0.0
    %525 = vmatpush1.msra.mxu0 0.0
    %526 = vmatprep.subr.mxu0 0.0
    %527 = vmatpush1.msra.mxu0 %v489
    %528 = vmatprep.subr.mxu0 0.0
    %529 = vmatpush1.msra.mxu0 %v488
    %530 = vmatprep.subr.mxu0 0.0
    %531 = vmatpush1.msra.mxu0 %v487
    %532 = vmatprep.subr.mxu0 0.0
    %533 = vmatpush1.msra.mxu0 %v486
    %534 = vmatprep.subr.mxu0 0.0
    %535 = vmatpush2.msra.mxu0 0.0
    %536 = vmatprep.subr.mxu0 0.0
    %537 = vmatpush2.msra.mxu0 0.0
    %538 = vmatprep.subr.mxu0 0.0
    %539 = vmatpush2.msra.mxu0 0.0
    %540 = vmatprep.subr.mxu0 0.0
    %541 = vmatpush2.msra.mxu0 0.0
    %542 = vmatprep.subr.mxu0 0.0
    %543 = vmatpush2.msra.mxu0 0.0
    %544 = vmatprep.subr.mxu0 0.0
    %545 = vmatpush2.msra.mxu0 0.0
    %546 = vmatprep.subr.mxu0 0.0
    %547 = vmatpush2.msra.mxu0 0.0
    %548 = vmatprep.subr.mxu0 0.0
    %549 = vmatpush2.msra.mxu0 0.0
    %550 = vmatprep.subr.mxu0 0.0
    %551 = vmatpush2.msra.mxu0 0.0
    %552 = vmatprep.subr.mxu0 0.0
    %553 = vmatpush2.msra.mxu0 0.0
    %554 = vmatprep.subr.mxu0 0.0
    %555 = vmatpush2.msra.mxu0 0.0
    %556 = vmatprep.subr.mxu0 0.0
    %557 = vmatpush2.msra.mxu0 0.0
    %558 = vmatprep.subr.mxu0 0.0
    %559 = vmatpush2.msra.mxu0 0.0
    %560 = vmatprep.subr.mxu0 0.0
    %561 = vmatpush2.msra.mxu0 0.0
    %562 = vmatprep.subr.mxu0 0.0
    %563 = vmatpush2.msra.mxu0 0.0
    %564 = vmatprep.subr.mxu0 0.0
    %565 = vmatpush2.msra.mxu0 0.0
    %566 = vmatprep.mubr.f32.mxu0 0.0
    %567 = vmatmul.mubr.f32.gmra.mxu0 %v491
    %v568 = vpop.f32.mrf.mxu0
    %v569 = vadd.f32 0.0, %v568
    %v570 = vpop.f32.mrf.mxu0
    %571 = vmatprep.mubr.f32.mxu0 0.0
    %572 = vmatmul.mubr.f32.gmra.mxu0 %v494
    %v573 = vpop.f32.mrf.mxu0
    %v574 = vadd.f32 0.0, %v573
    %v575 = vpop.f32.mrf.mxu0
    %576 = vmatprep.mubr.f32.mxu0 0.0
    %577 = vmatmul.mubr.f32.gmra.mxu0 %v497
    %v578 = vpop.f32.mrf.mxu0
    %v579 = vadd.f32 0.0, %v578
    %v580 = vpop.f32.mrf.mxu0
    %581 = vmatprep.mubr.f32.mxu0 0.0
    %582 = vmatmul.mubr.f32.gmra.mxu0 %v500
    %v583 = vpop.f32.mrf.mxu0
    %v584 = vadd.f32 0.0, %v583
    %v585 = vpop.f32.mrf.mxu0
    %586 = vdwg.mxu0
    %v587 = vadd.f32 %v456, %v569
    %v588 = vadd.f32 %v457, %v574
    %v589 = vadd.f32 %v458, %v579
    %v590 = vadd.f32 %v459, %v584
    %s591 = scalar_lea.vmem [#allocation6], 64
    %v592 = vld [vmem:[%s591] sm:$0xff]
    %v593 = vld [vmem:[%s591 + $0x8] sm:$0xff]
    %v594 = vld [vmem:[%s591 + $0x10] sm:$0xff]
    %v595 = vld [vmem:[%s591 + $0x18] sm:$0xff]
    %v597 = vsel %vm310, %v319, 0
    %v600 = vsel %vm310, %v320, 0
    %v603 = vsel %vm310, %v321, 0
    %v606 = vsel %vm310, %v322, 0
    %608 = vmatprep.subr.mxu0 0.0
    %609 = vmatpush1.msra.mxu0 0.0
    %610 = vmatprep.subr.mxu0 0.0
    %611 = vmatpush1.msra.mxu0 0.0
    %612 = vmatprep.subr.mxu0 0.0
    %613 = vmatpush1.msra.mxu0 0.0
    %614 = vmatprep.subr.mxu0 0.0
    %615 = vmatpush1.msra.mxu0 0.0
    %616 = vmatprep.subr.mxu0 0.0
    %617 = vmatpush1.msra.mxu0 0.0
    %618 = vmatprep.subr.mxu0 0.0
    %619 = vmatpush1.msra.mxu0 0.0
    %620 = vmatprep.subr.mxu0 0.0
    %621 = vmatpush1.msra.mxu0 0.0
    %622 = vmatprep.subr.mxu0 0.0
    %623 = vmatpush1.msra.mxu0 0.0
    %624 = vmatprep.subr.mxu0 0.0
    %625 = vmatpush1.msra.mxu0 0.0
    %626 = vmatprep.subr.mxu0 0.0
    %627 = vmatpush1.msra.mxu0 0.0
    %628 = vmatprep.subr.mxu0 0.0
    %629 = vmatpush1.msra.mxu0 0.0
    %630 = vmatprep.subr.mxu0 0.0
    %631 = vmatpush1.msra.mxu0 0.0
    %632 = vmatprep.subr.mxu0 0.0
    %633 = vmatpush1.msra.mxu0 %v595
    %634 = vmatprep.subr.mxu0 0.0
    %635 = vmatpush1.msra.mxu0 %v594
    %636 = vmatprep.subr.mxu0 0.0
    %637 = vmatpush1.msra.mxu0 %v593
    %638 = vmatprep.subr.mxu0 0.0
    %639 = vmatpush1.msra.mxu0 %v592
    %640 = vmatprep.subr.mxu0 0.0
    %641 = vmatpush2.msra.mxu0 0.0
    %642 = vmatprep.subr.mxu0 0.0
    %643 = vmatpush2.msra.mxu0 0.0
    %644 = vmatprep.subr.mxu0 0.0
    %645 = vmatpush2.msra.mxu0 0.0
    %646 = vmatprep.subr.mxu0 0.0
    %647 = vmatpush2.msra.mxu0 0.0
    %648 = vmatprep.subr.mxu0 0.0
    %649 = vmatpush2.msra.mxu0 0.0
    %650 = vmatprep.subr.mxu0 0.0
    %651 = vmatpush2.msra.mxu0 0.0
    %652 = vmatprep.subr.mxu0 0.0
    %653 = vmatpush2.msra.mxu0 0.0
    %654 = vmatprep.subr.mxu0 0.0
    %655 = vmatpush2.msra.mxu0 0.0
    %656 = vmatprep.subr.mxu0 0.0
    %657 = vmatpush2.msra.mxu0 0.0
    %658 = vmatprep.subr.mxu0 0.0
    %659 = vmatpush2.msra.mxu0 0.0
    %660 = vmatprep.subr.mxu0 0.0
    %661 = vmatpush2.msra.mxu0 0.0
    %662 = vmatprep.subr.mxu0 0.0
    %663 = vmatpush2.msra.mxu0 0.0
    %664 = vmatprep.subr.mxu0 0.0
    %665 = vmatpush2.msra.mxu0 0.0
    %666 = vmatprep.subr.mxu0 0.0
    %667 = vmatpush2.msra.mxu0 0.0
    %668 = vmatprep.subr.mxu0 0.0
    %669 = vmatpush2.msra.mxu0 0.0
    %670 = vmatprep.subr.mxu0 0.0
    %671 = vmatpush2.msra.mxu0 0.0
    %672 = vmatprep.mubr.f32.mxu0 0.0
    %673 = vmatmul.mubr.f32.gmra.mxu0 %v597
    %v674 = vpop.f32.mrf.mxu0
    %v675 = vadd.f32 0.0, %v674
    %v676 = vpop.f32.mrf.mxu0
    %677 = vmatprep.mubr.f32.mxu0 0.0
    %678 = vmatmul.mubr.f32.gmra.mxu0 %v600
    %v679 = vpop.f32.mrf.mxu0
    %v680 = vadd.f32 0.0, %v679
    %v681 = vpop.f32.mrf.mxu0
    %682 = vmatprep.mubr.f32.mxu0 0.0
    %683 = vmatmul.mubr.f32.gmra.mxu0 %v603
    %v684 = vpop.f32.mrf.mxu0
    %v685 = vadd.f32 0.0, %v684
    %v686 = vpop.f32.mrf.mxu0
    %687 = vmatprep.mubr.f32.mxu0 0.0
    %688 = vmatmul.mubr.f32.gmra.mxu0 %v606
    %v689 = vpop.f32.mrf.mxu0
    %v690 = vadd.f32 0.0, %v689
    %v691 = vpop.f32.mrf.mxu0
    %692 = vdwg.mxu0
    %v693 = vadd.f32 %v587, %v675
    %v694 = vadd.f32 %v588, %v680
    %v695 = vadd.f32 %v589, %v685
    %v696 = vadd.f32 %v590, %v690
    %v697 = vrot.slane %v319, 1
    %v698 = vrot.slane %v320, 1
    %v699 = vrot.slane %v321, 1
    %v700 = vrot.slane %v322, 1
    %vm701 = vcmp.lt.s32.totalorder %v124, 7
    %v702 = vsel %vm701, %v699, %v700
    %v703 = vsel %vm701, %v698, %v699
    %v704 = vsel %vm701, %v697, %v698
    %v705 = vsel %vm701, %v700, %v697
    %vm706 = vcmp.lt.s32.totalorder %v172, 15
    %vm707 = vcmp.lt.s32.totalorder %v173, 15
    %vm708 = vcmp.lt.s32.totalorder %v174, 15
    %vm709 = vcmp.lt.s32.totalorder %v175, 15
    %v710 = vsel %vm706, 1, 0
    %v711 = vsel %vm707, 1, 0
    %v712 = vsel %vm708, 1, 0
    %v713 = vsel %vm709, 1, 0
    %vm714 = vcmp.eq.s32.totalorder %v710, 1
    %vm715 = vcmp.eq.s32.totalorder %v711, 1
    %vm716 = vcmp.eq.s32.totalorder %v712, 1
    %vm717 = vcmp.eq.s32.totalorder %v713, 1
    %v718 = vsel %vm714, %v704, 0.0
    %v719 = vsel %vm715, %v703, 0.0
    %v720 = vsel %vm716, %v702, 0.0
    %v721 = vsel %vm717, %v705, 0.0
    %s722 = scalar_lea.vmem [#allocation6], 96
    %v723 = vld [vmem:[%s722] sm:$0xff]
    %v724 = vld [vmem:[%s722 + $0x8] sm:$0xff]
    %v725 = vld [vmem:[%s722 + $0x10] sm:$0xff]
    %v726 = vld [vmem:[%s722 + $0x18] sm:$0xff]
    %v728 = vsel %vm310, %v718, 0
    %v731 = vsel %vm310, %v719, 0
    %v734 = vsel %vm310, %v720, 0
    %v737 = vsel %vm310, %v721, 0
    %739 = vmatprep.subr.mxu0 0.0
    %740 = vmatpush1.msra.mxu0 0.0
    %741 = vmatprep.subr.mxu0 0.0
    %742 = vmatpush1.msra.mxu0 0.0
    %743 = vmatprep.subr.mxu0 0.0
    %744 = vmatpush1.msra.mxu0 0.0
    %745 = vmatprep.subr.mxu0 0.0
    %746 = vmatpush1.msra.mxu0 0.0
    %747 = vmatprep.subr.mxu0 0.0
    %748 = vmatpush1.msra.mxu0 0.0
    %749 = vmatprep.subr.mxu0 0.0
    %750 = vmatpush1.msra.mxu0 0.0
    %751 = vmatprep.subr.mxu0 0.0
    %752 = vmatpush1.msra.mxu0 0.0
    %753 = vmatprep.subr.mxu0 0.0
    %754 = vmatpush1.msra.mxu0 0.0
    %755 = vmatprep.subr.mxu0 0.0
    %756 = vmatpush1.msra.mxu0 0.0
    %757 = vmatprep.subr.mxu0 0.0
    %758 = vmatpush1.msra.mxu0 0.0
    %759 = vmatprep.subr.mxu0 0.0
    %760 = vmatpush1.msra.mxu0 0.0
    %761 = vmatprep.subr.mxu0 0.0
    %762 = vmatpush1.msra.mxu0 0.0
    %763 = vmatprep.subr.mxu0 0.0
    %764 = vmatpush1.msra.mxu0 %v726
    %765 = vmatprep.subr.mxu0 0.0
    %766 = vmatpush1.msra.mxu0 %v725
    %767 = vmatprep.subr.mxu0 0.0
    %768 = vmatpush1.msra.mxu0 %v724
    %769 = vmatprep.subr.mxu0 0.0
    %770 = vmatpush1.msra.mxu0 %v723
    %771 = vmatprep.subr.mxu0 0.0
    %772 = vmatpush2.msra.mxu0 0.0
    %773 = vmatprep.subr.mxu0 0.0
    %774 = vmatpush2.msra.mxu0 0.0
    %775 = vmatprep.subr.mxu0 0.0
    %776 = vmatpush2.msra.mxu0 0.0
    %777 = vmatprep.subr.mxu0 0.0
    %778 = vmatpush2.msra.mxu0 0.0
    %779 = vmatprep.subr.mxu0 0.0
    %780 = vmatpush2.msra.mxu0 0.0
    %781 = vmatprep.subr.mxu0 0.0
    %782 = vmatpush2.msra.mxu0 0.0
    %783 = vmatprep.subr.mxu0 0.0
    %784 = vmatpush2.msra.mxu0 0.0
    %785 = vmatprep.subr.mxu0 0.0
    %786 = vmatpush2.msra.mxu0 0.0
    %787 = vmatprep.subr.mxu0 0.0
    %788 = vmatpush2.msra.mxu0 0.0
    %789 = vmatprep.subr.mxu0 0.0
    %790 = vmatpush2.msra.mxu0 0.0
    %791 = vmatprep.subr.mxu0 0.0
    %792 = vmatpush2.msra.mxu0 0.0
    %793 = vmatprep.subr.mxu0 0.0
    %794 = vmatpush2.msra.mxu0 0.0
    %795 = vmatprep.subr.mxu0 0.0
    %796 = vmatpush2.msra.mxu0 0.0
    %797 = vmatprep.subr.mxu0 0.0
    %798 = vmatpush2.msra.mxu0 0.0
    %799 = vmatprep.subr.mxu0 0.0
    %800 = vmatpush2.msra.mxu0 0.0
    %801 = vmatprep.subr.mxu0 0.0
    %802 = vmatpush2.msra.mxu0 0.0
    %803 = vmatprep.mubr.f32.mxu0 0.0
    %804 = vmatmul.mubr.f32.gmra.mxu0 %v728
    %v805 = vpop.f32.mrf.mxu0
    %v806 = vadd.f32 0.0, %v805
    %v807 = vpop.f32.mrf.mxu0
    %808 = vmatprep.mubr.f32.mxu0 0.0
    %809 = vmatmul.mubr.f32.gmra.mxu0 %v731
    %v810 = vpop.f32.mrf.mxu0
    %v811 = vadd.f32 0.0, %v810
    %v812 = vpop.f32.mrf.mxu0
    %813 = vmatprep.mubr.f32.mxu0 0.0
    %814 = vmatmul.mubr.f32.gmra.mxu0 %v734
    %v815 = vpop.f32.mrf.mxu0
    %v816 = vadd.f32 0.0, %v815
    %v817 = vpop.f32.mrf.mxu0
    %818 = vmatprep.mubr.f32.mxu0 0.0
    %819 = vmatmul.mubr.f32.gmra.mxu0 %v737
    %v820 = vpop.f32.mrf.mxu0
    %v821 = vadd.f32 0.0, %v820
    %v822 = vpop.f32.mrf.mxu0
    %823 = vdwg.mxu0
    %v824 = vadd.f32 %v693, %v806
    %v825 = vadd.f32 %v694, %v811
    %v826 = vadd.f32 %v695, %v816
    %v827 = vadd.f32 %v696, %v821
    %v828 = vrot.slane %v319, 2
    %v829 = vrot.slane %v320, 2
    %v830 = vrot.slane %v321, 2
    %v831 = vrot.slane %v322, 2
    %vm832 = vcmp.lt.s32.totalorder %v124, 6
    %v833 = vsel %vm832, %v830, %v831
    %v834 = vsel %vm832, %v829, %v830
    %v835 = vsel %vm832, %v828, %v829
    %v836 = vsel %vm832, %v831, %v828
    %vm837 = vcmp.lt.s32.totalorder %v172, 14
    %vm838 = vcmp.lt.s32.totalorder %v173, 14
    %vm839 = vcmp.lt.s32.totalorder %v174, 14
    %vm840 = vcmp.lt.s32.totalorder %v175, 14
    %v841 = vsel %vm837, 1, 0
    %v842 = vsel %vm838, 1, 0
    %v843 = vsel %vm839, 1, 0
    %v844 = vsel %vm840, 1, 0
    %vm845 = vcmp.eq.s32.totalorder %v841, 1
    %vm846 = vcmp.eq.s32.totalorder %v842, 1
    %vm847 = vcmp.eq.s32.totalorder %v843, 1
    %vm848 = vcmp.eq.s32.totalorder %v844, 1
    %v849 = vsel %vm845, %v835, 0.0
    %v850 = vsel %vm846, %v834, 0.0
    %v851 = vsel %vm847, %v833, 0.0
    %v852 = vsel %vm848, %v836, 0.0
    %s853 = scalar_lea.vmem [#allocation6], 128
    %v854 = vld [vmem:[%s853] sm:$0xff]
    %v855 = vld [vmem:[%s853 + $0x8] sm:$0xff]
    %v856 = vld [vmem:[%s853 + $0x10] sm:$0xff]
    %v857 = vld [vmem:[%s853 + $0x18] sm:$0xff]
    %v859 = vsel %vm310, %v849, 0
    %v862 = vsel %vm310, %v850, 0
    %v865 = vsel %vm310, %v851, 0
    %v868 = vsel %vm310, %v852, 0
    %870 = vmatprep.subr.mxu0 0.0
    %871 = vmatpush1.msra.mxu0 0.0
    %872 = vmatprep.subr.mxu0 0.0
    %873 = vmatpush1.msra.mxu0 0.0
    %874 = vmatprep.subr.mxu0 0.0
    %875 = vmatpush1.msra.mxu0 0.0
    %876 = vmatprep.subr.mxu0 0.0
    %877 = vmatpush1.msra.mxu0 0.0
    %878 = vmatprep.subr.mxu0 0.0
    %879 = vmatpush1.msra.mxu0 0.0
    %880 = vmatprep.subr.mxu0 0.0
    %881 = vmatpush1.msra.mxu0 0.0
    %882 = vmatprep.subr.mxu0 0.0
    %883 = vmatpush1.msra.mxu0 0.0
    %884 = vmatprep.subr.mxu0 0.0
    %885 = vmatpush1.msra.mxu0 0.0
    %886 = vmatprep.subr.mxu0 0.0
    %887 = vmatpush1.msra.mxu0 0.0
    %888 = vmatprep.subr.mxu0 0.0
    %889 = vmatpush1.msra.mxu0 0.0
    %890 = vmatprep.subr.mxu0 0.0
    %891 = vmatpush1.msra.mxu0 0.0
    %892 = vmatprep.subr.mxu0 0.0
    %893 = vmatpush1.msra.mxu0 0.0
    %894 = vmatprep.subr.mxu0 0.0
    %895 = vmatpush1.msra.mxu0 %v857
    %896 = vmatprep.subr.mxu0 0.0
    %897 = vmatpush1.msra.mxu0 %v856
    %898 = vmatprep.subr.mxu0 0.0
    %899 = vmatpush1.msra.mxu0 %v855
    %900 = vmatprep.subr.mxu0 0.0
    %901 = vmatpush1.msra.mxu0 %v854
    %902 = vmatprep.subr.mxu0 0.0
    %903 = vmatpush2.msra.mxu0 0.0
    %904 = vmatprep.subr.mxu0 0.0
    %905 = vmatpush2.msra.mxu0 0.0
    %906 = vmatprep.subr.mxu0 0.0
    %907 = vmatpush2.msra.mxu0 0.0
    %908 = vmatprep.subr.mxu0 0.0
    %909 = vmatpush2.msra.mxu0 0.0
    %910 = vmatprep.subr.mxu0 0.0
    %911 = vmatpush2.msra.mxu0 0.0
    %912 = vmatprep.subr.mxu0 0.0
    %913 = vmatpush2.msra.mxu0 0.0
    %914 = vmatprep.subr.mxu0 0.0
    %915 = vmatpush2.msra.mxu0 0.0
    %916 = vmatprep.subr.mxu0 0.0
    %917 = vmatpush2.msra.mxu0 0.0
    %918 = vmatprep.subr.mxu0 0.0
    %919 = vmatpush2.msra.mxu0 0.0
    %920 = vmatprep.subr.mxu0 0.0
    %921 = vmatpush2.msra.mxu0 0.0
    %922 = vmatprep.subr.mxu0 0.0
    %923 = vmatpush2.msra.mxu0 0.0
    %924 = vmatprep.subr.mxu0 0.0
    %925 = vmatpush2.msra.mxu0 0.0
    %926 = vmatprep.subr.mxu0 0.0
    %927 = vmatpush2.msra.mxu0 0.0
    %928 = vmatprep.subr.mxu0 0.0
    %929 = vmatpush2.msra.mxu0 0.0
    %930 = vmatprep.subr.mxu0 0.0
    %931 = vmatpush2.msra.mxu0 0.0
    %932 = vmatprep.subr.mxu0 0.0
    %933 = vmatpush2.msra.mxu0 0.0
    %934 = vmatprep.mubr.f32.mxu0 0.0
    %935 = vmatmul.mubr.f32.gmra.mxu0 %v859
    %v936 = vpop.f32.mrf.mxu0
    %v937 = vadd.f32 0.0, %v936
    %v938 = vpop.f32.mrf.mxu0
    %939 = vmatprep.mubr.f32.mxu0 0.0
    %940 = vmatmul.mubr.f32.gmra.mxu0 %v862
    %v941 = vpop.f32.mrf.mxu0
    %v942 = vadd.f32 0.0, %v941
    %v943 = vpop.f32.mrf.mxu0
    %944 = vmatprep.mubr.f32.mxu0 0.0
    %945 = vmatmul.mubr.f32.gmra.mxu0 %v865
    %v946 = vpop.f32.mrf.mxu0
    %v947 = vadd.f32 0.0, %v946
    %v948 = vpop.f32.mrf.mxu0
    %949 = vmatprep.mubr.f32.mxu0 0.0
    %950 = vmatmul.mubr.f32.gmra.mxu0 %v868
    %v951 = vpop.f32.mrf.mxu0
    %v952 = vadd.f32 0.0, %v951
    %v953 = vpop.f32.mrf.mxu0
    %954 = vdwg.mxu0
    %v955 = vadd.f32 %v824, %v937
    %v956 = vadd.f32 %v825, %v942
    %v957 = vadd.f32 %v826, %v947
    %v958 = vadd.f32 %v827, %v952
    %v959 = vtanh.pop %v955
    %v960 = vtanh.pop %v956
    %v961 = vtanh.pop %v957
    %v962 = vtanh.pop %v958
    %v963 = vxor.u32 %v955, 2147483648
    %v964 = vxor.u32 %v956, 2147483648
    %v965 = vxor.u32 %v957, 2147483648
    %v966 = vxor.u32 %v958, 2147483648
    %v967 = vmul.f32 %v963, 1.442695
    %v968 = vpow.pop %v967
    %v969 = vmul.f32 %v964, 1.442695
    %v970 = vpow.pop %v969
    %v971 = vmul.f32 %v965, 1.442695
    %v972 = vpow.pop %v971
    %v973 = vmul.f32 %v966, 1.442695
    %v974 = vpow.pop %v973
    %v975 = vadd.f32 %v968, 1.0
    %v976 = vadd.f32 %v970, 1.0
    %v977 = vadd.f32 %v972, 1.0
    %v978 = vadd.f32 %v974, 1.0
    %v979 = vrcp.pop %v975
    %v980 = vmul.f32 1.0, %v979
    %v981 = vrcp.pop %v976
    %v982 = vmul.f32 1.0, %v981
    %v983 = vrcp.pop %v977
    %v984 = vmul.f32 1.0, %v983
    %v985 = vrcp.pop %v978
    %v986 = vmul.f32 1.0, %v985
    %991 = vrot.lane.b32.xlu0 %v980, 96
    %v992 = vpop.permute.xlu0 %991
    %993 = vrot.lane.b32.xlu0 %v982, 96
    %v994 = vpop.permute.xlu0 %993
    %995 = vrot.lane.b32.xlu0 %v984, 96
    %v996 = vpop.permute.xlu0 %995
    %997 = vrot.lane.b32.xlu0 %v986, 96
    %v998 = vpop.permute.xlu0 %997
    %v1003 = vmul.f32 %v959, %v992
    %v1004 = vmul.f32 %v960, %v994
    %v1005 = vmul.f32 %v961, %v996
    %v1006 = vmul.f32 %v962, %v998
    %v1007 = vld [vmem:[%s7] sm:$0xff]
    %v1008 = vld [vmem:[%s7 + $0x8] sm:$0xff]
    %v1009 = vld [vmem:[%s7 + $0x10] sm:$0xff]
    %v1010 = vld [vmem:[%s7 + $0x18] sm:$0xff]
    %v1012 = vsel %vm310, %v1003, 0
    %v1015 = vsel %vm310, %v1004, 0
    %v1018 = vsel %vm310, %v1005, 0
    %v1021 = vsel %vm310, %v1006, 0
    %1023 = vmatprep.subr.mxu0 0.0
    %1024 = vmatpush1.msra.mxu0 0.0
    %1025 = vmatprep.subr.mxu0 0.0
    %1026 = vmatpush1.msra.mxu0 0.0
    %1027 = vmatprep.subr.mxu0 0.0
    %1028 = vmatpush1.msra.mxu0 0.0
    %1029 = vmatprep.subr.mxu0 0.0
    %1030 = vmatpush1.msra.mxu0 0.0
    %1031 = vmatprep.subr.mxu0 0.0
    %1032 = vmatpush1.msra.mxu0 0.0
    %1033 = vmatprep.subr.mxu0 0.0
    %1034 = vmatpush1.msra.mxu0 0.0
    %1035 = vmatprep.subr.mxu0 0.0
    %1036 = vmatpush1.msra.mxu0 0.0
    %1037 = vmatprep.subr.mxu0 0.0
    %1038 = vmatpush1.msra.mxu0 0.0
    %1039 = vmatprep.subr.mxu0 0.0
    %1040 = vmatpush1.msra.mxu0 0.0
    %1041 = vmatprep.subr.mxu0 0.0
    %1042 = vmatpush1.msra.mxu0 0.0
    %1043 = vmatprep.subr.mxu0 0.0
    %1044 = vmatpush1.msra.mxu0 0.0
    %1045 = vmatprep.subr.mxu0 0.0
    %1046 = vmatpush1.msra.mxu0 0.0
    %1047 = vmatprep.subr.mxu0 0.0
    %1048 = vmatpush1.msra.mxu0 %v1010
    %1049 = vmatprep.subr.mxu0 0.0
    %1050 = vmatpush1.msra.mxu0 %v1009
    %1051 = vmatprep.subr.mxu0 0.0
    %1052 = vmatpush1.msra.mxu0 %v1008
    %1053 = vmatprep.subr.mxu0 0.0
    %1054 = vmatpush1.msra.mxu0 %v1007
    %1055 = vmatprep.subr.mxu0 0.0
    %1056 = vmatpush2.msra.mxu0 0.0
    %1057 = vmatprep.subr.mxu0 0.0
    %1058 = vmatpush2.msra.mxu0 0.0
    %1059 = vmatprep.subr.mxu0 0.0
    %1060 = vmatpush2.msra.mxu0 0.0
    %1061 = vmatprep.subr.mxu0 0.0
    %1062 = vmatpush2.msra.mxu0 0.0
    %1063 = vmatprep.subr.mxu0 0.0
    %1064 = vmatpush2.msra.mxu0 0.0
    %1065 = vmatprep.subr.mxu0 0.0
    %1066 = vmatpush2.msra.mxu0 0.0
    %1067 = vmatprep.subr.mxu0 0.0
    %1068 = vmatpush2.msra.mxu0 0.0
    %1069 = vmatprep.subr.mxu0 0.0
    %1070 = vmatpush2.msra.mxu0 0.0
    %1071 = vmatprep.subr.mxu0 0.0
    %1072 = vmatpush2.msra.mxu0 0.0
    %1073 = vmatprep.subr.mxu0 0.0
    %1074 = vmatpush2.msra.mxu0 0.0
    %1075 = vmatprep.subr.mxu0 0.0
    %1076 = vmatpush2.msra.mxu0 0.0
    %1077 = vmatprep.subr.mxu0 0.0
    %1078 = vmatpush2.msra.mxu0 0.0
    %1079 = vmatprep.subr.mxu0 0.0
    %1080 = vmatpush2.msra.mxu0 0.0
    %1081 = vmatprep.subr.mxu0 0.0
    %1082 = vmatpush2.msra.mxu0 0.0
    %1083 = vmatprep.subr.mxu0 0.0
    %1084 = vmatpush2.msra.mxu0 0.0
    %1085 = vmatprep.subr.mxu0 0.0
    %1086 = vmatpush2.msra.mxu0 0.0
    %1087 = vmatprep.mubr.f32.mxu0 0.0
    %1088 = vmatmul.mubr.f32.gmra.mxu0 %v1012
    %v1089 = vpop.f32.mrf.mxu0
    %v1090 = vadd.f32 0.0, %v1089
    %v1091 = vpop.f32.mrf.mxu0
    %1092 = vmatprep.mubr.f32.mxu0 0.0
    %1093 = vmatmul.mubr.f32.gmra.mxu0 %v1015
    %v1094 = vpop.f32.mrf.mxu0
    %v1095 = vadd.f32 0.0, %v1094
    %v1096 = vpop.f32.mrf.mxu0
    %1097 = vmatprep.mubr.f32.mxu0 0.0
    %1098 = vmatmul.mubr.f32.gmra.mxu0 %v1018
    %v1099 = vpop.f32.mrf.mxu0
    %v1100 = vadd.f32 0.0, %v1099
    %v1101 = vpop.f32.mrf.mxu0
    %1102 = vmatprep.mubr.f32.mxu0 0.0
    %1103 = vmatmul.mubr.f32.gmra.mxu0 %v1021
    %v1104 = vpop.f32.mrf.mxu0
    %v1105 = vadd.f32 0.0, %v1104
    %v1106 = vpop.f32.mrf.mxu0
    %1107 = vdwg.mxu0
    %v1108 = vadd.f32 %v319, %v1090
    %v1109 = vadd.f32 %v320, %v1095
    %v1110 = vadd.f32 %v321, %v1100
    %v1111 = vadd.f32 %v322, %v1105
    %v1112 = vld [vmem:[#allocation9] sm:$0x1]
    %v1114 = vlaneseq
    %v1115 = vshrl.u32 %v1114, 7
    %v1116 = vsub.s32 0, %v1115
    %v1117 = vrot.slane %v1112, %v1116
    %v1119 = vadd.f32 %v1108, %v1117
    %v1120 = vadd.f32 %v1109, %v1117
    %v1121 = vadd.f32 %v1110, %v1117
    %v1122 = vadd.f32 %v1111, %v1117
    %v1123 = vmul.f32 %v1119, %v289
    %v1124 = vmul.f32 %v1120, %v294
    %v1125 = vmul.f32 %v1121, %v299
    %v1126 = vmul.f32 %v1122, %v304
    %1127 = vst.msk [vmem:[#allocation2] sm:$0xff] %vm310, %v1123
    %1128 = vst.msk [vmem:[#allocation2 + $0x8] sm:$0xff] %vm310, %v1124
    %1129 = vst.msk [vmem:[#allocation2 + $0x10] sm:$0xff] %vm310, %v1125
    %1130 = vst.msk [vmem:[#allocation2 + $0x18] sm:$0xff] %vm310, %v1126
    %v1131 = vld [vmem:[#allocation3] sm:$0xff]
    %v1132 = vld [vmem:[#allocation3 + $0x8] sm:$0xff]
    %v1133 = vld [vmem:[#allocation3 + $0x10] sm:$0xff]
    %v1134 = vld [vmem:[#allocation3 + $0x18] sm:$0xff]
    %v1135 = vld [vmem:[%s8] sm:$0xff]
    %v1136 = vld [vmem:[%s8 + $0x8] sm:$0xff]
    %v1137 = vld [vmem:[%s8 + $0x10] sm:$0xff]
    %v1138 = vld [vmem:[%s8 + $0x18] sm:$0xff]
    %1139 = vmatprep.subr.mxu0 0.0
    %1140 = vmatpush1.msra.mxu0 0.0
    %1141 = vmatprep.subr.mxu0 0.0
    %1142 = vmatpush1.msra.mxu0 0.0
    %1143 = vmatprep.subr.mxu0 0.0
    %1144 = vmatpush1.msra.mxu0 0.0
    %1145 = vmatprep.subr.mxu0 0.0
    %1146 = vmatpush1.msra.mxu0 0.0
    %1147 = vmatprep.subr.mxu0 0.0
    %1148 = vmatpush1.msra.mxu0 0.0
    %1149 = vmatprep.subr.mxu0 0.0
    %1150 = vmatpush1.msra.mxu0 0.0
    %1151 = vmatprep.subr.mxu0 0.0
    %1152 = vmatpush1.msra.mxu0 0.0
    %1153 = vmatprep.subr.mxu0 0.0
    %1154 = vmatpush1.msra.mxu0 0.0
    %1155 = vmatprep.subr.mxu0 0.0
    %1156 = vmatpush1.msra.mxu0 0.0
    %1157 = vmatprep.subr.mxu0 0.0
    %1158 = vmatpush1.msra.mxu0 0.0
    %1159 = vmatprep.subr.mxu0 0.0
    %1160 = vmatpush1.msra.mxu0 0.0
    %1161 = vmatprep.subr.mxu0 0.0
    %1162 = vmatpush1.msra.mxu0 0.0
    %1163 = vmatprep.subr.mxu0 0.0
    %1164 = vmatpush1.msra.mxu0 %v1138
    %1165 = vmatprep.subr.mxu0 0.0
    %1166 = vmatpush1.msra.mxu0 %v1137
    %1167 = vmatprep.subr.mxu0 0.0
    %1168 = vmatpush1.msra.mxu0 %v1136
    %1169 = vmatprep.subr.mxu0 0.0
    %1170 = vmatpush1.msra.mxu0 %v1135
    %1171 = vmatprep.subr.mxu0 0.0
    %1172 = vmatpush2.msra.mxu0 0.0
    %1173 = vmatprep.subr.mxu0 0.0
    %1174 = vmatpush2.msra.mxu0 0.0
    %1175 = vmatprep.subr.mxu0 0.0
    %1176 = vmatpush2.msra.mxu0 0.0
    %1177 = vmatprep.subr.mxu0 0.0
    %1178 = vmatpush2.msra.mxu0 0.0
    %1179 = vmatprep.subr.mxu0 0.0
    %1180 = vmatpush2.msra.mxu0 0.0
    %1181 = vmatprep.subr.mxu0 0.0
    %1182 = vmatpush2.msra.mxu0 0.0
    %1183 = vmatprep.subr.mxu0 0.0
    %1184 = vmatpush2.msra.mxu0 0.0
    %1185 = vmatprep.subr.mxu0 0.0
    %1186 = vmatpush2.msra.mxu0 0.0
    %1187 = vmatprep.subr.mxu0 0.0
    %1188 = vmatpush2.msra.mxu0 0.0
    %1189 = vmatprep.subr.mxu0 0.0
    %1190 = vmatpush2.msra.mxu0 0.0
    %1191 = vmatprep.subr.mxu0 0.0
    %1192 = vmatpush2.msra.mxu0 0.0
    %1193 = vmatprep.subr.mxu0 0.0
    %1194 = vmatpush2.msra.mxu0 0.0
    %1195 = vmatprep.subr.mxu0 0.0
    %1196 = vmatpush2.msra.mxu0 0.0
    %1197 = vmatprep.subr.mxu0 0.0
    %1198 = vmatpush2.msra.mxu0 0.0
    %1199 = vmatprep.subr.mxu0 0.0
    %1200 = vmatpush2.msra.mxu0 0.0
    %1201 = vmatprep.subr.mxu0 0.0
    %1202 = vmatpush2.msra.mxu0 0.0
    %1203 = vmatprep.mubr.f32.mxu0 0.0
    %1204 = vmatmul.mubr.f32.gmra.mxu0 %v1012
    %v1205 = vpop.f32.mrf.mxu0
    %v1206 = vadd.f32 0.0, %v1205
    %v1207 = vpop.f32.mrf.mxu0
    %1208 = vmatprep.mubr.f32.mxu0 0.0
    %1209 = vmatmul.mubr.f32.gmra.mxu0 %v1015
    %v1210 = vpop.f32.mrf.mxu0
    %v1211 = vadd.f32 0.0, %v1210
    %v1212 = vpop.f32.mrf.mxu0
    %1213 = vmatprep.mubr.f32.mxu0 0.0
    %1214 = vmatmul.mubr.f32.gmra.mxu0 %v1018
    %v1215 = vpop.f32.mrf.mxu0
    %v1216 = vadd.f32 0.0, %v1215
    %v1217 = vpop.f32.mrf.mxu0
    %1218 = vmatprep.mubr.f32.mxu0 0.0
    %1219 = vmatmul.mubr.f32.gmra.mxu0 %v1021
    %v1220 = vpop.f32.mrf.mxu0
    %v1221 = vadd.f32 0.0, %v1220
    %v1222 = vpop.f32.mrf.mxu0
    %1223 = vdwg.mxu0
    %v1224 = vadd.f32 %v1131, %v1206
    %v1225 = vadd.f32 %v1132, %v1211
    %v1226 = vadd.f32 %v1133, %v1216
    %v1227 = vadd.f32 %v1134, %v1221
    %v1228 = vld [vmem:[#allocation11] sm:$0x1]
    %v1230 = vlaneseq
    %v1231 = vshrl.u32 %v1230, 7
    %v1232 = vsub.s32 0, %v1231
    %v1233 = vrot.slane %v1228, %v1232
    %v1235 = vadd.f32 %v1224, %v1233
    %v1236 = vadd.f32 %v1225, %v1233
    %v1237 = vadd.f32 %v1226, %v1233
    %v1238 = vadd.f32 %v1227, %v1233
    %1239 = vst.msk [vmem:[#allocation3] sm:$0xff] %vm310, %v1235
    %1240 = vst.msk [vmem:[#allocation3 + $0x8] sm:$0xff] %vm310, %v1236
    %1241 = vst.msk [vmem:[#allocation3 + $0x10] sm:$0xff] %vm310, %v1237
    %1242 = vst.msk [vmem:[#allocation3 + $0x18] sm:$0xff] %vm310, %v1238
    %v1243 = vld [vmem:[#allocation2] sm:$0xff]
    %v1244 = vld [vmem:[#allocation2 + $0x8] sm:$0xff]
    %v1245 = vld [vmem:[#allocation2 + $0x10] sm:$0xff]
    %v1246 = vld [vmem:[#allocation2 + $0x18] sm:$0xff]
    %s1247 = scalar_lea.vmem [#allocation8], 1
    %v1248 = vld [vmem:[%s1247] sm:$0x1]
    %v1250 = vlaneseq
    %v1251 = vshrl.u32 %v1250, 7
    %v1252 = vsub.s32 0, %v1251
    %v1253 = vrot.slane %v1248, %v1252
    %v1255 = vrot.slane %v1243, 4
    %v1256 = vrot.slane %v1244, 4
    %v1257 = vrot.slane %v1245, 4
    %v1258 = vrot.slane %v1246, 4
    %vm1259 = vcmp.lt.s32.totalorder %v124, 4
    %v1260 = vsel %vm1259, %v1257, %v1258
    %v1261 = vsel %vm1259, %v1256, %v1257
    %v1262 = vsel %vm1259, %v1255, %v1256
    %v1263 = vsel %vm1259, %v1258, %v1255
    %vm1264 = vcmp.ge.s32.totalorder %v172, 4
    %vm1265 = vcmp.ge.s32.totalorder %v173, 4
    %vm1266 = vcmp.ge.s32.totalorder %v174, 4
    %vm1267 = vcmp.ge.s32.totalorder %v175, 4
    %v1268 = vsel %vm1264, 1, 0
    %v1269 = vsel %vm1265, 1, 0
    %v1270 = vsel %vm1266, 1, 0
    %v1271 = vsel %vm1267, 1, 0
    %vm1272 = vcmp.eq.s32.totalorder %v1268, 1
    %vm1273 = vcmp.eq.s32.totalorder %v1269, 1
    %vm1274 = vcmp.eq.s32.totalorder %v1270, 1
    %vm1275 = vcmp.eq.s32.totalorder %v1271, 1
    %v1276 = vsel %vm1272, %v1263, 0.0
    %v1277 = vsel %vm1273, %v1262, 0.0
    %v1278 = vsel %vm1274, %v1261, 0.0
    %v1279 = vsel %vm1275, %v1260, 0.0
    %s1280 = scalar_lea.vmem [#allocation6], 160
    %v1281 = vld [vmem:[%s1280] sm:$0xff]
    %v1282 = vld [vmem:[%s1280 + $0x8] sm:$0xff]
    %v1283 = vld [vmem:[%s1280 + $0x10] sm:$0xff]
    %v1284 = vld [vmem:[%s1280 + $0x18] sm:$0xff]
    %v1286 = vsel %vm310, %v1276, 0
    %v1289 = vsel %vm310, %v1277, 0
    %v1292 = vsel %vm310, %v1278, 0
    %v1295 = vsel %vm310, %v1279, 0
    %1297 = vmatprep.subr.mxu0 0.0
    %1298 = vmatpush1.msra.mxu0 0.0
    %1299 = vmatprep.subr.mxu0 0.0
    %1300 = vmatpush1.msra.mxu0 0.0
    %1301 = vmatprep.subr.mxu0 0.0
    %1302 = vmatpush1.msra.mxu0 0.0
    %1303 = vmatprep.subr.mxu0 0.0
    %1304 = vmatpush1.msra.mxu0 0.0
    %1305 = vmatprep.subr.mxu0 0.0
    %1306 = vmatpush1.msra.mxu0 0.0
    %1307 = vmatprep.subr.mxu0 0.0
    %1308 = vmatpush1.msra.mxu0 0.0
    %1309 = vmatprep.subr.mxu0 0.0
    %1310 = vmatpush1.msra.mxu0 0.0
    %1311 = vmatprep.subr.mxu0 0.0
    %1312 = vmatpush1.msra.mxu0 0.0
    %1313 = vmatprep.subr.mxu0 0.0
    %1314 = vmatpush1.msra.mxu0 0.0
    %1315 = vmatprep.subr.mxu0 0.0
    %1316 = vmatpush1.msra.mxu0 0.0
    %1317 = vmatprep.subr.mxu0 0.0
    %1318 = vmatpush1.msra.mxu0 0.0
    %1319 = vmatprep.subr.mxu0 0.0
    %1320 = vmatpush1.msra.mxu0 0.0
    %1321 = vmatprep.subr.mxu0 0.0
    %1322 = vmatpush1.msra.mxu0 %v1284
    %1323 = vmatprep.subr.mxu0 0.0
    %1324 = vmatpush1.msra.mxu0 %v1283
    %1325 = vmatprep.subr.mxu0 0.0
    %1326 = vmatpush1.msra.mxu0 %v1282
    %1327 = vmatprep.subr.mxu0 0.0
    %1328 = vmatpush1.msra.mxu0 %v1281
    %1329 = vmatprep.subr.mxu0 0.0
    %1330 = vmatpush2.msra.mxu0 0.0
    %1331 = vmatprep.subr.mxu0 0.0
    %1332 = vmatpush2.msra.mxu0 0.0
    %1333 = vmatprep.subr.mxu0 0.0
    %1334 = vmatpush2.msra.mxu0 0.0
    %1335 = vmatprep.subr.mxu0 0.0
    %1336 = vmatpush2.msra.mxu0 0.0
    %1337 = vmatprep.subr.mxu0 0.0
    %1338 = vmatpush2.msra.mxu0 0.0
    %1339 = vmatprep.subr.mxu0 0.0
    %1340 = vmatpush2.msra.mxu0 0.0
    %1341 = vmatprep.subr.mxu0 0.0
    %1342 = vmatpush2.msra.mxu0 0.0
    %1343 = vmatprep.subr.mxu0 0.0
    %1344 = vmatpush2.msra.mxu0 0.0
    %1345 = vmatprep.subr.mxu0 0.0
    %1346 = vmatpush2.msra.mxu0 0.0
    %1347 = vmatprep.subr.mxu0 0.0
    %1348 = vmatpush2.msra.mxu0 0.0
    %1349 = vmatprep.subr.mxu0 0.0
    %1350 = vmatpush2.msra.mxu0 0.0
    %1351 = vmatprep.subr.mxu0 0.0
    %1352 = vmatpush2.msra.mxu0 0.0
    %1353 = vmatprep.subr.mxu0 0.0
    %1354 = vmatpush2.msra.mxu0 0.0
    %1355 = vmatprep.subr.mxu0 0.0
    %1356 = vmatpush2.msra.mxu0 0.0
    %1357 = vmatprep.subr.mxu0 0.0
    %1358 = vmatpush2.msra.mxu0 0.0
    %1359 = vmatprep.subr.mxu0 0.0
    %1360 = vmatpush2.msra.mxu0 0.0
    %1361 = vmatprep.mubr.f32.mxu0 0.0
    %1362 = vmatmul.mubr.f32.gmra.mxu0 %v1286
    %v1363 = vpop.f32.mrf.mxu0
    %v1364 = vadd.f32 0.0, %v1363
    %v1365 = vpop.f32.mrf.mxu0
    %1366 = vmatprep.mubr.f32.mxu0 0.0
    %1367 = vmatmul.mubr.f32.gmra.mxu0 %v1289
    %v1368 = vpop.f32.mrf.mxu0
    %v1369 = vadd.f32 0.0, %v1368
    %v1370 = vpop.f32.mrf.mxu0
    %1371 = vmatprep.mubr.f32.mxu0 0.0
    %1372 = vmatmul.mubr.f32.gmra.mxu0 %v1292
    %v1373 = vpop.f32.mrf.mxu0
    %v1374 = vadd.f32 0.0, %v1373
    %v1375 = vpop.f32.mrf.mxu0
    %1376 = vmatprep.mubr.f32.mxu0 0.0
    %1377 = vmatmul.mubr.f32.gmra.mxu0 %v1295
    %v1378 = vpop.f32.mrf.mxu0
    %v1379 = vadd.f32 0.0, %v1378
    %v1380 = vpop.f32.mrf.mxu0
    %1381 = vdwg.mxu0
    %v1382 = vadd.f32 %v1253, %v1364
    %v1383 = vadd.f32 %v1253, %v1369
    %v1384 = vadd.f32 %v1253, %v1374
    %v1385 = vadd.f32 %v1253, %v1379
    %v1386 = vrot.slane %v1243, 6
    %v1387 = vrot.slane %v1244, 6
    %v1388 = vrot.slane %v1245, 6
    %v1389 = vrot.slane %v1246, 6
    %v1390 = vsel %vm334, %v1388, %v1389
    %v1391 = vsel %vm334, %v1387, %v1388
    %v1392 = vsel %vm334, %v1386, %v1387
    %v1393 = vsel %vm334, %v1389, %v1386
    %v1394 = vsel %vm347, %v1393, 0.0
    %v1395 = vsel %vm348, %v1392, 0.0
    %v1396 = vsel %vm349, %v1391, 0.0
    %v1397 = vsel %vm350, %v1390, 0.0
    %s1398 = scalar_lea.vmem [#allocation6], 192
    %v1399 = vld [vmem:[%s1398] sm:$0xff]
    %v1400 = vld [vmem:[%s1398 + $0x8] sm:$0xff]
    %v1401 = vld [vmem:[%s1398 + $0x10] sm:$0xff]
    %v1402 = vld [vmem:[%s1398 + $0x18] sm:$0xff]
    %v1404 = vsel %vm310, %v1394, 0
    %v1407 = vsel %vm310, %v1395, 0
    %v1410 = vsel %vm310, %v1396, 0
    %v1413 = vsel %vm310, %v1397, 0
    %1415 = vmatprep.subr.mxu0 0.0
    %1416 = vmatpush1.msra.mxu0 0.0
    %1417 = vmatprep.subr.mxu0 0.0
    %1418 = vmatpush1.msra.mxu0 0.0
    %1419 = vmatprep.subr.mxu0 0.0
    %1420 = vmatpush1.msra.mxu0 0.0
    %1421 = vmatprep.subr.mxu0 0.0
    %1422 = vmatpush1.msra.mxu0 0.0
    %1423 = vmatprep.subr.mxu0 0.0
    %1424 = vmatpush1.msra.mxu0 0.0
    %1425 = vmatprep.subr.mxu0 0.0
    %1426 = vmatpush1.msra.mxu0 0.0
    %1427 = vmatprep.subr.mxu0 0.0
    %1428 = vmatpush1.msra.mxu0 0.0
    %1429 = vmatprep.subr.mxu0 0.0
    %1430 = vmatpush1.msra.mxu0 0.0
    %1431 = vmatprep.subr.mxu0 0.0
    %1432 = vmatpush1.msra.mxu0 0.0
    %1433 = vmatprep.subr.mxu0 0.0
    %1434 = vmatpush1.msra.mxu0 0.0
    %1435 = vmatprep.subr.mxu0 0.0
    %1436 = vmatpush1.msra.mxu0 0.0
    %1437 = vmatprep.subr.mxu0 0.0
    %1438 = vmatpush1.msra.mxu0 0.0
    %1439 = vmatprep.subr.mxu0 0.0
    %1440 = vmatpush1.msra.mxu0 %v1402
    %1441 = vmatprep.subr.mxu0 0.0
    %1442 = vmatpush1.msra.mxu0 %v1401
    %1443 = vmatprep.subr.mxu0 0.0
    %1444 = vmatpush1.msra.mxu0 %v1400
    %1445 = vmatprep.subr.mxu0 0.0
    %1446 = vmatpush1.msra.mxu0 %v1399
    %1447 = vmatprep.subr.mxu0 0.0
    %1448 = vmatpush2.msra.mxu0 0.0
    %1449 = vmatprep.subr.mxu0 0.0
    %1450 = vmatpush2.msra.mxu0 0.0
    %1451 = vmatprep.subr.mxu0 0.0
    %1452 = vmatpush2.msra.mxu0 0.0
    %1453 = vmatprep.subr.mxu0 0.0
    %1454 = vmatpush2.msra.mxu0 0.0
    %1455 = vmatprep.subr.mxu0 0.0
    %1456 = vmatpush2.msra.mxu0 0.0
    %1457 = vmatprep.subr.mxu0 0.0
    %1458 = vmatpush2.msra.mxu0 0.0
    %1459 = vmatprep.subr.mxu0 0.0
    %1460 = vmatpush2.msra.mxu0 0.0
    %1461 = vmatprep.subr.mxu0 0.0
    %1462 = vmatpush2.msra.mxu0 0.0
    %1463 = vmatprep.subr.mxu0 0.0
    %1464 = vmatpush2.msra.mxu0 0.0
    %1465 = vmatprep.subr.mxu0 0.0
    %1466 = vmatpush2.msra.mxu0 0.0
    %1467 = vmatprep.subr.mxu0 0.0
    %1468 = vmatpush2.msra.mxu0 0.0
    %1469 = vmatprep.subr.mxu0 0.0
    %1470 = vmatpush2.msra.mxu0 0.0
    %1471 = vmatprep.subr.mxu0 0.0
    %1472 = vmatpush2.msra.mxu0 0.0
    %1473 = vmatprep.subr.mxu0 0.0
    %1474 = vmatpush2.msra.mxu0 0.0
    %1475 = vmatprep.subr.mxu0 0.0
    %1476 = vmatpush2.msra.mxu0 0.0
    %1477 = vmatprep.subr.mxu0 0.0
    %1478 = vmatpush2.msra.mxu0 0.0
    %1479 = vmatprep.mubr.f32.mxu0 0.0
    %1480 = vmatmul.mubr.f32.gmra.mxu0 %v1404
    %v1481 = vpop.f32.mrf.mxu0
    %v1482 = vadd.f32 0.0, %v1481
    %v1483 = vpop.f32.mrf.mxu0
    %1484 = vmatprep.mubr.f32.mxu0 0.0
    %1485 = vmatmul.mubr.f32.gmra.mxu0 %v1407
    %v1486 = vpop.f32.mrf.mxu0
    %v1487 = vadd.f32 0.0, %v1486
    %v1488 = vpop.f32.mrf.mxu0
    %1489 = vmatprep.mubr.f32.mxu0 0.0
    %1490 = vmatmul.mubr.f32.gmra.mxu0 %v1410
    %v1491 = vpop.f32.mrf.mxu0
    %v1492 = vadd.f32 0.0, %v1491
    %v1493 = vpop.f32.mrf.mxu0
    %1494 = vmatprep.mubr.f32.mxu0 0.0
    %1495 = vmatmul.mubr.f32.gmra.mxu0 %v1413
    %v1496 = vpop.f32.mrf.mxu0
    %v1497 = vadd.f32 0.0, %v1496
    %v1498 = vpop.f32.mrf.mxu0
    %1499 = vdwg.mxu0
    %v1500 = vadd.f32 %v1382, %v1482
    %v1501 = vadd.f32 %v1383, %v1487
    %v1502 = vadd.f32 %v1384, %v1492
    %v1503 = vadd.f32 %v1385, %v1497
    %s1504 = scalar_lea.vmem [#allocation6], 224
    %v1505 = vld [vmem:[%s1504] sm:$0xff]
    %v1506 = vld [vmem:[%s1504 + $0x8] sm:$0xff]
    %v1507 = vld [vmem:[%s1504 + $0x10] sm:$0xff]
    %v1508 = vld [vmem:[%s1504 + $0x18] sm:$0xff]
    %v1510 = vsel %vm310, %v1243, 0
    %v1513 = vsel %vm310, %v1244, 0
    %v1516 = vsel %vm310, %v1245, 0
    %v1519 = vsel %vm310, %v1246, 0
    %1521 = vmatprep.subr.mxu0 0.0
    %1522 = vmatpush1.msra.mxu0 0.0
    %1523 = vmatprep.subr.mxu0 0.0
    %1524 = vmatpush1.msra.mxu0 0.0
    %1525 = vmatprep.subr.mxu0 0.0
    %1526 = vmatpush1.msra.mxu0 0.0
    %1527 = vmatprep.subr.mxu0 0.0
    %1528 = vmatpush1.msra.mxu0 0.0
    %1529 = vmatprep.subr.mxu0 0.0
    %1530 = vmatpush1.msra.mxu0 0.0
    %1531 = vmatprep.subr.mxu0 0.0
    %1532 = vmatpush1.msra.mxu0 0.0
    %1533 = vmatprep.subr.mxu0 0.0
    %1534 = vmatpush1.msra.mxu0 0.0
    %1535 = vmatprep.subr.mxu0 0.0
    %1536 = vmatpush1.msra.mxu0 0.0
    %1537 = vmatprep.subr.mxu0 0.0
    %1538 = vmatpush1.msra.mxu0 0.0
    %1539 = vmatprep.subr.mxu0 0.0
    %1540 = vmatpush1.msra.mxu0 0.0
    %1541 = vmatprep.subr.mxu0 0.0
    %1542 = vmatpush1.msra.mxu0 0.0
    %1543 = vmatprep.subr.mxu0 0.0
    %1544 = vmatpush1.msra.mxu0 0.0
    %1545 = vmatprep.subr.mxu0 0.0
    %1546 = vmatpush1.msra.mxu0 %v1508
    %1547 = vmatprep.subr.mxu0 0.0
    %1548 = vmatpush1.msra.mxu0 %v1507
    %1549 = vmatprep.subr.mxu0 0.0
    %1550 = vmatpush1.msra.mxu0 %v1506
    %1551 = vmatprep.subr.mxu0 0.0
    %1552 = vmatpush1.msra.mxu0 %v1505
    %1553 = vmatprep.subr.mxu0 0.0
    %1554 = vmatpush2.msra.mxu0 0.0
    %1555 = vmatprep.subr.mxu0 0.0
    %1556 = vmatpush2.msra.mxu0 0.0
    %1557 = vmatprep.subr.mxu0 0.0
    %1558 = vmatpush2.msra.mxu0 0.0
    %1559 = vmatprep.subr.mxu0 0.0
    %1560 = vmatpush2.msra.mxu0 0.0
    %1561 = vmatprep.subr.mxu0 0.0
    %1562 = vmatpush2.msra.mxu0 0.0
    %1563 = vmatprep.subr.mxu0 0.0
    %1564 = vmatpush2.msra.mxu0 0.0
    %1565 = vmatprep.subr.mxu0 0.0
    %1566 = vmatpush2.msra.mxu0 0.0
    %1567 = vmatprep.subr.mxu0 0.0
    %1568 = vmatpush2.msra.mxu0 0.0
    %1569 = vmatprep.subr.mxu0 0.0
    %1570 = vmatpush2.msra.mxu0 0.0
    %1571 = vmatprep.subr.mxu0 0.0
    %1572 = vmatpush2.msra.mxu0 0.0
    %1573 = vmatprep.subr.mxu0 0.0
    %1574 = vmatpush2.msra.mxu0 0.0
    %1575 = vmatprep.subr.mxu0 0.0
    %1576 = vmatpush2.msra.mxu0 0.0
    %1577 = vmatprep.subr.mxu0 0.0
    %1578 = vmatpush2.msra.mxu0 0.0
    %1579 = vmatprep.subr.mxu0 0.0
    %1580 = vmatpush2.msra.mxu0 0.0
    %1581 = vmatprep.subr.mxu0 0.0
    %1582 = vmatpush2.msra.mxu0 0.0
    %1583 = vmatprep.subr.mxu0 0.0
    %1584 = vmatpush2.msra.mxu0 0.0
    %1585 = vmatprep.mubr.f32.mxu0 0.0
    %1586 = vmatmul.mubr.f32.gmra.mxu0 %v1510
    %v1587 = vpop.f32.mrf.mxu0
    %v1588 = vadd.f32 0.0, %v1587
    %v1589 = vpop.f32.mrf.mxu0
    %1590 = vmatprep.mubr.f32.mxu0 0.0
    %1591 = vmatmul.mubr.f32.gmra.mxu0 %v1513
    %v1592 = vpop.f32.mrf.mxu0
    %v1593 = vadd.f32 0.0, %v1592
    %v1594 = vpop.f32.mrf.mxu0
    %1595 = vmatprep.mubr.f32.mxu0 0.0
    %1596 = vmatmul.mubr.f32.gmra.mxu0 %v1516
    %v1597 = vpop.f32.mrf.mxu0
    %v1598 = vadd.f32 0.0, %v1597
    %v1599 = vpop.f32.mrf.mxu0
    %1600 = vmatprep.mubr.f32.mxu0 0.0
    %1601 = vmatmul.mubr.f32.gmra.mxu0 %v1519
    %v1602 = vpop.f32.mrf.mxu0
    %v1603 = vadd.f32 0.0, %v1602
    %v1604 = vpop.f32.mrf.mxu0
    %1605 = vdwg.mxu0
    %v1606 = vadd.f32 %v1500, %v1588
    %v1607 = vadd.f32 %v1501, %v1593
    %v1608 = vadd.f32 %v1502, %v1598
    %v1609 = vadd.f32 %v1503, %v1603
    %v1610 = vrot.slane %v1243, 2
    %v1611 = vrot.slane %v1244, 2
    %v1612 = vrot.slane %v1245, 2
    %v1613 = vrot.slane %v1246, 2
    %v1614 = vsel %vm832, %v1612, %v1613
    %v1615 = vsel %vm832, %v1611, %v1612
    %v1616 = vsel %vm832, %v1610, %v1611
    %v1617 = vsel %vm832, %v1613, %v1610
    %v1618 = vsel %vm845, %v1616, 0.0
    %v1619 = vsel %vm846, %v1615, 0.0
    %v1620 = vsel %vm847, %v1614, 0.0
    %v1621 = vsel %vm848, %v1617, 0.0
    %s1622 = scalar_lea.vmem [#allocation6], 256
    %v1623 = vld [vmem:[%s1622] sm:$0xff]
    %v1624 = vld [vmem:[%s1622 + $0x8] sm:$0xff]
    %v1625 = vld [vmem:[%s1622 + $0x10] sm:$0xff]
    %v1626 = vld [vmem:[%s1622 + $0x18] sm:$0xff]
    %v1628 = vsel %vm310, %v1618, 0
    %v1631 = vsel %vm310, %v1619, 0
    %v1634 = vsel %vm310, %v1620, 0
    %v1637 = vsel %vm310, %v1621, 0
    %1639 = vmatprep.subr.mxu0 0.0
    %1640 = vmatpush1.msra.mxu0 0.0
    %1641 = vmatprep.subr.mxu0 0.0
    %1642 = vmatpush1.msra.mxu0 0.0
    %1643 = vmatprep.subr.mxu0 0.0
    %1644 = vmatpush1.msra.mxu0 0.0
    %1645 = vmatprep.subr.mxu0 0.0
    %1646 = vmatpush1.msra.mxu0 0.0
    %1647 = vmatprep.subr.mxu0 0.0
    %1648 = vmatpush1.msra.mxu0 0.0
    %1649 = vmatprep.subr.mxu0 0.0
    %1650 = vmatpush1.msra.mxu0 0.0
    %1651 = vmatprep.subr.mxu0 0.0
    %1652 = vmatpush1.msra.mxu0 0.0
    %1653 = vmatprep.subr.mxu0 0.0
    %1654 = vmatpush1.msra.mxu0 0.0
    %1655 = vmatprep.subr.mxu0 0.0
    %1656 = vmatpush1.msra.mxu0 0.0
    %1657 = vmatprep.subr.mxu0 0.0
    %1658 = vmatpush1.msra.mxu0 0.0
    %1659 = vmatprep.subr.mxu0 0.0
    %1660 = vmatpush1.msra.mxu0 0.0
    %1661 = vmatprep.subr.mxu0 0.0
    %1662 = vmatpush1.msra.mxu0 0.0
    %1663 = vmatprep.subr.mxu0 0.0
    %1664 = vmatpush1.msra.mxu0 %v1626
    %1665 = vmatprep.subr.mxu0 0.0
    %1666 = vmatpush1.msra.mxu0 %v1625
    %1667 = vmatprep.subr.mxu0 0.0
    %1668 = vmatpush1.msra.mxu0 %v1624
    %1669 = vmatprep.subr.mxu0 0.0
    %1670 = vmatpush1.msra.mxu0 %v1623
    %1671 = vmatprep.subr.mxu0 0.0
    %1672 = vmatpush2.msra.mxu0 0.0
    %1673 = vmatprep.subr.mxu0 0.0
    %1674 = vmatpush2.msra.mxu0 0.0
    %1675 = vmatprep.subr.mxu0 0.0
    %1676 = vmatpush2.msra.mxu0 0.0
    %1677 = vmatprep.subr.mxu0 0.0
    %1678 = vmatpush2.msra.mxu0 0.0
    %1679 = vmatprep.subr.mxu0 0.0
    %1680 = vmatpush2.msra.mxu0 0.0
    %1681 = vmatprep.subr.mxu0 0.0
    %1682 = vmatpush2.msra.mxu0 0.0
    %1683 = vmatprep.subr.mxu0 0.0
    %1684 = vmatpush2.msra.mxu0 0.0
    %1685 = vmatprep.subr.mxu0 0.0
    %1686 = vmatpush2.msra.mxu0 0.0
    %1687 = vmatprep.subr.mxu0 0.0
    %1688 = vmatpush2.msra.mxu0 0.0
    %1689 = vmatprep.subr.mxu0 0.0
    %1690 = vmatpush2.msra.mxu0 0.0
    %1691 = vmatprep.subr.mxu0 0.0
    %1692 = vmatpush2.msra.mxu0 0.0
    %1693 = vmatprep.subr.mxu0 0.0
    %1694 = vmatpush2.msra.mxu0 0.0
    %1695 = vmatprep.subr.mxu0 0.0
    %1696 = vmatpush2.msra.mxu0 0.0
    %1697 = vmatprep.subr.mxu0 0.0
    %1698 = vmatpush2.msra.mxu0 0.0
    %1699 = vmatprep.subr.mxu0 0.0
    %1700 = vmatpush2.msra.mxu0 0.0
    %1701 = vmatprep.subr.mxu0 0.0
    %1702 = vmatpush2.msra.mxu0 0.0
    %1703 = vmatprep.mubr.f32.mxu0 0.0
    %1704 = vmatmul.mubr.f32.gmra.mxu0 %v1628
    %v1705 = vpop.f32.mrf.mxu0
    %v1706 = vadd.f32 0.0, %v1705
    %v1707 = vpop.f32.mrf.mxu0
    %1708 = vmatprep.mubr.f32.mxu0 0.0
    %1709 = vmatmul.mubr.f32.gmra.mxu0 %v1631
    %v1710 = vpop.f32.mrf.mxu0
    %v1711 = vadd.f32 0.0, %v1710
    %v1712 = vpop.f32.mrf.mxu0
    %1713 = vmatprep.mubr.f32.mxu0 0.0
    %1714 = vmatmul.mubr.f32.gmra.mxu0 %v1634
    %v1715 = vpop.f32.mrf.mxu0
    %v1716 = vadd.f32 0.0, %v1715
    %v1717 = vpop.f32.mrf.mxu0
    %1718 = vmatprep.mubr.f32.mxu0 0.0
    %1719 = vmatmul.mubr.f32.gmra.mxu0 %v1637
    %v1720 = vpop.f32.mrf.mxu0
    %v1721 = vadd.f32 0.0, %v1720
    %v1722 = vpop.f32.mrf.mxu0
    %1723 = vdwg.mxu0
    %v1724 = vadd.f32 %v1606, %v1706
    %v1725 = vadd.f32 %v1607, %v1711
    %v1726 = vadd.f32 %v1608, %v1716
    %v1727 = vadd.f32 %v1609, %v1721
    %vm1728 = vcmp.lt.s32.totalorder %v172, 12
    %vm1729 = vcmp.lt.s32.totalorder %v173, 12
    %vm1730 = vcmp.lt.s32.totalorder %v174, 12
    %vm1731 = vcmp.lt.s32.totalorder %v175, 12
    %v1732 = vsel %vm1728, 1, 0
    %v1733 = vsel %vm1729, 1, 0
    %v1734 = vsel %vm1730, 1, 0
    %v1735 = vsel %vm1731, 1, 0
    %vm1736 = vcmp.eq.s32.totalorder %v1732, 1
    %vm1737 = vcmp.eq.s32.totalorder %v1733, 1
    %vm1738 = vcmp.eq.s32.totalorder %v1734, 1
    %vm1739 = vcmp.eq.s32.totalorder %v1735, 1
    %v1740 = vsel %vm1736, %v1262, 0.0
    %v1741 = vsel %vm1737, %v1261, 0.0
    %v1742 = vsel %vm1738, %v1260, 0.0
    %v1743 = vsel %vm1739, %v1263, 0.0
    %s1744 = scalar_lea.vmem [#allocation6], 288
    %v1745 = vld [vmem:[%s1744] sm:$0xff]
    %v1746 = vld [vmem:[%s1744 + $0x8] sm:$0xff]
    %v1747 = vld [vmem:[%s1744 + $0x10] sm:$0xff]
    %v1748 = vld [vmem:[%s1744 + $0x18] sm:$0xff]
    %v1750 = vsel %vm310, %v1740, 0
    %v1753 = vsel %vm310, %v1741, 0
    %v1756 = vsel %vm310, %v1742, 0
    %v1759 = vsel %vm310, %v1743, 0
    %1761 = vmatprep.subr.mxu0 0.0
    %1762 = vmatpush1.msra.mxu0 0.0
    %1763 = vmatprep.subr.mxu0 0.0
    %1764 = vmatpush1.msra.mxu0 0.0
    %1765 = vmatprep.subr.mxu0 0.0
    %1766 = vmatpush1.msra.mxu0 0.0
    %1767 = vmatprep.subr.mxu0 0.0
    %1768 = vmatpush1.msra.mxu0 0.0
    %1769 = vmatprep.subr.mxu0 0.0
    %1770 = vmatpush1.msra.mxu0 0.0
    %1771 = vmatprep.subr.mxu0 0.0
    %1772 = vmatpush1.msra.mxu0 0.0
    %1773 = vmatprep.subr.mxu0 0.0
    %1774 = vmatpush1.msra.mxu0 0.0
    %1775 = vmatprep.subr.mxu0 0.0
    %1776 = vmatpush1.msra.mxu0 0.0
    %1777 = vmatprep.subr.mxu0 0.0
    %1778 = vmatpush1.msra.mxu0 0.0
    %1779 = vmatprep.subr.mxu0 0.0
    %1780 = vmatpush1.msra.mxu0 0.0
    %1781 = vmatprep.subr.mxu0 0.0
    %1782 = vmatpush1.msra.mxu0 0.0
    %1783 = vmatprep.subr.mxu0 0.0
    %1784 = vmatpush1.msra.mxu0 0.0
    %1785 = vmatprep.subr.mxu0 0.0
    %1786 = vmatpush1.msra.mxu0 %v1748
    %1787 = vmatprep.subr.mxu0 0.0
    %1788 = vmatpush1.msra.mxu0 %v1747
    %1789 = vmatprep.subr.mxu0 0.0
    %1790 = vmatpush1.msra.mxu0 %v1746
    %1791 = vmatprep.subr.mxu0 0.0
    %1792 = vmatpush1.msra.mxu0 %v1745
    %1793 = vmatprep.subr.mxu0 0.0
    %1794 = vmatpush2.msra.mxu0 0.0
    %1795 = vmatprep.subr.mxu0 0.0
    %1796 = vmatpush2.msra.mxu0 0.0
    %1797 = vmatprep.subr.mxu0 0.0
    %1798 = vmatpush2.msra.mxu0 0.0
    %1799 = vmatprep.subr.mxu0 0.0
    %1800 = vmatpush2.msra.mxu0 0.0
    %1801 = vmatprep.subr.mxu0 0.0
    %1802 = vmatpush2.msra.mxu0 0.0
    %1803 = vmatprep.subr.mxu0 0.0
    %1804 = vmatpush2.msra.mxu0 0.0
    %1805 = vmatprep.subr.mxu0 0.0
    %1806 = vmatpush2.msra.mxu0 0.0
    %1807 = vmatprep.subr.mxu0 0.0
    %1808 = vmatpush2.msra.mxu0 0.0
    %1809 = vmatprep.subr.mxu0 0.0
    %1810 = vmatpush2.msra.mxu0 0.0
    %1811 = vmatprep.subr.mxu0 0.0
    %1812 = vmatpush2.msra.mxu0 0.0
    %1813 = vmatprep.subr.mxu0 0.0
    %1814 = vmatpush2.msra.mxu0 0.0
    %1815 = vmatprep.subr.mxu0 0.0
    %1816 = vmatpush2.msra.mxu0 0.0
    %1817 = vmatprep.subr.mxu0 0.0
    %1818 = vmatpush2.msra.mxu0 0.0
    %1819 = vmatprep.subr.mxu0 0.0
    %1820 = vmatpush2.msra.mxu0 0.0
    %1821 = vmatprep.subr.mxu0 0.0
    %1822 = vmatpush2.msra.mxu0 0.0
    %1823 = vmatprep.subr.mxu0 0.0
    %1824 = vmatpush2.msra.mxu0 0.0
    %1825 = vmatprep.mubr.f32.mxu0 0.0
    %1826 = vmatmul.mubr.f32.gmra.mxu0 %v1750
    %v1827 = vpop.f32.mrf.mxu0
    %v1828 = vadd.f32 0.0, %v1827
    %v1829 = vpop.f32.mrf.mxu0
    %1830 = vmatprep.mubr.f32.mxu0 0.0
    %1831 = vmatmul.mubr.f32.gmra.mxu0 %v1753
    %v1832 = vpop.f32.mrf.mxu0
    %v1833 = vadd.f32 0.0, %v1832
    %v1834 = vpop.f32.mrf.mxu0
    %1835 = vmatprep.mubr.f32.mxu0 0.0
    %1836 = vmatmul.mubr.f32.gmra.mxu0 %v1756
    %v1837 = vpop.f32.mrf.mxu0
    %v1838 = vadd.f32 0.0, %v1837
    %v1839 = vpop.f32.mrf.mxu0
    %1840 = vmatprep.mubr.f32.mxu0 0.0
    %1841 = vmatmul.mubr.f32.gmra.mxu0 %v1759
    %v1842 = vpop.f32.mrf.mxu0
    %v1843 = vadd.f32 0.0, %v1842
    %v1844 = vpop.f32.mrf.mxu0
    %1845 = vdwg.mxu0
    %v1846 = vadd.f32 %v1724, %v1828
    %v1847 = vadd.f32 %v1725, %v1833
    %v1848 = vadd.f32 %v1726, %v1838
    %v1849 = vadd.f32 %v1727, %v1843
    %v1850 = vtanh.pop %v1846
    %v1851 = vtanh.pop %v1847
    %v1852 = vtanh.pop %v1848
    %v1853 = vtanh.pop %v1849
    %v1854 = vxor.u32 %v1846, 2147483648
    %v1855 = vxor.u32 %v1847, 2147483648
    %v1856 = vxor.u32 %v1848, 2147483648
    %v1857 = vxor.u32 %v1849, 2147483648
    %v1858 = vmul.f32 %v1854, 1.442695
    %v1859 = vpow.pop %v1858
    %v1860 = vmul.f32 %v1855, 1.442695
    %v1861 = vpow.pop %v1860
    %v1862 = vmul.f32 %v1856, 1.442695
    %v1863 = vpow.pop %v1862
    %v1864 = vmul.f32 %v1857, 1.442695
    %v1865 = vpow.pop %v1864
    %v1866 = vadd.f32 %v1859, 1.0
    %v1867 = vadd.f32 %v1861, 1.0
    %v1868 = vadd.f32 %v1863, 1.0
    %v1869 = vadd.f32 %v1865, 1.0
    %v1870 = vrcp.pop %v1866
    %v1871 = vmul.f32 1.0, %v1870
    %v1872 = vrcp.pop %v1867
    %v1873 = vmul.f32 1.0, %v1872
    %v1874 = vrcp.pop %v1868
    %v1875 = vmul.f32 1.0, %v1874
    %v1876 = vrcp.pop %v1869
    %v1877 = vmul.f32 1.0, %v1876
    %1882 = vrot.lane.b32.xlu0 %v1871, 96
    %v1883 = vpop.permute.xlu0 %1882
    %1884 = vrot.lane.b32.xlu0 %v1873, 96
    %v1885 = vpop.permute.xlu0 %1884
    %1886 = vrot.lane.b32.xlu0 %v1875, 96
    %v1887 = vpop.permute.xlu0 %1886
    %1888 = vrot.lane.b32.xlu0 %v1877, 96
    %v1889 = vpop.permute.xlu0 %1888
    %v1894 = vmul.f32 %v1850, %v1883
    %v1895 = vmul.f32 %v1851, %v1885
    %v1896 = vmul.f32 %v1852, %v1887
    %v1897 = vmul.f32 %v1853, %v1889
    %s1898 = scalar_lea.vmem %s7, 32
    %v1899 = vld [vmem:[%s1898] sm:$0xff]
    %v1900 = vld [vmem:[%s1898 + $0x8] sm:$0xff]
    %v1901 = vld [vmem:[%s1898 + $0x10] sm:$0xff]
    %v1902 = vld [vmem:[%s1898 + $0x18] sm:$0xff]
    %v1904 = vsel %vm310, %v1894, 0
    %v1907 = vsel %vm310, %v1895, 0
    %v1910 = vsel %vm310, %v1896, 0
    %v1913 = vsel %vm310, %v1897, 0
    %1915 = vmatprep.subr.mxu0 0.0
    %1916 = vmatpush1.msra.mxu0 0.0
    %1917 = vmatprep.subr.mxu0 0.0
    %1918 = vmatpush1.msra.mxu0 0.0
    %1919 = vmatprep.subr.mxu0 0.0
    %1920 = vmatpush1.msra.mxu0 0.0
    %1921 = vmatprep.subr.mxu0 0.0
    %1922 = vmatpush1.msra.mxu0 0.0
    %1923 = vmatprep.subr.mxu0 0.0
    %1924 = vmatpush1.msra.mxu0 0.0
    %1925 = vmatprep.subr.mxu0 0.0
    %1926 = vmatpush1.msra.mxu0 0.0
    %1927 = vmatprep.subr.mxu0 0.0
    %1928 = vmatpush1.msra.mxu0 0.0
    %1929 = vmatprep.subr.mxu0 0.0
    %1930 = vmatpush1.msra.mxu0 0.0
    %1931 = vmatprep.subr.mxu0 0.0
    %1932 = vmatpush1.msra.mxu0 0.0
    %1933 = vmatprep.subr.mxu0 0.0
    %1934 = vmatpush1.msra.mxu0 0.0
    %1935 = vmatprep.subr.mxu0 0.0
    %1936 = vmatpush1.msra.mxu0 0.0
    %1937 = vmatprep.subr.mxu0 0.0
    %1938 = vmatpush1.msra.mxu0 0.0
    %1939 = vmatprep.subr.mxu0 0.0
    %1940 = vmatpush1.msra.mxu0 %v1902
    %1941 = vmatprep.subr.mxu0 0.0
    %1942 = vmatpush1.msra.mxu0 %v1901
    %1943 = vmatprep.subr.mxu0 0.0
    %1944 = vmatpush1.msra.mxu0 %v1900
    %1945 = vmatprep.subr.mxu0 0.0
    %1946 = vmatpush1.msra.mxu0 %v1899
    %1947 = vmatprep.subr.mxu0 0.0
    %1948 = vmatpush2.msra.mxu0 0.0
    %1949 = vmatprep.subr.mxu0 0.0
    %1950 = vmatpush2.msra.mxu0 0.0
    %1951 = vmatprep.subr.mxu0 0.0
    %1952 = vmatpush2.msra.mxu0 0.0
    %1953 = vmatprep.subr.mxu0 0.0
    %1954 = vmatpush2.msra.mxu0 0.0
    %1955 = vmatprep.subr.mxu0 0.0
    %1956 = vmatpush2.msra.mxu0 0.0
    %1957 = vmatprep.subr.mxu0 0.0
    %1958 = vmatpush2.msra.mxu0 0.0
    %1959 = vmatprep.subr.mxu0 0.0
    %1960 = vmatpush2.msra.mxu0 0.0
    %1961 = vmatprep.subr.mxu0 0.0
    %1962 = vmatpush2.msra.mxu0 0.0
    %1963 = vmatprep.subr.mxu0 0.0
    %1964 = vmatpush2.msra.mxu0 0.0
    %1965 = vmatprep.subr.mxu0 0.0
    %1966 = vmatpush2.msra.mxu0 0.0
    %1967 = vmatprep.subr.mxu0 0.0
    %1968 = vmatpush2.msra.mxu0 0.0
    %1969 = vmatprep.subr.mxu0 0.0
    %1970 = vmatpush2.msra.mxu0 0.0
    %1971 = vmatprep.subr.mxu0 0.0
    %1972 = vmatpush2.msra.mxu0 0.0
    %1973 = vmatprep.subr.mxu0 0.0
    %1974 = vmatpush2.msra.mxu0 0.0
    %1975 = vmatprep.subr.mxu0 0.0
    %1976 = vmatpush2.msra.mxu0 0.0
    %1977 = vmatprep.subr.mxu0 0.0
    %1978 = vmatpush2.msra.mxu0 0.0
    %1979 = vmatprep.mubr.f32.mxu0 0.0
    %1980 = vmatmul.mubr.f32.gmra.mxu0 %v1904
    %v1981 = vpop.f32.mrf.mxu0
    %v1982 = vadd.f32 0.0, %v1981
    %v1983 = vpop.f32.mrf.mxu0
    %1984 = vmatprep.mubr.f32.mxu0 0.0
    %1985 = vmatmul.mubr.f32.gmra.mxu0 %v1907
    %v1986 = vpop.f32.mrf.mxu0
    %v1987 = vadd.f32 0.0, %v1986
    %v1988 = vpop.f32.mrf.mxu0
    %1989 = vmatprep.mubr.f32.mxu0 0.0
    %1990 = vmatmul.mubr.f32.gmra.mxu0 %v1910
    %v1991 = vpop.f32.mrf.mxu0
    %v1992 = vadd.f32 0.0, %v1991
    %v1993 = vpop.f32.mrf.mxu0
    %1994 = vmatprep.mubr.f32.mxu0 0.0
    %1995 = vmatmul.mubr.f32.gmra.mxu0 %v1913
    %v1996 = vpop.f32.mrf.mxu0
    %v1997 = vadd.f32 0.0, %v1996
    %v1998 = vpop.f32.mrf.mxu0
    %1999 = vdwg.mxu0
    %v2000 = vadd.f32 %v1243, %v1982
    %v2001 = vadd.f32 %v1244, %v1987
    %v2002 = vadd.f32 %v1245, %v1992
    %v2003 = vadd.f32 %v1246, %v1997
    %s2004 = scalar_lea.vmem [#allocation9], 1
    %v2005 = vld [vmem:[%s2004] sm:$0x1]
    %v2007 = vlaneseq
    %v2008 = vshrl.u32 %v2007, 7
    %v2009 = vsub.s32 0, %v2008
    %v2010 = vrot.slane %v2005, %v2009
    %v2012 = vadd.f32 %v2000, %v2010
    %v2013 = vadd.f32 %v2001, %v2010
    %v2014 = vadd.f32 %v2002, %v2010
    %v2015 = vadd.f32 %v2003, %v2010
    %v2016 = vmul.f32 %v2012, %v289
    %v2017 = vmul.f32 %v2013, %v294
    %v2018 = vmul.f32 %v2014, %v299
    %v2019 = vmul.f32 %v2015, %v304
    %2020 = vst.msk [vmem:[#allocation2] sm:$0xff] %vm310, %v2016
    %2021 = vst.msk [vmem:[#allocation2 + $0x8] sm:$0xff] %vm310, %v2017
    %2022 = vst.msk [vmem:[#allocation2 + $0x10] sm:$0xff] %vm310, %v2018
    %2023 = vst.msk [vmem:[#allocation2 + $0x18] sm:$0xff] %vm310, %v2019
    %v2024 = vld [vmem:[#allocation3] sm:$0xff]
    %v2025 = vld [vmem:[#allocation3 + $0x8] sm:$0xff]
    %v2026 = vld [vmem:[#allocation3 + $0x10] sm:$0xff]
    %v2027 = vld [vmem:[#allocation3 + $0x18] sm:$0xff]
    %s2028 = scalar_lea.vmem %s8, 32
    %v2029 = vld [vmem:[%s2028] sm:$0xff]
    %v2030 = vld [vmem:[%s2028 + $0x8] sm:$0xff]
    %v2031 = vld [vmem:[%s2028 + $0x10] sm:$0xff]
    %v2032 = vld [vmem:[%s2028 + $0x18] sm:$0xff]
    %2033 = vmatprep.subr.mxu0 0.0
    %2034 = vmatpush1.msra.mxu0 0.0
    %2035 = vmatprep.subr.mxu0 0.0
    %2036 = vmatpush1.msra.mxu0 0.0
    %2037 = vmatprep.subr.mxu0 0.0
    %2038 = vmatpush1.msra.mxu0 0.0
    %2039 = vmatprep.subr.mxu0 0.0
    %2040 = vmatpush1.msra.mxu0 0.0
    %2041 = vmatprep.subr.mxu0 0.0
    %2042 = vmatpush1.msra.mxu0 0.0
    %2043 = vmatprep.subr.mxu0 0.0
    %2044 = vmatpush1.msra.mxu0 0.0
    %2045 = vmatprep.subr.mxu0 0.0
    %2046 = vmatpush1.msra.mxu0 0.0
    %2047 = vmatprep.subr.mxu0 0.0
    %2048 = vmatpush1.msra.mxu0 0.0
    %2049 = vmatprep.subr.mxu0 0.0
    %2050 = vmatpush1.msra.mxu0 0.0
    %2051 = vmatprep.subr.mxu0 0.0
    %2052 = vmatpush1.msra.mxu0 0.0
    %2053 = vmatprep.subr.mxu0 0.0
    %2054 = vmatpush1.msra.mxu0 0.0
    %2055 = vmatprep.subr.mxu0 0.0
    %2056 = vmatpush1.msra.mxu0 0.0
    %2057 = vmatprep.subr.mxu0 0.0
    %2058 = vmatpush1.msra.mxu0 %v2032
    %2059 = vmatprep.subr.mxu0 0.0
    %2060 = vmatpush1.msra.mxu0 %v2031
    %2061 = vmatprep.subr.mxu0 0.0
    %2062 = vmatpush1.msra.mxu0 %v2030
    %2063 = vmatprep.subr.mxu0 0.0
    %2064 = vmatpush1.msra.mxu0 %v2029
    %2065 = vmatprep.subr.mxu0 0.0
    %2066 = vmatpush2.msra.mxu0 0.0
    %2067 = vmatprep.subr.mxu0 0.0
    %2068 = vmatpush2.msra.mxu0 0.0
    %2069 = vmatprep.subr.mxu0 0.0
    %2070 = vmatpush2.msra.mxu0 0.0
    %2071 = vmatprep.subr.mxu0 0.0
    %2072 = vmatpush2.msra.mxu0 0.0
    %2073 = vmatprep.subr.mxu0 0.0
    %2074 = vmatpush2.msra.mxu0 0.0
    %2075 = vmatprep.subr.mxu0 0.0
    %2076 = vmatpush2.msra.mxu0 0.0
    %2077 = vmatprep.subr.mxu0 0.0
    %2078 = vmatpush2.msra.mxu0 0.0
    %2079 = vmatprep.subr.mxu0 0.0
    %2080 = vmatpush2.msra.mxu0 0.0
    %2081 = vmatprep.subr.mxu0 0.0
    %2082 = vmatpush2.msra.mxu0 0.0
    %2083 = vmatprep.subr.mxu0 0.0
    %2084 = vmatpush2.msra.mxu0 0.0
    %2085 = vmatprep.subr.mxu0 0.0
    %2086 = vmatpush2.msra.mxu0 0.0
    %2087 = vmatprep.subr.mxu0 0.0
    %2088 = vmatpush2.msra.mxu0 0.0
    %2089 = vmatprep.subr.mxu0 0.0
    %2090 = vmatpush2.msra.mxu0 0.0
    %2091 = vmatprep.subr.mxu0 0.0
    %2092 = vmatpush2.msra.mxu0 0.0
    %2093 = vmatprep.subr.mxu0 0.0
    %2094 = vmatpush2.msra.mxu0 0.0
    %2095 = vmatprep.subr.mxu0 0.0
    %2096 = vmatpush2.msra.mxu0 0.0
    %2097 = vmatprep.mubr.f32.mxu0 0.0
    %2098 = vmatmul.mubr.f32.gmra.mxu0 %v1904
    %v2099 = vpop.f32.mrf.mxu0
    %v2100 = vadd.f32 0.0, %v2099
    %v2101 = vpop.f32.mrf.mxu0
    %2102 = vmatprep.mubr.f32.mxu0 0.0
    %2103 = vmatmul.mubr.f32.gmra.mxu0 %v1907
    %v2104 = vpop.f32.mrf.mxu0
    %v2105 = vadd.f32 0.0, %v2104
    %v2106 = vpop.f32.mrf.mxu0
    %2107 = vmatprep.mubr.f32.mxu0 0.0
    %2108 = vmatmul.mubr.f32.gmra.mxu0 %v1910
    %v2109 = vpop.f32.mrf.mxu0
    %v2110 = vadd.f32 0.0, %v2109
    %v2111 = vpop.f32.mrf.mxu0
    %2112 = vmatprep.mubr.f32.mxu0 0.0
    %2113 = vmatmul.mubr.f32.gmra.mxu0 %v1913
    %v2114 = vpop.f32.mrf.mxu0
    %v2115 = vadd.f32 0.0, %v2114
    %v2116 = vpop.f32.mrf.mxu0
    %2117 = vdwg.mxu0
    %v2118 = vadd.f32 %v2024, %v2100
    %v2119 = vadd.f32 %v2025, %v2105
    %v2120 = vadd.f32 %v2026, %v2110
    %v2121 = vadd.f32 %v2027, %v2115
    %s2122 = scalar_lea.vmem [#allocation11], 1
    %v2123 = vld [vmem:[%s2122] sm:$0x1]
    %v2125 = vlaneseq
    %v2126 = vshrl.u32 %v2125, 7
    %v2127 = vsub.s32 0, %v2126
    %v2128 = vrot.slane %v2123, %v2127
    %v2130 = vadd.f32 %v2118, %v2128
    %v2131 = vadd.f32 %v2119, %v2128
    %v2132 = vadd.f32 %v2120, %v2128
    %v2133 = vadd.f32 %v2121, %v2128
    %2134 = vst.msk [vmem:[#allocation3] sm:$0xff] %vm310, %v2130
    %2135 = vst.msk [vmem:[#allocation3 + $0x8] sm:$0xff] %vm310, %v2131
    %2136 = vst.msk [vmem:[#allocation3 + $0x10] sm:$0xff] %vm310, %v2132
    %2137 = vst.msk [vmem:[#allocation3 + $0x18] sm:$0xff] %vm310, %v2133
    %v2138 = vld [vmem:[#allocation2] sm:$0xff]
    %v2139 = vld [vmem:[#allocation2 + $0x8] sm:$0xff]
    %v2140 = vld [vmem:[#allocation2 + $0x10] sm:$0xff]
    %v2141 = vld [vmem:[#allocation2 + $0x18] sm:$0xff]
    %s2142 = scalar_lea.vmem [#allocation8], 2
    %v2143 = vld [vmem:[%s2142] sm:$0x1]
    %v2145 = vlaneseq
    %v2146 = vshrl.u32 %v2145, 7
    %v2147 = vsub.s32 0, %v2146
    %v2148 = vrot.slane %v2143, %v2147
    %vm2150 = vcmp.ge.s32.totalorder %v172, 8
    %vm2151 = vcmp.ge.s32.totalorder %v173, 8
    %vm2152 = vcmp.ge.s32.totalorder %v174, 8
    %vm2153 = vcmp.ge.s32.totalorder %v175, 8
    %v2154 = vsel %vm2150, 1, 0
    %v2155 = vsel %vm2151, 1, 0
    %v2156 = vsel %vm2152, 1, 0
    %v2157 = vsel %vm2153, 1, 0
    %vm2158 = vcmp.eq.s32.totalorder %v2154, 1
    %vm2159 = vcmp.eq.s32.totalorder %v2155, 1
    %vm2160 = vcmp.eq.s32.totalorder %v2156, 1
    %vm2161 = vcmp.eq.s32.totalorder %v2157, 1
    %v2162 = vsel %vm2158, %v2141, 0.0
    %v2163 = vsel %vm2159, %v2138, 0.0
    %v2164 = vsel %vm2160, %v2139, 0.0
    %v2165 = vsel %vm2161, %v2140, 0.0
    %s2166 = scalar_lea.vmem [#allocation6], 320
    %v2167 = vld [vmem:[%s2166] sm:$0xff]
    %v2168 = vld [vmem:[%s2166 + $0x8] sm:$0xff]
    %v2169 = vld [vmem:[%s2166 + $0x10] sm:$0xff]
    %v2170 = vld [vmem:[%s2166 + $0x18] sm:$0xff]
    %v2172 = vsel %vm310, %v2162, 0
    %v2175 = vsel %vm310, %v2163, 0
    %v2178 = vsel %vm310, %v2164, 0
    %v2181 = vsel %vm310, %v2165, 0
    %2183 = vmatprep.subr.mxu0 0.0
    %2184 = vmatpush1.msra.mxu0 0.0
    %2185 = vmatprep.subr.mxu0 0.0
    %2186 = vmatpush1.msra.mxu0 0.0
    %2187 = vmatprep.subr.mxu0 0.0
    %2188 = vmatpush1.msra.mxu0 0.0
    %2189 = vmatprep.subr.mxu0 0.0
    %2190 = vmatpush1.msra.mxu0 0.0
    %2191 = vmatprep.subr.mxu0 0.0
    %2192 = vmatpush1.msra.mxu0 0.0
    %2193 = vmatprep.subr.mxu0 0.0
    %2194 = vmatpush1.msra.mxu0 0.0
    %2195 = vmatprep.subr.mxu0 0.0
    %2196 = vmatpush1.msra.mxu0 0.0
    %2197 = vmatprep.subr.mxu0 0.0
    %2198 = vmatpush1.msra.mxu0 0.0
    %2199 = vmatprep.subr.mxu0 0.0
    %2200 = vmatpush1.msra.mxu0 0.0
    %2201 = vmatprep.subr.mxu0 0.0
    %2202 = vmatpush1.msra.mxu0 0.0
    %2203 = vmatprep.subr.mxu0 0.0
    %2204 = vmatpush1.msra.mxu0 0.0
    %2205 = vmatprep.subr.mxu0 0.0
    %2206 = vmatpush1.msra.mxu0 0.0
    %2207 = vmatprep.subr.mxu0 0.0
    %2208 = vmatpush1.msra.mxu0 %v2170
    %2209 = vmatprep.subr.mxu0 0.0
    %2210 = vmatpush1.msra.mxu0 %v2169
    %2211 = vmatprep.subr.mxu0 0.0
    %2212 = vmatpush1.msra.mxu0 %v2168
    %2213 = vmatprep.subr.mxu0 0.0
    %2214 = vmatpush1.msra.mxu0 %v2167
    %2215 = vmatprep.subr.mxu0 0.0
    %2216 = vmatpush2.msra.mxu0 0.0
    %2217 = vmatprep.subr.mxu0 0.0
    %2218 = vmatpush2.msra.mxu0 0.0
    %2219 = vmatprep.subr.mxu0 0.0
    %2220 = vmatpush2.msra.mxu0 0.0
    %2221 = vmatprep.subr.mxu0 0.0
    %2222 = vmatpush2.msra.mxu0 0.0
    %2223 = vmatprep.subr.mxu0 0.0
    %2224 = vmatpush2.msra.mxu0 0.0
    %2225 = vmatprep.subr.mxu0 0.0
    %2226 = vmatpush2.msra.mxu0 0.0
    %2227 = vmatprep.subr.mxu0 0.0
    %2228 = vmatpush2.msra.mxu0 0.0
    %2229 = vmatprep.subr.mxu0 0.0
    %2230 = vmatpush2.msra.mxu0 0.0
    %2231 = vmatprep.subr.mxu0 0.0
    %2232 = vmatpush2.msra.mxu0 0.0
    %2233 = vmatprep.subr.mxu0 0.0
    %2234 = vmatpush2.msra.mxu0 0.0
    %2235 = vmatprep.subr.mxu0 0.0
    %2236 = vmatpush2.msra.mxu0 0.0
    %2237 = vmatprep.subr.mxu0 0.0
    %2238 = vmatpush2.msra.mxu0 0.0
    %2239 = vmatprep.subr.mxu0 0.0
    %2240 = vmatpush2.msra.mxu0 0.0
    %2241 = vmatprep.subr.mxu0 0.0
    %2242 = vmatpush2.msra.mxu0 0.0
    %2243 = vmatprep.subr.mxu0 0.0
    %2244 = vmatpush2.msra.mxu0 0.0
    %2245 = vmatprep.subr.mxu0 0.0
    %2246 = vmatpush2.msra.mxu0 0.0
    %2247 = vmatprep.mubr.f32.mxu0 0.0
    %2248 = vmatmul.mubr.f32.gmra.mxu0 %v2172
    %v2249 = vpop.f32.mrf.mxu0
    %v2250 = vadd.f32 0.0, %v2249
    %v2251 = vpop.f32.mrf.mxu0
    %2252 = vmatprep.mubr.f32.mxu0 0.0
    %2253 = vmatmul.mubr.f32.gmra.mxu0 %v2175
    %v2254 = vpop.f32.mrf.mxu0
    %v2255 = vadd.f32 0.0, %v2254
    %v2256 = vpop.f32.mrf.mxu0
    %2257 = vmatprep.mubr.f32.mxu0 0.0
    %2258 = vmatmul.mubr.f32.gmra.mxu0 %v2178
    %v2259 = vpop.f32.mrf.mxu0
    %v2260 = vadd.f32 0.0, %v2259
    %v2261 = vpop.f32.mrf.mxu0
    %2262 = vmatprep.mubr.f32.mxu0 0.0
    %2263 = vmatmul.mubr.f32.gmra.mxu0 %v2181
    %v2264 = vpop.f32.mrf.mxu0
    %v2265 = vadd.f32 0.0, %v2264
    %v2266 = vpop.f32.mrf.mxu0
    %2267 = vdwg.mxu0
    %v2268 = vadd.f32 %v2148, %v2250
    %v2269 = vadd.f32 %v2148, %v2255
    %v2270 = vadd.f32 %v2148, %v2260
    %v2271 = vadd.f32 %v2148, %v2265
    %v2272 = vrot.slane %v2138, 4
    %v2273 = vrot.slane %v2139, 4
    %v2274 = vrot.slane %v2140, 4
    %v2275 = vrot.slane %v2141, 4
    %v2276 = vsel %vm1259, %v2274, %v2275
    %v2277 = vsel %vm1259, %v2273, %v2274
    %v2278 = vsel %vm1259, %v2272, %v2273
    %v2279 = vsel %vm1259, %v2275, %v2272
    %v2280 = vsel %vm1272, %v2279, 0.0
    %v2281 = vsel %vm1273, %v2278, 0.0
    %v2282 = vsel %vm1274, %v2277, 0.0
    %v2283 = vsel %vm1275, %v2276, 0.0
    %s2284 = scalar_lea.vmem [#allocation6], 352
    %v2285 = vld [vmem:[%s2284] sm:$0xff]
    %v2286 = vld [vmem:[%s2284 + $0x8] sm:$0xff]
    %v2287 = vld [vmem:[%s2284 + $0x10] sm:$0xff]
    %v2288 = vld [vmem:[%s2284 + $0x18] sm:$0xff]
    %v2290 = vsel %vm310, %v2280, 0
    %v2293 = vsel %vm310, %v2281, 0
    %v2296 = vsel %vm310, %v2282, 0
    %v2299 = vsel %vm310, %v2283, 0
    %2301 = vmatprep.subr.mxu0 0.0
    %2302 = vmatpush1.msra.mxu0 0.0
    %2303 = vmatprep.subr.mxu0 0.0
    %2304 = vmatpush1.msra.mxu0 0.0
    %2305 = vmatprep.subr.mxu0 0.0
    %2306 = vmatpush1.msra.mxu0 0.0
    %2307 = vmatprep.subr.mxu0 0.0
    %2308 = vmatpush1.msra.mxu0 0.0
    %2309 = vmatprep.subr.mxu0 0.0
    %2310 = vmatpush1.msra.mxu0 0.0
    %2311 = vmatprep.subr.mxu0 0.0
    %2312 = vmatpush1.msra.mxu0 0.0
    %2313 = vmatprep.subr.mxu0 0.0
    %2314 = vmatpush1.msra.mxu0 0.0
    %2315 = vmatprep.subr.mxu0 0.0
    %2316 = vmatpush1.msra.mxu0 0.0
    %2317 = vmatprep.subr.mxu0 0.0
    %2318 = vmatpush1.msra.mxu0 0.0
    %2319 = vmatprep.subr.mxu0 0.0
    %2320 = vmatpush1.msra.mxu0 0.0
    %2321 = vmatprep.subr.mxu0 0.0
    %2322 = vmatpush1.msra.mxu0 0.0
    %2323 = vmatprep.subr.mxu0 0.0
    %2324 = vmatpush1.msra.mxu0 0.0
    %2325 = vmatprep.subr.mxu0 0.0
    %2326 = vmatpush1.msra.mxu0 %v2288
    %2327 = vmatprep.subr.mxu0 0.0
    %2328 = vmatpush1.msra.mxu0 %v2287
    %2329 = vmatprep.subr.mxu0 0.0
    %2330 = vmatpush1.msra.mxu0 %v2286
    %2331 = vmatprep.subr.mxu0 0.0
    %2332 = vmatpush1.msra.mxu0 %v2285
    %2333 = vmatprep.subr.mxu0 0.0
    %2334 = vmatpush2.msra.mxu0 0.0
    %2335 = vmatprep.subr.mxu0 0.0
    %2336 = vmatpush2.msra.mxu0 0.0
    %2337 = vmatprep.subr.mxu0 0.0
    %2338 = vmatpush2.msra.mxu0 0.0
    %2339 = vmatprep.subr.mxu0 0.0
    %2340 = vmatpush2.msra.mxu0 0.0
    %2341 = vmatprep.subr.mxu0 0.0
    %2342 = vmatpush2.msra.mxu0 0.0
    %2343 = vmatprep.subr.mxu0 0.0
    %2344 = vmatpush2.msra.mxu0 0.0
    %2345 = vmatprep.subr.mxu0 0.0
    %2346 = vmatpush2.msra.mxu0 0.0
    %2347 = vmatprep.subr.mxu0 0.0
    %2348 = vmatpush2.msra.mxu0 0.0
    %2349 = vmatprep.subr.mxu0 0.0
    %2350 = vmatpush2.msra.mxu0 0.0
    %2351 = vmatprep.subr.mxu0 0.0
    %2352 = vmatpush2.msra.mxu0 0.0
    %2353 = vmatprep.subr.mxu0 0.0
    %2354 = vmatpush2.msra.mxu0 0.0
    %2355 = vmatprep.subr.mxu0 0.0
    %2356 = vmatpush2.msra.mxu0 0.0
    %2357 = vmatprep.subr.mxu0 0.0
    %2358 = vmatpush2.msra.mxu0 0.0
    %2359 = vmatprep.subr.mxu0 0.0
    %2360 = vmatpush2.msra.mxu0 0.0
    %2361 = vmatprep.subr.mxu0 0.0
    %2362 = vmatpush2.msra.mxu0 0.0
    %2363 = vmatprep.subr.mxu0 0.0
    %2364 = vmatpush2.msra.mxu0 0.0
    %2365 = vmatprep.mubr.f32.mxu0 0.0
    %2366 = vmatmul.mubr.f32.gmra.mxu0 %v2290
    %v2367 = vpop.f32.mrf.mxu0
    %v2368 = vadd.f32 0.0, %v2367
    %v2369 = vpop.f32.mrf.mxu0
    %2370 = vmatprep.mubr.f32.mxu0 0.0
    %2371 = vmatmul.mubr.f32.gmra.mxu0 %v2293
    %v2372 = vpop.f32.mrf.mxu0
    %v2373 = vadd.f32 0.0, %v2372
    %v2374 = vpop.f32.mrf.mxu0
    %2375 = vmatprep.mubr.f32.mxu0 0.0
    %2376 = vmatmul.mubr.f32.gmra.mxu0 %v2296
    %v2377 = vpop.f32.mrf.mxu0
    %v2378 = vadd.f32 0.0, %v2377
    %v2379 = vpop.f32.mrf.mxu0
    %2380 = vmatprep.mubr.f32.mxu0 0.0
    %2381 = vmatmul.mubr.f32.gmra.mxu0 %v2299
    %v2382 = vpop.f32.mrf.mxu0
    %v2383 = vadd.f32 0.0, %v2382
    %v2384 = vpop.f32.mrf.mxu0
    %2385 = vdwg.mxu0
    %v2386 = vadd.f32 %v2268, %v2368
    %v2387 = vadd.f32 %v2269, %v2373
    %v2388 = vadd.f32 %v2270, %v2378
    %v2389 = vadd.f32 %v2271, %v2383
    %s2390 = scalar_lea.vmem [#allocation6], 384
    %v2391 = vld [vmem:[%s2390] sm:$0xff]
    %v2392 = vld [vmem:[%s2390 + $0x8] sm:$0xff]
    %v2393 = vld [vmem:[%s2390 + $0x10] sm:$0xff]
    %v2394 = vld [vmem:[%s2390 + $0x18] sm:$0xff]
    %v2396 = vsel %vm310, %v2138, 0
    %v2399 = vsel %vm310, %v2139, 0
    %v2402 = vsel %vm310, %v2140, 0
    %v2405 = vsel %vm310, %v2141, 0
    %2407 = vmatprep.subr.mxu0 0.0
    %2408 = vmatpush1.msra.mxu0 0.0
    %2409 = vmatprep.subr.mxu0 0.0
    %2410 = vmatpush1.msra.mxu0 0.0
    %2411 = vmatprep.subr.mxu0 0.0
    %2412 = vmatpush1.msra.mxu0 0.0
    %2413 = vmatprep.subr.mxu0 0.0
    %2414 = vmatpush1.msra.mxu0 0.0
    %2415 = vmatprep.subr.mxu0 0.0
    %2416 = vmatpush1.msra.mxu0 0.0
    %2417 = vmatprep.subr.mxu0 0.0
    %2418 = vmatpush1.msra.mxu0 0.0
    %2419 = vmatprep.subr.mxu0 0.0
    %2420 = vmatpush1.msra.mxu0 0.0
    %2421 = vmatprep.subr.mxu0 0.0
    %2422 = vmatpush1.msra.mxu0 0.0
    %2423 = vmatprep.subr.mxu0 0.0
    %2424 = vmatpush1.msra.mxu0 0.0
    %2425 = vmatprep.subr.mxu0 0.0
    %2426 = vmatpush1.msra.mxu0 0.0
    %2427 = vmatprep.subr.mxu0 0.0
    %2428 = vmatpush1.msra.mxu0 0.0
    %2429 = vmatprep.subr.mxu0 0.0
    %2430 = vmatpush1.msra.mxu0 0.0
    %2431 = vmatprep.subr.mxu0 0.0
    %2432 = vmatpush1.msra.mxu0 %v2394
    %2433 = vmatprep.subr.mxu0 0.0
    %2434 = vmatpush1.msra.mxu0 %v2393
    %2435 = vmatprep.subr.mxu0 0.0
    %2436 = vmatpush1.msra.mxu0 %v2392
    %2437 = vmatprep.subr.mxu0 0.0
    %2438 = vmatpush1.msra.mxu0 %v2391
    %2439 = vmatprep.subr.mxu0 0.0
    %2440 = vmatpush2.msra.mxu0 0.0
    %2441 = vmatprep.subr.mxu0 0.0
    %2442 = vmatpush2.msra.mxu0 0.0
    %2443 = vmatprep.subr.mxu0 0.0
    %2444 = vmatpush2.msra.mxu0 0.0
    %2445 = vmatprep.subr.mxu0 0.0
    %2446 = vmatpush2.msra.mxu0 0.0
    %2447 = vmatprep.subr.mxu0 0.0
    %2448 = vmatpush2.msra.mxu0 0.0
    %2449 = vmatprep.subr.mxu0 0.0
    %2450 = vmatpush2.msra.mxu0 0.0
    %2451 = vmatprep.subr.mxu0 0.0
    %2452 = vmatpush2.msra.mxu0 0.0
    %2453 = vmatprep.subr.mxu0 0.0
    %2454 = vmatpush2.msra.mxu0 0.0
    %2455 = vmatprep.subr.mxu0 0.0
    %2456 = vmatpush2.msra.mxu0 0.0
    %2457 = vmatprep.subr.mxu0 0.0
    %2458 = vmatpush2.msra.mxu0 0.0
    %2459 = vmatprep.subr.mxu0 0.0
    %2460 = vmatpush2.msra.mxu0 0.0
    %2461 = vmatprep.subr.mxu0 0.0
    %2462 = vmatpush2.msra.mxu0 0.0
    %2463 = vmatprep.subr.mxu0 0.0
    %2464 = vmatpush2.msra.mxu0 0.0
    %2465 = vmatprep.subr.mxu0 0.0
    %2466 = vmatpush2.msra.mxu0 0.0
    %2467 = vmatprep.subr.mxu0 0.0
    %2468 = vmatpush2.msra.mxu0 0.0
    %2469 = vmatprep.subr.mxu0 0.0
    %2470 = vmatpush2.msra.mxu0 0.0
    %2471 = vmatprep.mubr.f32.mxu0 0.0
    %2472 = vmatmul.mubr.f32.gmra.mxu0 %v2396
    %v2473 = vpop.f32.mrf.mxu0
    %v2474 = vadd.f32 0.0, %v2473
    %v2475 = vpop.f32.mrf.mxu0
    %2476 = vmatprep.mubr.f32.mxu0 0.0
    %2477 = vmatmul.mubr.f32.gmra.mxu0 %v2399
    %v2478 = vpop.f32.mrf.mxu0
    %v2479 = vadd.f32 0.0, %v2478
    %v2480 = vpop.f32.mrf.mxu0
    %2481 = vmatprep.mubr.f32.mxu0 0.0
    %2482 = vmatmul.mubr.f32.gmra.mxu0 %v2402
    %v2483 = vpop.f32.mrf.mxu0
    %v2484 = vadd.f32 0.0, %v2483
    %v2485 = vpop.f32.mrf.mxu0
    %2486 = vmatprep.mubr.f32.mxu0 0.0
    %2487 = vmatmul.mubr.f32.gmra.mxu0 %v2405
    %v2488 = vpop.f32.mrf.mxu0
    %v2489 = vadd.f32 0.0, %v2488
    %v2490 = vpop.f32.mrf.mxu0
    %2491 = vdwg.mxu0
    %v2492 = vadd.f32 %v2386, %v2474
    %v2493 = vadd.f32 %v2387, %v2479
    %v2494 = vadd.f32 %v2388, %v2484
    %v2495 = vadd.f32 %v2389, %v2489
    %v2496 = vsel %vm1736, %v2278, 0.0
    %v2497 = vsel %vm1737, %v2277, 0.0
    %v2498 = vsel %vm1738, %v2276, 0.0
    %v2499 = vsel %vm1739, %v2279, 0.0
    %s2500 = scalar_lea.vmem [#allocation6], 416
    %v2501 = vld [vmem:[%s2500] sm:$0xff]
    %v2502 = vld [vmem:[%s2500 + $0x8] sm:$0xff]
    %v2503 = vld [vmem:[%s2500 + $0x10] sm:$0xff]
    %v2504 = vld [vmem:[%s2500 + $0x18] sm:$0xff]
    %v2506 = vsel %vm310, %v2496, 0
    %v2509 = vsel %vm310, %v2497, 0
    %v2512 = vsel %vm310, %v2498, 0
    %v2515 = vsel %vm310, %v2499, 0
    %2517 = vmatprep.subr.mxu0 0.0
    %2518 = vmatpush1.msra.mxu0 0.0
    %2519 = vmatprep.subr.mxu0 0.0
    %2520 = vmatpush1.msra.mxu0 0.0
    %2521 = vmatprep.subr.mxu0 0.0
    %2522 = vmatpush1.msra.mxu0 0.0
    %2523 = vmatprep.subr.mxu0 0.0
    %2524 = vmatpush1.msra.mxu0 0.0
    %2525 = vmatprep.subr.mxu0 0.0
    %2526 = vmatpush1.msra.mxu0 0.0
    %2527 = vmatprep.subr.mxu0 0.0
    %2528 = vmatpush1.msra.mxu0 0.0
    %2529 = vmatprep.subr.mxu0 0.0
    %2530 = vmatpush1.msra.mxu0 0.0
    %2531 = vmatprep.subr.mxu0 0.0
    %2532 = vmatpush1.msra.mxu0 0.0
    %2533 = vmatprep.subr.mxu0 0.0
    %2534 = vmatpush1.msra.mxu0 0.0
    %2535 = vmatprep.subr.mxu0 0.0
    %2536 = vmatpush1.msra.mxu0 0.0
    %2537 = vmatprep.subr.mxu0 0.0
    %2538 = vmatpush1.msra.mxu0 0.0
    %2539 = vmatprep.subr.mxu0 0.0
    %2540 = vmatpush1.msra.mxu0 0.0
    %2541 = vmatprep.subr.mxu0 0.0
    %2542 = vmatpush1.msra.mxu0 %v2504
    %2543 = vmatprep.subr.mxu0 0.0
    %2544 = vmatpush1.msra.mxu0 %v2503
    %2545 = vmatprep.subr.mxu0 0.0
    %2546 = vmatpush1.msra.mxu0 %v2502
    %2547 = vmatprep.subr.mxu0 0.0
    %2548 = vmatpush1.msra.mxu0 %v2501
    %2549 = vmatprep.subr.mxu0 0.0
    %2550 = vmatpush2.msra.mxu0 0.0
    %2551 = vmatprep.subr.mxu0 0.0
    %2552 = vmatpush2.msra.mxu0 0.0
    %2553 = vmatprep.subr.mxu0 0.0
    %2554 = vmatpush2.msra.mxu0 0.0
    %2555 = vmatprep.subr.mxu0 0.0
    %2556 = vmatpush2.msra.mxu0 0.0
    %2557 = vmatprep.subr.mxu0 0.0
    %2558 = vmatpush2.msra.mxu0 0.0
    %2559 = vmatprep.subr.mxu0 0.0
    %2560 = vmatpush2.msra.mxu0 0.0
    %2561 = vmatprep.subr.mxu0 0.0
    %2562 = vmatpush2.msra.mxu0 0.0
    %2563 = vmatprep.subr.mxu0 0.0
    %2564 = vmatpush2.msra.mxu0 0.0
    %2565 = vmatprep.subr.mxu0 0.0
    %2566 = vmatpush2.msra.mxu0 0.0
    %2567 = vmatprep.subr.mxu0 0.0
    %2568 = vmatpush2.msra.mxu0 0.0
    %2569 = vmatprep.subr.mxu0 0.0
    %2570 = vmatpush2.msra.mxu0 0.0
    %2571 = vmatprep.subr.mxu0 0.0
    %2572 = vmatpush2.msra.mxu0 0.0
    %2573 = vmatprep.subr.mxu0 0.0
    %2574 = vmatpush2.msra.mxu0 0.0
    %2575 = vmatprep.subr.mxu0 0.0
    %2576 = vmatpush2.msra.mxu0 0.0
    %2577 = vmatprep.subr.mxu0 0.0
    %2578 = vmatpush2.msra.mxu0 0.0
    %2579 = vmatprep.subr.mxu0 0.0
    %2580 = vmatpush2.msra.mxu0 0.0
    %2581 = vmatprep.mubr.f32.mxu0 0.0
    %2582 = vmatmul.mubr.f32.gmra.mxu0 %v2506
    %v2583 = vpop.f32.mrf.mxu0
    %v2584 = vadd.f32 0.0, %v2583
    %v2585 = vpop.f32.mrf.mxu0
    %2586 = vmatprep.mubr.f32.mxu0 0.0
    %2587 = vmatmul.mubr.f32.gmra.mxu0 %v2509
    %v2588 = vpop.f32.mrf.mxu0
    %v2589 = vadd.f32 0.0, %v2588
    %v2590 = vpop.f32.mrf.mxu0
    %2591 = vmatprep.mubr.f32.mxu0 0.0
    %2592 = vmatmul.mubr.f32.gmra.mxu0 %v2512
    %v2593 = vpop.f32.mrf.mxu0
    %v2594 = vadd.f32 0.0, %v2593
    %v2595 = vpop.f32.mrf.mxu0
    %2596 = vmatprep.mubr.f32.mxu0 0.0
    %2597 = vmatmul.mubr.f32.gmra.mxu0 %v2515
    %v2598 = vpop.f32.mrf.mxu0
    %v2599 = vadd.f32 0.0, %v2598
    %v2600 = vpop.f32.mrf.mxu0
    %2601 = vdwg.mxu0
    %v2602 = vadd.f32 %v2492, %v2584
    %v2603 = vadd.f32 %v2493, %v2589
    %v2604 = vadd.f32 %v2494, %v2594
    %v2605 = vadd.f32 %v2495, %v2599
    %vm2606 = vcmp.lt.s32.totalorder %v172, 8
    %vm2607 = vcmp.lt.s32.totalorder %v173, 8
    %vm2608 = vcmp.lt.s32.totalorder %v174, 8
    %vm2609 = vcmp.lt.s32.totalorder %v175, 8
    %v2610 = vsel %vm2606, 1, 0
    %v2611 = vsel %vm2607, 1, 0
    %v2612 = vsel %vm2608, 1, 0
    %v2613 = vsel %vm2609, 1, 0
    %vm2614 = vcmp.eq.s32.totalorder %v2610, 1
    %vm2615 = vcmp.eq.s32.totalorder %v2611, 1
    %vm2616 = vcmp.eq.s32.totalorder %v2612, 1
    %vm2617 = vcmp.eq.s32.totalorder %v2613, 1
    %v2618 = vsel %vm2614, %v2139, 0.0
    %v2619 = vsel %vm2615, %v2140, 0.0
    %v2620 = vsel %vm2616, %v2141, 0.0
    %v2621 = vsel %vm2617, %v2138, 0.0
    %s2622 = scalar_lea.vmem [#allocation6], 448
    %v2623 = vld [vmem:[%s2622] sm:$0xff]
    %v2624 = vld [vmem:[%s2622 + $0x8] sm:$0xff]
    %v2625 = vld [vmem:[%s2622 + $0x10] sm:$0xff]
    %v2626 = vld [vmem:[%s2622 + $0x18] sm:$0xff]
    %v2628 = vsel %vm310, %v2618, 0
    %v2631 = vsel %vm310, %v2619, 0
    %v2634 = vsel %vm310, %v2620, 0
    %v2637 = vsel %vm310, %v2621, 0
    %2639 = vmatprep.subr.mxu0 0.0
    %2640 = vmatpush1.msra.mxu0 0.0
    %2641 = vmatprep.subr.mxu0 0.0
    %2642 = vmatpush1.msra.mxu0 0.0
    %2643 = vmatprep.subr.mxu0 0.0
    %2644 = vmatpush1.msra.mxu0 0.0
    %2645 = vmatprep.subr.mxu0 0.0
    %2646 = vmatpush1.msra.mxu0 0.0
    %2647 = vmatprep.subr.mxu0 0.0
    %2648 = vmatpush1.msra.mxu0 0.0
    %2649 = vmatprep.subr.mxu0 0.0
    %2650 = vmatpush1.msra.mxu0 0.0
    %2651 = vmatprep.subr.mxu0 0.0
    %2652 = vmatpush1.msra.mxu0 0.0
    %2653 = vmatprep.subr.mxu0 0.0
    %2654 = vmatpush1.msra.mxu0 0.0
    %2655 = vmatprep.subr.mxu0 0.0
    %2656 = vmatpush1.msra.mxu0 0.0
    %2657 = vmatprep.subr.mxu0 0.0
    %2658 = vmatpush1.msra.mxu0 0.0
    %2659 = vmatprep.subr.mxu0 0.0
    %2660 = vmatpush1.msra.mxu0 0.0
    %2661 = vmatprep.subr.mxu0 0.0
    %2662 = vmatpush1.msra.mxu0 0.0
    %2663 = vmatprep.subr.mxu0 0.0
    %2664 = vmatpush1.msra.mxu0 %v2626
    %2665 = vmatprep.subr.mxu0 0.0
    %2666 = vmatpush1.msra.mxu0 %v2625
    %2667 = vmatprep.subr.mxu0 0.0
    %2668 = vmatpush1.msra.mxu0 %v2624
    %2669 = vmatprep.subr.mxu0 0.0
    %2670 = vmatpush1.msra.mxu0 %v2623
    %2671 = vmatprep.subr.mxu0 0.0
    %2672 = vmatpush2.msra.mxu0 0.0
    %2673 = vmatprep.subr.mxu0 0.0
    %2674 = vmatpush2.msra.mxu0 0.0
    %2675 = vmatprep.subr.mxu0 0.0
    %2676 = vmatpush2.msra.mxu0 0.0
    %2677 = vmatprep.subr.mxu0 0.0
    %2678 = vmatpush2.msra.mxu0 0.0
    %2679 = vmatprep.subr.mxu0 0.0
    %2680 = vmatpush2.msra.mxu0 0.0
    %2681 = vmatprep.subr.mxu0 0.0
    %2682 = vmatpush2.msra.mxu0 0.0
    %2683 = vmatprep.subr.mxu0 0.0
    %2684 = vmatpush2.msra.mxu0 0.0
    %2685 = vmatprep.subr.mxu0 0.0
    %2686 = vmatpush2.msra.mxu0 0.0
    %2687 = vmatprep.subr.mxu0 0.0
    %2688 = vmatpush2.msra.mxu0 0.0
    %2689 = vmatprep.subr.mxu0 0.0
    %2690 = vmatpush2.msra.mxu0 0.0
    %2691 = vmatprep.subr.mxu0 0.0
    %2692 = vmatpush2.msra.mxu0 0.0
    %2693 = vmatprep.subr.mxu0 0.0
    %2694 = vmatpush2.msra.mxu0 0.0
    %2695 = vmatprep.subr.mxu0 0.0
    %2696 = vmatpush2.msra.mxu0 0.0
    %2697 = vmatprep.subr.mxu0 0.0
    %2698 = vmatpush2.msra.mxu0 0.0
    %2699 = vmatprep.subr.mxu0 0.0
    %2700 = vmatpush2.msra.mxu0 0.0
    %2701 = vmatprep.subr.mxu0 0.0
    %2702 = vmatpush2.msra.mxu0 0.0
    %2703 = vmatprep.mubr.f32.mxu0 0.0
    %2704 = vmatmul.mubr.f32.gmra.mxu0 %v2628
    %v2705 = vpop.f32.mrf.mxu0
    %v2706 = vadd.f32 0.0, %v2705
    %v2707 = vpop.f32.mrf.mxu0
    %2708 = vmatprep.mubr.f32.mxu0 0.0
    %2709 = vmatmul.mubr.f32.gmra.mxu0 %v2631
    %v2710 = vpop.f32.mrf.mxu0
    %v2711 = vadd.f32 0.0, %v2710
    %v2712 = vpop.f32.mrf.mxu0
    %2713 = vmatprep.mubr.f32.mxu0 0.0
    %2714 = vmatmul.mubr.f32.gmra.mxu0 %v2634
    %v2715 = vpop.f32.mrf.mxu0
    %v2716 = vadd.f32 0.0, %v2715
    %v2717 = vpop.f32.mrf.mxu0
    %2718 = vmatprep.mubr.f32.mxu0 0.0
    %2719 = vmatmul.mubr.f32.gmra.mxu0 %v2637
    %v2720 = vpop.f32.mrf.mxu0
    %v2721 = vadd.f32 0.0, %v2720
    %v2722 = vpop.f32.mrf.mxu0
    %2723 = vdwg.mxu0
    %v2724 = vadd.f32 %v2602, %v2706
    %v2725 = vadd.f32 %v2603, %v2711
    %v2726 = vadd.f32 %v2604, %v2716
    %v2727 = vadd.f32 %v2605, %v2721
    %v2728 = vtanh.pop %v2724
    %v2729 = vtanh.pop %v2725
    %v2730 = vtanh.pop %v2726
    %v2731 = vtanh.pop %v2727
    %v2732 = vxor.u32 %v2724, 2147483648
    %v2733 = vxor.u32 %v2725, 2147483648
    %v2734 = vxor.u32 %v2726, 2147483648
    %v2735 = vxor.u32 %v2727, 2147483648
    %v2736 = vmul.f32 %v2732, 1.442695
    %v2737 = vpow.pop %v2736
    %v2738 = vmul.f32 %v2733, 1.442695
    %v2739 = vpow.pop %v2738
    %v2740 = vmul.f32 %v2734, 1.442695
    %v2741 = vpow.pop %v2740
    %v2742 = vmul.f32 %v2735, 1.442695
    %v2743 = vpow.pop %v2742
    %v2744 = vadd.f32 %v2737, 1.0
    %v2745 = vadd.f32 %v2739, 1.0
    %v2746 = vadd.f32 %v2741, 1.0
    %v2747 = vadd.f32 %v2743, 1.0
    %v2748 = vrcp.pop %v2744
    %v2749 = vmul.f32 1.0, %v2748
    %v2750 = vrcp.pop %v2745
    %v2751 = vmul.f32 1.0, %v2750
    %v2752 = vrcp.pop %v2746
    %v2753 = vmul.f32 1.0, %v2752
    %v2754 = vrcp.pop %v2747
    %v2755 = vmul.f32 1.0, %v2754
    %2760 = vrot.lane.b32.xlu0 %v2749, 96
    %v2761 = vpop.permute.xlu0 %2760
    %2762 = vrot.lane.b32.xlu0 %v2751, 96
    %v2763 = vpop.permute.xlu0 %2762
    %2764 = vrot.lane.b32.xlu0 %v2753, 96
    %v2765 = vpop.permute.xlu0 %2764
    %2766 = vrot.lane.b32.xlu0 %v2755, 96
    %v2767 = vpop.permute.xlu0 %2766
    %v2772 = vmul.f32 %v2728, %v2761
    %v2773 = vmul.f32 %v2729, %v2763
    %v2774 = vmul.f32 %v2730, %v2765
    %v2775 = vmul.f32 %v2731, %v2767
    %v2776 = vld [vmem:[#allocation3] sm:$0xff]
    %v2777 = vld [vmem:[#allocation3 + $0x8] sm:$0xff]
    %v2778 = vld [vmem:[#allocation3 + $0x10] sm:$0xff]
    %v2779 = vld [vmem:[#allocation3 + $0x18] sm:$0xff]
    %s2780 = scalar_lea.vmem %s7, 64
    %v2781 = vld [vmem:[%s2780] sm:$0xff]
    %v2782 = vld [vmem:[%s2780 + $0x8] sm:$0xff]
    %v2783 = vld [vmem:[%s2780 + $0x10] sm:$0xff]
    %v2784 = vld [vmem:[%s2780 + $0x18] sm:$0xff]
    %v2786 = vsel %vm310, %v2772, 0
    %v2789 = vsel %vm310, %v2773, 0
    %v2792 = vsel %vm310, %v2774, 0
    %v2795 = vsel %vm310, %v2775, 0
    %2797 = vmatprep.subr.mxu0 0.0
    %2798 = vmatpush1.msra.mxu0 0.0
    %2799 = vmatprep.subr.mxu0 0.0
    %2800 = vmatpush1.msra.mxu0 0.0
    %2801 = vmatprep.subr.mxu0 0.0
    %2802 = vmatpush1.msra.mxu0 0.0
    %2803 = vmatprep.subr.mxu0 0.0
    %2804 = vmatpush1.msra.mxu0 0.0
    %2805 = vmatprep.subr.mxu0 0.0
    %2806 = vmatpush1.msra.mxu0 0.0
    %2807 = vmatprep.subr.mxu0 0.0
    %2808 = vmatpush1.msra.mxu0 0.0
    %2809 = vmatprep.subr.mxu0 0.0
    %2810 = vmatpush1.msra.mxu0 0.0
    %2811 = vmatprep.subr.mxu0 0.0
    %2812 = vmatpush1.msra.mxu0 0.0
    %2813 = vmatprep.subr.mxu0 0.0
    %2814 = vmatpush1.msra.mxu0 0.0
    %2815 = vmatprep.subr.mxu0 0.0
    %2816 = vmatpush1.msra.mxu0 0.0
    %2817 = vmatprep.subr.mxu0 0.0
    %2818 = vmatpush1.msra.mxu0 0.0
    %2819 = vmatprep.subr.mxu0 0.0
    %2820 = vmatpush1.msra.mxu0 0.0
    %2821 = vmatprep.subr.mxu0 0.0
    %2822 = vmatpush1.msra.mxu0 %v2784
    %2823 = vmatprep.subr.mxu0 0.0
    %2824 = vmatpush1.msra.mxu0 %v2783
    %2825 = vmatprep.subr.mxu0 0.0
    %2826 = vmatpush1.msra.mxu0 %v2782
    %2827 = vmatprep.subr.mxu0 0.0
    %2828 = vmatpush1.msra.mxu0 %v2781
    %2829 = vmatprep.subr.mxu0 0.0
    %2830 = vmatpush2.msra.mxu0 0.0
    %2831 = vmatprep.subr.mxu0 0.0
    %2832 = vmatpush2.msra.mxu0 0.0
    %2833 = vmatprep.subr.mxu0 0.0
    %2834 = vmatpush2.msra.mxu0 0.0
    %2835 = vmatprep.subr.mxu0 0.0
    %2836 = vmatpush2.msra.mxu0 0.0
    %2837 = vmatprep.subr.mxu0 0.0
    %2838 = vmatpush2.msra.mxu0 0.0
    %2839 = vmatprep.subr.mxu0 0.0
    %2840 = vmatpush2.msra.mxu0 0.0
    %2841 = vmatprep.subr.mxu0 0.0
    %2842 = vmatpush2.msra.mxu0 0.0
    %2843 = vmatprep.subr.mxu0 0.0
    %2844 = vmatpush2.msra.mxu0 0.0
    %2845 = vmatprep.subr.mxu0 0.0
    %2846 = vmatpush2.msra.mxu0 0.0
    %2847 = vmatprep.subr.mxu0 0.0
    %2848 = vmatpush2.msra.mxu0 0.0
    %2849 = vmatprep.subr.mxu0 0.0
    %2850 = vmatpush2.msra.mxu0 0.0
    %2851 = vmatprep.subr.mxu0 0.0
    %2852 = vmatpush2.msra.mxu0 0.0
    %2853 = vmatprep.subr.mxu0 0.0
    %2854 = vmatpush2.msra.mxu0 0.0
    %2855 = vmatprep.subr.mxu0 0.0
    %2856 = vmatpush2.msra.mxu0 0.0
    %2857 = vmatprep.subr.mxu0 0.0
    %2858 = vmatpush2.msra.mxu0 0.0
    %2859 = vmatprep.subr.mxu0 0.0
    %2860 = vmatpush2.msra.mxu0 0.0
    %2861 = vmatprep.mubr.f32.mxu0 0.0
    %2862 = vmatmul.mubr.f32.gmra.mxu0 %v2786
    %v2863 = vpop.f32.mrf.mxu0
    %v2864 = vadd.f32 0.0, %v2863
    %v2865 = vpop.f32.mrf.mxu0
    %2866 = vmatprep.mubr.f32.mxu0 0.0
    %2867 = vmatmul.mubr.f32.gmra.mxu0 %v2789
    %v2868 = vpop.f32.mrf.mxu0
    %v2869 = vadd.f32 0.0, %v2868
    %v2870 = vpop.f32.mrf.mxu0
    %2871 = vmatprep.mubr.f32.mxu0 0.0
    %2872 = vmatmul.mubr.f32.gmra.mxu0 %v2792
    %v2873 = vpop.f32.mrf.mxu0
    %v2874 = vadd.f32 0.0, %v2873
    %v2875 = vpop.f32.mrf.mxu0
    %2876 = vmatprep.mubr.f32.mxu0 0.0
    %2877 = vmatmul.mubr.f32.gmra.mxu0 %v2795
    %v2878 = vpop.f32.mrf.mxu0
    %v2879 = vadd.f32 0.0, %v2878
    %v2880 = vpop.f32.mrf.mxu0
    %2881 = vdwg.mxu0
    %v2882 = vadd.f32 %v2776, %v2864
    %v2883 = vadd.f32 %v2777, %v2869
    %v2884 = vadd.f32 %v2778, %v2874
    %v2885 = vadd.f32 %v2779, %v2879
    %s2886 = scalar_lea.vmem [#allocation9], 2
    %v2887 = vld [vmem:[%s2886] sm:$0x1]
    %v2889 = vlaneseq
    %v2890 = vshrl.u32 %v2889, 7
    %v2891 = vsub.s32 0, %v2890
    %v2892 = vrot.slane %v2887, %v2891
    %v2894 = vadd.f32 %v2882, %v2892
    %v2895 = vadd.f32 %v2883, %v2892
    %v2896 = vadd.f32 %v2884, %v2892
    %v2897 = vadd.f32 %v2885, %v2892
    %2898 = vst.msk [vmem:[#allocation3] sm:$0xff] %vm310, %v2894
    %2899 = vst.msk [vmem:[#allocation3 + $0x8] sm:$0xff] %vm310, %v2895
    %2900 = vst.msk [vmem:[#allocation3 + $0x10] sm:$0xff] %vm310, %v2896
    %2901 = vst.msk [vmem:[#allocation3 + $0x18] sm:$0xff] %vm310, %v2897
    %v2902 = vld [vmem:[#allocation3] sm:$0xff]
    %v2903 = vld [vmem:[#allocation3 + $0x8] sm:$0xff]
    %v2904 = vld [vmem:[#allocation3 + $0x10] sm:$0xff]
    %v2905 = vld [vmem:[#allocation3 + $0x18] sm:$0xff]
    %v2906 = vmul.f32 %v2902, %v289
    %v2907 = vmul.f32 %v2903, %v294
    %v2908 = vmul.f32 %v2904, %v299
    %v2909 = vmul.f32 %v2905, %v304
    %v2910 = vld [vmem:[%s11] sm:$0xff]
    %v2911 = vld [vmem:[%s11 + $0x8] sm:$0xff]
    %v2912 = vld [vmem:[%s11 + $0x10] sm:$0xff]
    %v2913 = vld [vmem:[%s11 + $0x18] sm:$0xff]
    %v2914 = vld [vmem:[%s13] sm:$0x1]
    %v2916 = vlaneseq
    %v2917 = vshrl.u32 %v2916, 7
    %v2918 = vsub.s32 0, %v2917
    %v2919 = vrot.slane %v2914, %v2918
    %v2922 = vsel %vm310, %v2906, 0
    %v2925 = vsel %vm310, %v2907, 0
    %v2928 = vsel %vm310, %v2908, 0
    %v2931 = vsel %vm310, %v2909, 0
    %2933 = vmatprep.subr.mxu0 0.0
    %2934 = vmatpush1.msra.mxu0 0.0
    %2935 = vmatprep.subr.mxu0 0.0
    %2936 = vmatpush1.msra.mxu0 0.0
    %2937 = vmatprep.subr.mxu0 0.0
    %2938 = vmatpush1.msra.mxu0 0.0
    %2939 = vmatprep.subr.mxu0 0.0
    %2940 = vmatpush1.msra.mxu0 0.0
    %2941 = vmatprep.subr.mxu0 0.0
    %2942 = vmatpush1.msra.mxu0 0.0
    %2943 = vmatprep.subr.mxu0 0.0
    %2944 = vmatpush1.msra.mxu0 0.0
    %2945 = vmatprep.subr.mxu0 0.0
    %2946 = vmatpush1.msra.mxu0 0.0
    %2947 = vmatprep.subr.mxu0 0.0
    %2948 = vmatpush1.msra.mxu0 0.0
    %2949 = vmatprep.subr.mxu0 0.0
    %2950 = vmatpush1.msra.mxu0 0.0
    %2951 = vmatprep.subr.mxu0 0.0
    %2952 = vmatpush1.msra.mxu0 0.0
    %2953 = vmatprep.subr.mxu0 0.0
    %2954 = vmatpush1.msra.mxu0 0.0
    %2955 = vmatprep.subr.mxu0 0.0
    %2956 = vmatpush1.msra.mxu0 0.0
    %2957 = vmatprep.subr.mxu0 0.0
    %2958 = vmatpush1.msra.mxu0 %v2913
    %2959 = vmatprep.subr.mxu0 0.0
    %2960 = vmatpush1.msra.mxu0 %v2912
    %2961 = vmatprep.subr.mxu0 0.0
    %2962 = vmatpush1.msra.mxu0 %v2911
    %2963 = vmatprep.subr.mxu0 0.0
    %2964 = vmatpush1.msra.mxu0 %v2910
    %2965 = vmatprep.subr.mxu0 0.0
    %2966 = vmatpush2.msra.mxu0 0.0
    %2967 = vmatprep.subr.mxu0 0.0
    %2968 = vmatpush2.msra.mxu0 0.0
    %2969 = vmatprep.subr.mxu0 0.0
    %2970 = vmatpush2.msra.mxu0 0.0
    %2971 = vmatprep.subr.mxu0 0.0
    %2972 = vmatpush2.msra.mxu0 0.0
    %2973 = vmatprep.subr.mxu0 0.0
    %2974 = vmatpush2.msra.mxu0 0.0
    %2975 = vmatprep.subr.mxu0 0.0
    %2976 = vmatpush2.msra.mxu0 0.0
    %2977 = vmatprep.subr.mxu0 0.0
    %2978 = vmatpush2.msra.mxu0 0.0
    %2979 = vmatprep.subr.mxu0 0.0
    %2980 = vmatpush2.msra.mxu0 0.0
    %2981 = vmatprep.subr.mxu0 0.0
    %2982 = vmatpush2.msra.mxu0 0.0
    %2983 = vmatprep.subr.mxu0 0.0
    %2984 = vmatpush2.msra.mxu0 0.0
    %2985 = vmatprep.subr.mxu0 0.0
    %2986 = vmatpush2.msra.mxu0 0.0
    %2987 = vmatprep.subr.mxu0 0.0
    %2988 = vmatpush2.msra.mxu0 0.0
    %2989 = vmatprep.subr.mxu0 0.0
    %2990 = vmatpush2.msra.mxu0 0.0
    %2991 = vmatprep.subr.mxu0 0.0
    %2992 = vmatpush2.msra.mxu0 0.0
    %2993 = vmatprep.subr.mxu0 0.0
    %2994 = vmatpush2.msra.mxu0 0.0
    %2995 = vmatprep.subr.mxu0 0.0
    %2996 = vmatpush2.msra.mxu0 0.0
    %2997 = vmatprep.mubr.f32.mxu0 0.0
    %2998 = vmatmul.mubr.f32.gmra.mxu0 %v2922
    %v2999 = vpop.f32.mrf.mxu0
    %v3000 = vadd.f32 %v2919, %v2999
    %v3001 = vpop.f32.mrf.mxu0
    %3002 = vmatprep.mubr.f32.mxu0 0.0
    %3003 = vmatmul.mubr.f32.gmra.mxu0 %v2925
    %v3004 = vpop.f32.mrf.mxu0
    %v3005 = vadd.f32 %v2919, %v3004
    %v3006 = vpop.f32.mrf.mxu0
    %3007 = vmatprep.mubr.f32.mxu0 0.0
    %3008 = vmatmul.mubr.f32.gmra.mxu0 %v2928
    %v3009 = vpop.f32.mrf.mxu0
    %v3010 = vadd.f32 %v2919, %v3009
    %v3011 = vpop.f32.mrf.mxu0
    %3012 = vmatprep.mubr.f32.mxu0 0.0
    %3013 = vmatmul.mubr.f32.gmra.mxu0 %v2931
    %v3014 = vpop.f32.mrf.mxu0
    %v3015 = vadd.f32 %v2919, %v3014
    %v3016 = vpop.f32.mrf.mxu0
    %3017 = vdwg.mxu0
    %v3018 = vmul.f32 %v3000, %v289
    %v3019 = vmul.f32 %v3005, %v294
    %v3020 = vmul.f32 %v3010, %v299
    %v3021 = vmul.f32 %v3015, %v304
    %v3022 = vld [vmem:[%s12] sm:$0xff]
    %v3023 = vld [vmem:[%s12 + $0x8] sm:$0xff]
    %v3024 = vld [vmem:[%s12 + $0x10] sm:$0xff]
    %v3025 = vld [vmem:[%s12 + $0x18] sm:$0xff]
    %v3026 = vld [vmem:[%s14] sm:$0x1]
    %v3028 = vlaneseq
    %v3029 = vshrl.u32 %v3028, 7
    %v3030 = vsub.s32 0, %v3029
    %v3031 = vrot.slane %v3026, %v3030
    %3033 = vmatprep.subr.mxu0 0.0
    %3034 = vmatpush1.msra.mxu0 0.0
    %3035 = vmatprep.subr.mxu0 0.0
    %3036 = vmatpush1.msra.mxu0 0.0
    %3037 = vmatprep.subr.mxu0 0.0
    %3038 = vmatpush1.msra.mxu0 0.0
    %3039 = vmatprep.subr.mxu0 0.0
    %3040 = vmatpush1.msra.mxu0 0.0
    %3041 = vmatprep.subr.mxu0 0.0
    %3042 = vmatpush1.msra.mxu0 0.0
    %3043 = vmatprep.subr.mxu0 0.0
    %3044 = vmatpush1.msra.mxu0 0.0
    %3045 = vmatprep.subr.mxu0 0.0
    %3046 = vmatpush1.msra.mxu0 0.0
    %3047 = vmatprep.subr.mxu0 0.0
    %3048 = vmatpush1.msra.mxu0 0.0
    %3049 = vmatprep.subr.mxu0 0.0
    %3050 = vmatpush1.msra.mxu0 0.0
    %3051 = vmatprep.subr.mxu0 0.0
    %3052 = vmatpush1.msra.mxu0 0.0
    %3053 = vmatprep.subr.mxu0 0.0
    %3054 = vmatpush1.msra.mxu0 0.0
    %3055 = vmatprep.subr.mxu0 0.0
    %3056 = vmatpush1.msra.mxu0 0.0
    %3057 = vmatprep.subr.mxu0 0.0
    %3058 = vmatpush1.msra.mxu0 %v3025
    %3059 = vmatprep.subr.mxu0 0.0
    %3060 = vmatpush1.msra.mxu0 %v3024
    %3061 = vmatprep.subr.mxu0 0.0
    %3062 = vmatpush1.msra.mxu0 %v3023
    %3063 = vmatprep.subr.mxu0 0.0
    %3064 = vmatpush1.msra.mxu0 %v3022
    %3065 = vmatprep.subr.mxu0 0.0
    %3066 = vmatpush2.msra.mxu0 0.0
    %3067 = vmatprep.subr.mxu0 0.0
    %3068 = vmatpush2.msra.mxu0 0.0
    %3069 = vmatprep.subr.mxu0 0.0
    %3070 = vmatpush2.msra.mxu0 0.0
    %3071 = vmatprep.subr.mxu0 0.0
    %3072 = vmatpush2.msra.mxu0 0.0
    %3073 = vmatprep.subr.mxu0 0.0
    %3074 = vmatpush2.msra.mxu0 0.0
    %3075 = vmatprep.subr.mxu0 0.0
    %3076 = vmatpush2.msra.mxu0 0.0
    %3077 = vmatprep.subr.mxu0 0.0
    %3078 = vmatpush2.msra.mxu0 0.0
    %3079 = vmatprep.subr.mxu0 0.0
    %3080 = vmatpush2.msra.mxu0 0.0
    %3081 = vmatprep.subr.mxu0 0.0
    %3082 = vmatpush2.msra.mxu0 0.0
    %3083 = vmatprep.subr.mxu0 0.0
    %3084 = vmatpush2.msra.mxu0 0.0
    %3085 = vmatprep.subr.mxu0 0.0
    %3086 = vmatpush2.msra.mxu0 0.0
    %3087 = vmatprep.subr.mxu0 0.0
    %3088 = vmatpush2.msra.mxu0 0.0
    %3089 = vmatprep.subr.mxu0 0.0
    %3090 = vmatpush2.msra.mxu0 0.0
    %3091 = vmatprep.subr.mxu0 0.0
    %3092 = vmatpush2.msra.mxu0 0.0
    %3093 = vmatprep.subr.mxu0 0.0
    %3094 = vmatpush2.msra.mxu0 0.0
    %3095 = vmatprep.subr.mxu0 0.0
    %3096 = vmatpush2.msra.mxu0 0.0
    %3097 = vmatprep.mubr.f32.mxu0 0.0
    %3098 = vmatmul.mubr.f32.gmra.mxu0 %v2922
    %v3099 = vpop.f32.mrf.mxu0
    %v3100 = vadd.f32 %v3031, %v3099
    %v3101 = vpop.f32.mrf.mxu0
    %3102 = vmatprep.mubr.f32.mxu0 0.0
    %3103 = vmatmul.mubr.f32.gmra.mxu0 %v2925
    %v3104 = vpop.f32.mrf.mxu0
    %v3105 = vadd.f32 %v3031, %v3104
    %v3106 = vpop.f32.mrf.mxu0
    %3107 = vmatprep.mubr.f32.mxu0 0.0
    %3108 = vmatmul.mubr.f32.gmra.mxu0 %v2928
    %v3109 = vpop.f32.mrf.mxu0
    %v3110 = vadd.f32 %v3031, %v3109
    %v3111 = vpop.f32.mrf.mxu0
    %3112 = vmatprep.mubr.f32.mxu0 0.0
    %3113 = vmatmul.mubr.f32.gmra.mxu0 %v2931
    %v3114 = vpop.f32.mrf.mxu0
    %v3115 = vadd.f32 %v3031, %v3114
    %v3116 = vpop.f32.mrf.mxu0
    %3117 = vdwg.mxu0
    %v3118 = vmul.f32 %v3100, %v289
    %v3119 = vmul.f32 %v3105, %v294
    %v3120 = vmul.f32 %v3110, %v299
    %v3121 = vmul.f32 %v3115, %v304
    %v3122 = vld [vmem:[%s2] sm:$0xff]
    %v3123 = vld [vmem:[%s2 + $0x8] sm:$0xff]
    %v3124 = vld [vmem:[%s2 + $0x10] sm:$0xff]
    %v3125 = vld [vmem:[%s2 + $0x18] sm:$0xff]
    %v3126 = vmul.f32 %v3118, 1.442695
    %v3127 = vpow.pop %v3126
    %v3128 = vmul.f32 %v3119, 1.442695
    %v3129 = vpow.pop %v3128
    %v3130 = vmul.f32 %v3120, 1.442695
    %v3131 = vpow.pop %v3130
    %v3132 = vmul.f32 %v3121, 1.442695
    %v3133 = vpow.pop %v3132
    %v3134 = vmul.f32 %v3122, %v3127
    %v3135 = vmul.f32 %v3123, %v3129
    %v3136 = vmul.f32 %v3124, %v3131
    %v3137 = vmul.f32 %v3125, %v3133
    %v3138 = vadd.f32 %v3018, %v3134
    %v3139 = vadd.f32 %v3019, %v3135
    %v3140 = vadd.f32 %v3020, %v3136
    %v3141 = vadd.f32 %v3021, %v3137
    %v3142 = vmul.f32 %v3138, %v289
    %v3143 = vmul.f32 %v3139, %v294
    %v3144 = vmul.f32 %v3140, %v299
    %v3145 = vmul.f32 %v3141, %v304
    %vm3146 = vcmask 31744
    %3147 = vst.msk [vmem:[%s15] sm:$0xff] %vm3146, %v3142
    %3148 = vst.msk [vmem:[%s15 + $0x8] sm:$0xff] %vm3146, %v3143
    %3149 = vst.msk [vmem:[%s15 + $0x10] sm:$0xff] %vm3146, %v3144
    %3150 = vst.msk [vmem:[%s15 + $0x18] sm:$0xff] %vm3146, %v3145
    %3151 = vst.msk [vmem:[%s16] sm:$0xff] %vm3146, %v3018
    %3152 = vst.msk [vmem:[%s16 + $0x8] sm:$0xff] %vm3146, %v3019
    %3153 = vst.msk [vmem:[%s16 + $0x10] sm:$0xff] %vm3146, %v3020
    %3154 = vst.msk [vmem:[%s16 + $0x18] sm:$0xff] %vm3146, %v3021
    %3155 = vst.msk [vmem:[%s17] sm:$0xff] %vm3146, %v3118
    %3156 = vst.msk [vmem:[%s17 + $0x8] sm:$0xff] %vm3146, %v3119
    %3157 = vst.msk [vmem:[%s17 + $0x10] sm:$0xff] %vm3146, %v3120
    %3158 = vst.msk [vmem:[%s17 + $0x18] sm:$0xff] %vm3146, %v3121
    // Predicated region
    $region82: #{tpu_custom_call.1} parent=1 // pred_check
      _
    $region83: #{tpu_custom_call.1} parent=1 // pred_check_branch
      %3160 = sbr.rel (0) target = $region85
    $region84: #{tpu_custom_call.1} parent=1 // pred_region
      _
    $region85: #{tpu_custom_call.1} parent=1 // pred_fallthru
      _
    // Predicated region
    $region86: #{tpu_custom_call.1} parent=1 // pred_check
      _
    $region87: #{tpu_custom_call.1} parent=1 // pred_check_branch
      %3162 = sbr.rel (0) target = $region89
    $region88: #{tpu_custom_call.1} parent=1 // pred_region
      _
    $region89: #{tpu_custom_call.1} parent=1 // pred_fallthru
      _
    // Predicated region
    $region90: #{tpu_custom_call.1} parent=1 // pred_check
      _
    $region91: #{tpu_custom_call.1} parent=1 // pred_check_branch
      %3164 = sbr.rel (0) target = $region93
    $region92: #{tpu_custom_call.1} parent=1 // pred_region
      _
    $region93: #{tpu_custom_call.1} parent=1 // pred_fallthru
      _
    // Predicated region
    $region94: #{tpu_custom_call.1} parent=1 // pred_check
      _
    $region95: #{tpu_custom_call.1} parent=1 // pred_check_branch
      %3166 = sbr.rel (0) target = $region97
    $region96: #{tpu_custom_call.1} parent=1 // pred_region
      _
    $region97: #{tpu_custom_call.1} parent=1 // pred_fallthru
      _
    // Predicated region
    $region98: #{tpu_custom_call.1} parent=1 // pred_check
      _
    $region99: #{tpu_custom_call.1} parent=1 // pred_check_branch
      %3168 = sbr.rel (0) target = $region101
    $region100: #{tpu_custom_call.1} parent=1 // pred_region
      _
    $region101: #{tpu_custom_call.1} parent=1 // pred_fallthru
      _
    // Predicated region
    $region102: #{tpu_custom_call.1} parent=1 // pred_check
      _
    $region103: #{tpu_custom_call.1} parent=1 // pred_check_branch
      %3170 = sbr.rel (0) target = $region105
    $region104: #{tpu_custom_call.1} parent=1 // pred_region
      _
    $region105: #{tpu_custom_call.1} parent=1 // pred_fallthru
      _
    %3171 = vsyncpa [#allocation5], 1
    %3172 = vsyncpa [#allocation7], 1
    %3173 = vsyncpa [#allocation10], 1

</llo_original>
